<compile_context>
chip_gen: v7x
topology: tpu7x:2x2x1
jax: 0.10.0
libtpu: 0.0.40
codegen_flags: <defaults>
</compile_context>

<pallas_src>
import functools

import jax
import jax.numpy as jnp
from jax import lax
from jax.experimental import pallas as pl
from jax.experimental.pallas import tpu as pltpu


def _round_up(x, m):
    return (x + m - 1) // m * m


# ---------------------------------------------------------------------------
# Pallas kernels
# ---------------------------------------------------------------------------

def _matmul_bias_act_kernel(x_ref, w_ref, b_ref, o_ref, *, act):
    # Single-shot GEMM over the full (128-padded) K: bf16 operands, f32
    # accumulation, fused bias + activation epilogue, store in o_ref.dtype
    # (bf16 for intermediates, f32 for final outputs).
    r = jnp.dot(x_ref[...], w_ref[...], preferred_element_type=jnp.float32)
    r = r + b_ref[...]
    if act == "relu":
        r = jnp.maximum(r, 0.0)
    elif act == "sigmoid":
        r = jax.nn.sigmoid(r)
    o_ref[...] = r.astype(o_ref.dtype)


def _gn_relu_kernel(x_ref, g_ref, b_ref, avg_ref, o_ref, *, eps):
    # One batch element per grid step; full channel dim on the lane axis.
    # Group statistics are obtained by projecting per-channel moments through a
    # precomputed (C, C) group-averaging matrix (avoids lane-axis reshapes).
    x = x_ref[0].astype(jnp.float32)                 # (HW, C)
    s = jnp.mean(x, axis=0, keepdims=True)           # (1, C) per-channel mean
    q = jnp.mean(x * x, axis=0, keepdims=True)       # (1, C) per-channel E[x^2]
    a = avg_ref[...]                                 # (C, C) group-averaging matrix
    mean_c = jnp.dot(s, a, preferred_element_type=jnp.float32)
    ex2_c = jnp.dot(q, a, preferred_element_type=jnp.float32)
    var_c = ex2_c - mean_c * mean_c
    inv_c = lax.rsqrt(var_c + eps)
    y = (x - mean_c) * inv_c * g_ref[...] + b_ref[...]
    o_ref[...] = jnp.maximum(y, 0.0)[None].astype(o_ref.dtype)


def _attn_kernel(x_ref, wq_ref, wk_ref, wv_ref, o_ref, *, gamma, c):
    # Fused QKV projection + attention + gamma residual for one batch element.
    # wq/wk/wv are zero-padded to 128 lanes so every intermediate is lane-dense;
    # the zero columns contribute nothing to q.kT or p.v.
    x = x_ref[0]                                                    # (N, C) bf16
    q = jnp.dot(x, wq_ref[...], preferred_element_type=jnp.float32)  # (N, 128)
    k = jnp.dot(x, wk_ref[...], preferred_element_type=jnp.float32)  # (N, 128)
    v = jnp.dot(x, wv_ref[...], preferred_element_type=jnp.float32)  # (N, Cp)
    s = jnp.dot(q.astype(jnp.bfloat16), k.astype(jnp.bfloat16).T,
                preferred_element_type=jnp.float32)                  # (N, N)
    s = s - jnp.max(s, axis=-1, keepdims=True)
    p = jnp.exp(s)
    p = p * pl.reciprocal(jnp.sum(p, axis=-1, keepdims=True), approx=True)
    out = jnp.dot(p.astype(jnp.bfloat16), v.astype(jnp.bfloat16),
                  preferred_element_type=jnp.float32)                # (N, Cp)
    res = gamma * out[:, :c] + x.astype(jnp.float32)
    o_ref[...] = res[None].astype(o_ref.dtype)


# ---------------------------------------------------------------------------
# Pallas wrappers
# ---------------------------------------------------------------------------

def matmul_bias_act(x, gemm, act="none", out_dtype=jnp.bfloat16):
    """x: [M, K]; gemm: {"w": bf16 [Kp, Np], "b": f32 [1, Np], "n": N}.
    Returns act(x @ w + b)[:, :N] via a 1-D M-tiled Pallas GEMM."""
    M, K = x.shape
    Kp, Np = gemm["w"].shape
    N = gemm["n"]

    # M tiling: 2+ parallel blocks when M is large (v7x dual TC), otherwise a
    # single full-dim block (no padding copy, ragged M allowed as full dim).
    if M >= 512 and M % 256 == 0:
        TM = 256
    elif M >= 256 and M % 128 == 0:
        TM = 128
    else:
        TM = M

    xb = x.astype(jnp.bfloat16)
    if K != Kp:
        xb = jnp.pad(xb, ((0, 0), (0, Kp - K)))   # lane-align K (fused under jit)

    out = pl.pallas_call(
        functools.partial(_matmul_bias_act_kernel, act=act),
        out_shape=jax.ShapeDtypeStruct((M, Np), out_dtype),
        grid_spec=pltpu.PrefetchScalarGridSpec(
            num_scalar_prefetch=0,
            grid=(M // TM,),
            in_specs=[
                pl.BlockSpec((TM, Kp), lambda i: (i, 0)),
                pl.BlockSpec((Kp, Np), lambda i: (0, 0)),   # single weight block
                pl.BlockSpec((1, Np), lambda i: (0, 0)),
            ],
            out_specs=pl.BlockSpec((TM, Np), lambda i: (i, 0)),
        ),
        compiler_params=pltpu.CompilerParams(
            dimension_semantics=("parallel",)),
    )(xb, gemm["w"], gemm["b"])
    return out if Np == N else out[:, :N]


def _im2col(x, kh, kw, stride, pad):
    """x: [B, H, W, C] -> patches [B, OH, OW, kh*kw*C] (kpos-major, channel-minor)."""
    x = jnp.pad(x, ((0, 0), (pad, pad), (pad, pad), (0, 0)))
    B, Hp, Wp, C = x.shape
    oh = (Hp - kh) // stride + 1
    ow = (Wp - kw) // stride + 1
    cols = []
    for i in range(kh):
        for j in range(kw):
            cols.append(x[:, i:i + stride * oh:stride, j:j + stride * ow:stride, :])
    patches = jnp.stack(cols, axis=3)            # [B, oh, ow, kh*kw, C]
    return patches.reshape(B, oh, ow, kh * kw * C), oh, ow


def conv2d(x, cp, stride=1, act="none", out_dtype=jnp.bfloat16):
    """x: NHWC; cp holds a pre-packed GEMM-layout weight."""
    kh, kw, ic, oc = cp["kh"], cp["kw"], cp["ic"], cp["oc"]
    patches, oh, ow = _im2col(x, kh, kw, stride, kh // 2)
    B = x.shape[0]
    xm = patches.reshape(B * oh * ow, kh * kw * ic)
    y = matmul_bias_act(xm, cp["gemm"], act=act, out_dtype=out_dtype)
    return y.reshape(B, oh, ow, oc)


def conv_transpose2d(x, dp, act="none", out_dtype=jnp.bfloat16):
    """ConvTranspose2d(k=4, s=2, p=1) via sub-pixel decomposition: one 2x2-window
    GEMM over the (pad=1) input produces all four output parities at once."""
    B, H, W, IC = x.shape
    OC = dp["oc"]
    patches, oh, ow = _im2col(x, 2, 2, 1, 1)          # (B, H+1, W+1, 4*IC)
    xm = patches.reshape(B * oh * ow, 4 * IC)
    y = matmul_bias_act(xm, dp["gemm"], act=act,
                        out_dtype=out_dtype).reshape(B, oh, ow, 4 * OC)
    rows = []
    for ph in range(2):
        cols = []
        for pw in range(2):
            sub = ph * 2 + pw
            cols.append(y[:, ph:ph + H, pw:pw + W, sub * OC:(sub + 1) * OC])
        rows.append(jnp.stack(cols, axis=3))           # (B, H, W, 2, OC)
    full = jnp.stack(rows, axis=2)                     # (B, H, 2, W, 2, OC)
    return full.reshape(B, 2 * H, 2 * W, OC)


def upsample2x(x):
    # nn.Upsample(scale_factor=2, mode='bilinear', align_corners=False)
    B, H, W, C = x.shape
    return jax.image.resize(x, (B, 2 * H, 2 * W, C), method="bilinear")


def groupnorm_relu(x, gn, eps=1e-5, out_dtype=jnp.bfloat16):
    B, H, W, C = x.shape
    HW = H * W
    xr = x.reshape(B, HW, C)
    out = pl.pallas_call(
        functools.partial(_gn_relu_kernel, eps=eps),
        out_shape=jax.ShapeDtypeStruct((B, HW, C), out_dtype),
        grid_spec=pltpu.PrefetchScalarGridSpec(
            num_scalar_prefetch=0,
            grid=(B,),
            in_specs=[
                pl.BlockSpec((1, HW, C), lambda b: (b, 0, 0)),
                pl.BlockSpec((1, C), lambda b: (0, 0)),
                pl.BlockSpec((1, C), lambda b: (0, 0)),
                pl.BlockSpec((C, C), lambda b: (0, 0)),
            ],
            out_specs=pl.BlockSpec((1, HW, C), lambda b: (b, 0, 0)),
        ),
        compiler_params=pltpu.CompilerParams(dimension_semantics=("parallel",)),
    )(xr, gn["gamma2d"], gn["beta2d"], gn["avg"])
    return out.reshape(B, H, W, C)


def self_attention(x, p):
    """SAGAN-style attention on an NHWC feature map; QKV projection fused into the
    attention kernel (one pallas_call per batch element)."""
    B, Hs, Ws, C = x.shape
    N = Hs * Ws
    xr = x.reshape(B, N, C).astype(jnp.bfloat16)
    cq = p["wq"].shape[1]
    cv = p["wv"].shape[1]
    out = pl.pallas_call(
        functools.partial(_attn_kernel, gamma=float(p["gamma"]), c=C),
        out_shape=jax.ShapeDtypeStruct((B, N, C), jnp.float32),
        grid_spec=pltpu.PrefetchScalarGridSpec(
            num_scalar_prefetch=0,
            grid=(B,),
            in_specs=[
                pl.BlockSpec((1, N, C), lambda b: (b, 0, 0)),
                pl.BlockSpec((C, cq), lambda b: (0, 0)),
                pl.BlockSpec((C, cq), lambda b: (0, 0)),
                pl.BlockSpec((C, cv), lambda b: (0, 0)),
            ],
            out_specs=pl.BlockSpec((1, N, C), lambda b: (b, 0, 0)),
        ),
        compiler_params=pltpu.CompilerParams(dimension_semantics=("parallel",)),
    )(xr, p["wq"], p["wk"], p["wv"])
    return out.reshape(B, Hs, Ws, C)


# ---------------------------------------------------------------------------
# Deterministic parameter construction (weights pre-packed for the GEMM kernel)
# ---------------------------------------------------------------------------

class _KeyGen:
    def __init__(self, seed):
        self.key = jax.random.PRNGKey(seed)

    def __call__(self):
        self.key, sub = jax.random.split(self.key)
        return sub


def _pack_gemm(wm, b):
    """wm: [K, N] f32 GEMM-layout weight; pad K and N to 128 multiples, cast bf16."""
    K, N = wm.shape
    Kp = _round_up(K, 128)
    Np = _round_up(N, 128)
    wp = jnp.zeros((Kp, Np), jnp.bfloat16).at[:K, :N].set(wm.astype(jnp.bfloat16))
    bp = jnp.zeros((1, Np), jnp.float32).at[:, :N].set(
        b.reshape(1, N).astype(jnp.float32))
    return {"w": wp, "b": bp, "n": N}


def _conv_p(kg, oc, ic, k, scale=0.1):
    w = scale * jax.random.normal(kg(), (oc, ic, k, k), jnp.float32)
    b = scale * jax.random.normal(kg(), (oc,), jnp.float32)
    wm = jnp.transpose(w, (2, 3, 1, 0)).reshape(k * k * ic, oc)   # kpos-major rows
    return {"gemm": _pack_gemm(wm, b), "kh": k, "kw": k, "ic": ic, "oc": oc}


def _convT_p(kg, ic, oc, k, scale=0.1):
    # ConvTranspose2d(ic, oc, kernel_size=4, stride=2, padding=1) weights,
    # pre-packed into the sub-pixel 2x2 GEMM layout [4*ic, 4*oc]:
    #   wm[(dh*2+dw)*ic + c_in, (ph*2+pw)*oc + c_out] = w[c_in, c_out, 3-ph-2*dh, 3-pw-2*dw]
    assert k == 4
    w = scale * jax.random.normal(kg(), (ic, oc, k, k), jnp.float32)
    b = scale * jax.random.normal(kg(), (oc,), jnp.float32)
    wr = w[:, :, ::-1, ::-1]                              # [ic, oc, 4, 4] flipped
    w6 = wr.reshape(ic, oc, 2, 2, 2, 2)                   # (ic, oc, dh, ph, dw, pw)
    wm = jnp.transpose(w6, (2, 4, 0, 3, 5, 1)).reshape(4 * ic, 4 * oc)
    bm = jnp.tile(b, 4)
    return {"gemm": _pack_gemm(wm, bm), "oc": oc}


def _gn_p(kg, c, num_groups, scale=0.1):
    gamma = 1.0 + scale * jax.random.normal(kg(), (c,), jnp.float32)
    beta = scale * jax.random.normal(kg(), (c,), jnp.float32)
    cg = c // num_groups
    gidx = jnp.arange(c) // cg
    avg = (gidx[:, None] == gidx[None, :]).astype(jnp.float32) / cg
    return {"gamma2d": gamma.reshape(1, c), "beta2d": beta.reshape(1, c), "avg": avg}


def _attn_p(kg, c, scale=0.1):
    c8 = max(c // 8, 1)
    cp = _round_up(c, 128)
    wq = scale * jax.random.normal(kg(), (c, c8), jnp.float32)
    wk = scale * jax.random.normal(kg(), (c, c8), jnp.float32)
    wv = scale * jax.random.normal(kg(), (c, c), jnp.float32)
    # pad q/k/v weight lanes to 128 (zero columns are exact no-ops in the kernel)
    wq_p = jnp.zeros((c, 128), jnp.bfloat16).at[:, :c8].set(wq.astype(jnp.bfloat16))
    wk_p = jnp.zeros((c, 128), jnp.bfloat16).at[:, :c8].set(wk.astype(jnp.bfloat16))
    wv_p = jnp.zeros((c, cp), jnp.bfloat16).at[:, :c].set(wv.astype(jnp.bfloat16))
    return {"wq": wq_p, "wk": wk_p, "wv": wv_p, "c8": c8, "gamma": 0.5}


def build_layer_params(kg, in_ch, latent_dim, use_roi):
    p = {}
    if use_roi:
        p["roi"] = {"f1": _conv_p(kg, 32, in_ch, 3),
                    "f2": _conv_p(kg, 64, 32, 3),
                    "f3": _conv_p(kg, 64, 64, 3),
                    "pred": _conv_p(kg, 1, 64, 3),
                    "up1": _conv_p(kg, 16, 1, 3),
                    "up2": _conv_p(kg, 1, 16, 3)}
    p["enc1"] = _conv_p(kg, 32, in_ch, 3)
    p["enc2"] = _conv_p(kg, 64, 32, 3)
    p["enc3"] = _conv_p(kg, latent_dim, 64, 3)
    p["attn"] = _attn_p(kg, latent_dim)
    p["dec1"] = _conv_p(kg, 64, latent_dim, 3)
    p["deconv1"] = _convT_p(kg, 64, 32, 4)
    p["gn1"] = _gn_p(kg, 32, 8)
    p["deconv2"] = _convT_p(kg, 32, 16, 4)
    p["gn2"] = _gn_p(kg, 16, 4)
    p["dec_out"] = _conv_p(kg, 3, 16, 3)
    return p


def build_stack_params(seed, num_layers, latent_dims, roi_enabled):
    kg = _KeyGen(seed)
    # all layers see cat([x, prev]) = 6 channels (see TODO(synk) above)
    return [build_layer_params(kg, 6, latent_dims[i], roi_enabled)
            for i in range(num_layers)]


# ---------------------------------------------------------------------------
# Forward passes (NHWC internally)
# ---------------------------------------------------------------------------

def roi_detector_forward(p, x):
    h = conv2d(x, p["f1"], stride=2, act="relu")
    h = conv2d(h, p["f2"], stride=2, act="relu")
    h = conv2d(h, p["f3"], stride=1, act="relu")
    roi = conv2d(h, p["pred"], stride=1, act="sigmoid")
    roi = upsample2x(roi)
    roi = conv2d(roi, p["up1"], stride=1, act="relu")
    roi = conv2d(roi, p["up2"], stride=1, act="sigmoid", out_dtype=jnp.float32)
    roi = upsample2x(roi)
    return roi


def enhancement_layer_forward(p, x, prev, use_roi, roi_weight_factor):
    inp = jnp.concatenate([x, prev], axis=-1)                     # 6 channels
    roi_mask = roi_detector_forward(p["roi"], inp) if use_roi else None

    h = conv2d(inp, p["enc1"], stride=2, act="relu")
    h = conv2d(h, p["enc2"], stride=2, act="relu")
    latent = conv2d(h, p["enc3"], stride=1, act="relu")
    latent = self_attention(latent, p["attn"])                    # f32 (returned)

    d = conv2d(latent, p["dec1"], stride=1, act="relu")
    d = conv_transpose2d(d, p["deconv1"])
    d = groupnorm_relu(d, p["gn1"])
    d = conv_transpose2d(d, p["deconv2"])
    d = groupnorm_relu(d, p["gn2"])
    refinement = conv2d(d, p["dec_out"], stride=1, out_dtype=jnp.float32)

    # ROI weighting + residual: tiny, lane-width-3 elementwise work — left to
    # plain JAX so XLA fuses it (a dedicated Pallas kernel here is launch-bound).
    if roi_mask is not None:
        weighted = refinement * (1.0 + (roi_weight_factor - 1.0) * roi_mask)
    else:
        weighted = refinement
    output = prev + weighted

    return {"latent": latent, "refinement": refinement,
            "weighted_refinement": weighted, "output": output,
            "roi_mask": roi_mask}


def enhancement_stack_forward(params_list, x_nchw, base_nchw,
                              roi_enabled, roi_weight_factor):
    # NCHW -> NHWC
    x = jnp.transpose(x_nchw, (0, 2, 3, 1))
    base = jnp.transpose(base_nchw, (0, 2, 3, 1))

    current = base
    layer_outputs, roi_masks, latents = [], [], []
    for i, p in enumerate(params_list):
        prev = base if i == 0 else current
        layer_out = enhancement_layer_forward(p, x, prev, roi_enabled,
                                              roi_weight_factor)
        current = layer_out["output"]
        layer_outputs.append(layer_out)
        latents.append(layer_out["latent"])
        if layer_out["roi_mask"] is not None:
            roi_masks.append(layer_out["roi_mask"])

    to_nchw = lambda t: jnp.transpose(t, (0, 3, 1, 2))
    return {"final_output": to_nchw(current),
            "layer_outputs": layer_outputs,
            "latents": [to_nchw(l) for l in latents],
            "roi_masks": [to_nchw(m) for m in roi_masks]}


# ---------------------------------------------------------------------------
# Main
# ---------------------------------------------------------------------------

if __name__ == "__main__":
    B, C, H, W = 2, 3, 16, 16
    num_layers = 2
    latent_dims = [32, 32]
    roi_enabled = True
    roi_weight_factor = 2.0

    key = jax.random.PRNGKey(0)
    kx, kb = jax.random.split(key)
    x = jax.random.normal(kx, (B, C, H, W), jnp.float32)              # NCHW
    base_reconstruction = jax.random.normal(kb, (B, C, H, W), jnp.float32)

    params = build_stack_params(seed=42, num_layers=num_layers,
                                latent_dims=latent_dims,
                                roi_enabled=roi_enabled)

    # jit the whole stack: params (with their static ints) are closed over so
    # all shape/grid decisions stay Python-static; only x/base are traced.
    @jax.jit
    def forward(x_in, base_in):
        return enhancement_stack_forward(params, x_in, base_in,
                                         roi_enabled, roi_weight_factor)

    out = forward(x, base_reconstruction)
    jax.block_until_ready(out["final_output"])

    assert out["final_output"].shape == (B, C, H, W)
    assert len(out["latents"]) == num_layers
    assert len(out["roi_masks"]) == num_layers
    assert out["latents"][0].shape == (B, latent_dims[0], H // 4, W // 4)
    assert out["roi_masks"][0].shape == (B, 1, H, W)

    print("KERNEL_OK")
</pallas_src>

<mosaic_0001>
module attributes {stable_mosaic.version = 11 : i64} {
  func.func @_matmul_bias_act_kernel(%arg0: i32, %arg1: memref<128x128xbf16, #tpu.memory_space<vmem>>, %arg2: memref<128x128xbf16, #tpu.memory_space<vmem>>, %arg3: memref<1x128xf32, #tpu.memory_space<vmem>>, %arg4: memref<128x128xbf16, #tpu.memory_space<vmem>>) attributes {dimension_semantics = [#tpu.dimension_semantics<parallel>], iteration_bounds = array<i64: 1>, scalar_prefetch = 0 : i64, scratch_operands = 0 : i64, tpu.core_type = #tpu.core_type<tc>, window_params = [{transform_indices = @transform_0, window_bounds = array<i64: 128, 128>}, {pipeline_mode = #tpu.pipeline_mode<synchronous>, transform_indices = @transform_1, window_bounds = array<i64: 128, 128>}, {pipeline_mode = #tpu.pipeline_mode<synchronous>, transform_indices = @transform_2, window_bounds = array<i64: 1, 128>}, {transform_indices = @transform_3, window_bounds = array<i64: 128, 128>}]} {
    %c0 = arith.constant 0 : index
    %c0_0 = arith.constant 0 : index
    %0 = vector.load %arg1[%c0, %c0_0] : memref<128x128xbf16, #tpu.memory_space<vmem>>, vector<128x128xbf16>
    %c0_1 = arith.constant 0 : index
    %c0_2 = arith.constant 0 : index
    %1 = vector.load %arg2[%c0_1, %c0_2] : memref<128x128xbf16, #tpu.memory_space<vmem>>, vector<128x128xbf16>
    %cst = arith.constant dense<0.000000e+00> : vector<128x128xf32>
    %2 = tpu.matmul %0, %1, %cst {dimension_numbers = #tpu.dot_dimension_numbers<[1], [0], [0], [1], [0, 0, 1, 1], [], []>} : vector<128x128xbf16>, vector<128x128xbf16>, vector<128x128xf32> -> vector<128x128xf32>
    %c0_3 = arith.constant 0 : index
    %c0_4 = arith.constant 0 : index
    %3 = vector.load %arg3[%c0_3, %c0_4] : memref<1x128xf32, #tpu.memory_space<vmem>>, vector<1x128xf32>
    %4 = vector.broadcast %3 : vector<1x128xf32> to vector<128x128xf32>
    %5 = arith.addf %2, %4 : vector<128x128xf32>
    %cst_5 = arith.constant 0.000000e+00 : f32
    %6 = vector.broadcast %cst_5 : f32 to vector<128x128xf32>
    %7 = arith.maximumf %5, %6 : vector<128x128xf32>
    %8 = arith.truncf %7 : vector<128x128xf32> to vector<128x128xbf16>
    %c0_6 = arith.constant 0 : index
    %c0_7 = arith.constant 0 : index
    %9 = vector.load %arg4[%c0_6, %c0_7] : memref<128x128xbf16, #tpu.memory_space<vmem>>, vector<128x128xbf16>
    tpu.vector_store %arg4[%c0_6, %c0_7], %8 {strides = array<i32>} : memref<128x128xbf16, #tpu.memory_space<vmem>>, vector<128x128xbf16>,
    return
  }
  func.func @transform_0(%arg0: i32) -> (i32, i32) {
    %c0_i32 = arith.constant 0 : i32
    %c0_i32_0 = arith.constant 0 : i32
    return %arg0, %c0_i32 : i32, i32
  }
  func.func @transform_1(%arg0: i32) -> (i32, i32) {
    %c0_i32 = arith.constant 0 : i32
    %c0_i32_0 = arith.constant 0 : i32
    %c0_i32_1 = arith.constant 0 : i32
    return %c0_i32, %c0_i32_0 : i32, i32
  }
  func.func @transform_2(%arg0: i32) -> (i32, i32) {
    %c0_i32 = arith.constant 0 : i32
    %c0_i32_0 = arith.constant 0 : i32
    %c0_i32_1 = arith.constant 0 : i32
    return %c0_i32, %c0_i32_0 : i32, i32
  }
  func.func @transform_3(%arg0: i32) -> (i32, i32) {
    %c0_i32 = arith.constant 0 : i32
    %c0_i32_0 = arith.constant 0 : i32
    return %arg0, %c0_i32 : i32, i32
  }
}

module attributes {stable_mosaic.version = 11 : i64} {
  func.func @_matmul_bias_act_kernel(%arg0: i32, %arg1: memref<32x384xbf16, #tpu.memory_space<vmem>>, %arg2: memref<384x128xbf16, #tpu.memory_space<vmem>>, %arg3: memref<1x128xf32, #tpu.memory_space<vmem>>, %arg4: memref<32x128xbf16, #tpu.memory_space<vmem>>) attributes {dimension_semantics = [#tpu.dimension_semantics<parallel>], iteration_bounds = array<i64: 1>, scalar_prefetch = 0 : i64, scratch_operands = 0 : i64, tpu.core_type = #tpu.core_type<tc>, window_params = [{transform_indices = @transform_0, window_bounds = array<i64: 32, 384>}, {pipeline_mode = #tpu.pipeline_mode<synchronous>, transform_indices = @transform_1, window_bounds = array<i64: 384, 128>}, {pipeline_mode = #tpu.pipeline_mode<synchronous>, transform_indices = @transform_2, window_bounds = array<i64: 1, 128>}, {transform_indices = @transform_3, window_bounds = array<i64: 32, 128>}]} {
    %c0 = arith.constant 0 : index
    %c0_0 = arith.constant 0 : index
    %0 = vector.load %arg1[%c0, %c0_0] : memref<32x384xbf16, #tpu.memory_space<vmem>>, vector<32x384xbf16>
    %c0_1 = arith.constant 0 : index
    %c0_2 = arith.constant 0 : index
    %1 = vector.load %arg2[%c0_1, %c0_2] : memref<384x128xbf16, #tpu.memory_space<vmem>>, vector<384x128xbf16>
    %cst = arith.constant dense<0.000000e+00> : vector<32x128xf32>
    %2 = tpu.matmul %0, %1, %cst {dimension_numbers = #tpu.dot_dimension_numbers<[1], [0], [0], [1], [0, 0, 1, 1], [], []>} : vector<32x384xbf16>, vector<384x128xbf16>, vector<32x128xf32> -> vector<32x128xf32>
    %c0_3 = arith.constant 0 : index
    %c0_4 = arith.constant 0 : index
    %3 = vector.load %arg3[%c0_3, %c0_4] : memref<1x128xf32, #tpu.memory_space<vmem>>, vector<1x128xf32>
    %4 = vector.broadcast %3 : vector<1x128xf32> to vector<32x128xf32>
    %5 = arith.addf %2, %4 : vector<32x128xf32>
    %cst_5 = arith.constant 0.000000e+00 : f32
    %6 = vector.broadcast %cst_5 : f32 to vector<32x128xf32>
    %7 = arith.maximumf %5, %6 : vector<32x128xf32>
    %8 = arith.truncf %7 : vector<32x128xf32> to vector<32x128xbf16>
    %c0_6 = arith.constant 0 : index
    %c0_7 = arith.constant 0 : index
    %9 = vector.load %arg4[%c0_6, %c0_7] : memref<32x128xbf16, #tpu.memory_space<vmem>>, vector<32x128xbf16>
    tpu.vector_store %arg4[%c0_6, %c0_7], %8 {strides = array<i32>} : memref<32x128xbf16, #tpu.memory_space<vmem>>, vector<32x128xbf16>,
    return
  }
  func.func @transform_0(%arg0: i32) -> (i32, i32) {
    %c0_i32 = arith.constant 0 : i32
    %c0_i32_0 = arith.constant 0 : i32
    return %arg0, %c0_i32 : i32, i32
  }
  func.func @transform_1(%arg0: i32) -> (i32, i32) {
    %c0_i32 = arith.constant 0 : i32
    %c0_i32_0 = arith.constant 0 : i32
    %c0_i32_1 = arith.constant 0 : i32
    return %c0_i32, %c0_i32_0 : i32, i32
  }
  func.func @transform_2(%arg0: i32) -> (i32, i32) {
    %c0_i32 = arith.constant 0 : i32
    %c0_i32_0 = arith.constant 0 : i32
    %c0_i32_1 = arith.constant 0 : i32
    return %c0_i32, %c0_i32_0 : i32, i32
  }
  func.func @transform_3(%arg0: i32) -> (i32, i32) {
    %c0_i32 = arith.constant 0 : i32
    %c0_i32_0 = arith.constant 0 : i32
    return %arg0, %c0_i32 : i32, i32
  }
}

module attributes {stable_mosaic.version = 11 : i64} {
  func.func @_matmul_bias_act_kernel(%arg0: i32, %arg1: memref<32x640xbf16, #tpu.memory_space<vmem>>, %arg2: memref<640x128xbf16, #tpu.memory_space<vmem>>, %arg3: memref<1x128xf32, #tpu.memory_space<vmem>>, %arg4: memref<32x128xbf16, #tpu.memory_space<vmem>>) attributes {dimension_semantics = [#tpu.dimension_semantics<parallel>], iteration_bounds = array<i64: 1>, scalar_prefetch = 0 : i64, scratch_operands = 0 : i64, tpu.core_type = #tpu.core_type<tc>, window_params = [{transform_indices = @transform_0, window_bounds = array<i64: 32, 640>}, {pipeline_mode = #tpu.pipeline_mode<synchronous>, transform_indices = @transform_1, window_bounds = array<i64: 640, 128>}, {pipeline_mode = #tpu.pipeline_mode<synchronous>, transform_indices = @transform_2, window_bounds = array<i64: 1, 128>}, {transform_indices = @transform_3, window_bounds = array<i64: 32, 128>}]} {
    %c0 = arith.constant 0 : index
    %c0_0 = arith.constant 0 : index
    %0 = vector.load %arg1[%c0, %c0_0] : memref<32x640xbf16, #tpu.memory_space<vmem>>, vector<32x640xbf16>
    %c0_1 = arith.constant 0 : index
    %c0_2 = arith.constant 0 : index
    %1 = vector.load %arg2[%c0_1, %c0_2] : memref<640x128xbf16, #tpu.memory_space<vmem>>, vector<640x128xbf16>
    %cst = arith.constant dense<0.000000e+00> : vector<32x128xf32>
    %2 = tpu.matmul %0, %1, %cst {dimension_numbers = #tpu.dot_dimension_numbers<[1], [0], [0], [1], [0, 0, 1, 1], [], []>} : vector<32x640xbf16>, vector<640x128xbf16>, vector<32x128xf32> -> vector<32x128xf32>
    %c0_3 = arith.constant 0 : index
    %c0_4 = arith.constant 0 : index
    %3 = vector.load %arg3[%c0_3, %c0_4] : memref<1x128xf32, #tpu.memory_space<vmem>>, vector<1x128xf32>
    %4 = vector.broadcast %3 : vector<1x128xf32> to vector<32x128xf32>
    %5 = arith.addf %2, %4 : vector<32x128xf32>
    %cst_5 = arith.constant 0.000000e+00 : f32
    %6 = vector.broadcast %cst_5 : f32 to vector<32x128xf32>
    %7 = arith.maximumf %5, %6 : vector<32x128xf32>
    %8 = arith.truncf %7 : vector<32x128xf32> to vector<32x128xbf16>
    %c0_6 = arith.constant 0 : index
    %c0_7 = arith.constant 0 : index
    %9 = vector.load %arg4[%c0_6, %c0_7] : memref<32x128xbf16, #tpu.memory_space<vmem>>, vector<32x128xbf16>
    tpu.vector_store %arg4[%c0_6, %c0_7], %8 {strides = array<i32>} : memref<32x128xbf16, #tpu.memory_space<vmem>>, vector<32x128xbf16>,
    return
  }
  func.func @transform_0(%arg0: i32) -> (i32, i32) {
    %c0_i32 = arith.constant 0 : i32
    %c0_i32_0 = arith.constant 0 : i32
    return %arg0, %c0_i32 : i32, i32
  }
  func.func @transform_1(%arg0: i32) -> (i32, i32) {
    %c0_i32 = arith.constant 0 : i32
    %c0_i32_0 = arith.constant 0 : i32
    %c0_i32_1 = arith.constant 0 : i32
    return %c0_i32, %c0_i32_0 : i32, i32
  }
  func.func @transform_2(%arg0: i32) -> (i32, i32) {
    %c0_i32 = arith.constant 0 : i32
    %c0_i32_0 = arith.constant 0 : i32
    %c0_i32_1 = arith.constant 0 : i32
    return %c0_i32, %c0_i32_0 : i32, i32
  }
  func.func @transform_3(%arg0: i32) -> (i32, i32) {
    %c0_i32 = arith.constant 0 : i32
    %c0_i32_0 = arith.constant 0 : i32
    return %arg0, %c0_i32 : i32, i32
  }
}

module attributes {stable_mosaic.version = 11 : i64} {
  func.func @_matmul_bias_act_kernel(%arg0: i32, %arg1: memref<32x640xbf16, #tpu.memory_space<vmem>>, %arg2: memref<640x128xbf16, #tpu.memory_space<vmem>>, %arg3: memref<1x128xf32, #tpu.memory_space<vmem>>, %arg4: memref<32x128xbf16, #tpu.memory_space<vmem>>) attributes {dimension_semantics = [#tpu.dimension_semantics<parallel>], iteration_bounds = array<i64: 1>, scalar_prefetch = 0 : i64, scratch_operands = 0 : i64, tpu.core_type = #tpu.core_type<tc>, window_params = [{transform_indices = @transform_0, window_bounds = array<i64: 32, 640>}, {pipeline_mode = #tpu.pipeline_mode<synchronous>, transform_indices = @transform_1, window_bounds = array<i64: 640, 128>}, {pipeline_mode = #tpu.pipeline_mode<synchronous>, transform_indices = @transform_2, window_bounds = array<i64: 1, 128>}, {transform_indices = @transform_3, window_bounds = array<i64: 32, 128>}]} {
    %c0 = arith.constant 0 : index
    %c0_0 = arith.constant 0 : index
    %0 = vector.load %arg1[%c0, %c0_0] : memref<32x640xbf16, #tpu.memory_space<vmem>>, vector<32x640xbf16>
    %c0_1 = arith.constant 0 : index
    %c0_2 = arith.constant 0 : index
    %1 = vector.load %arg2[%c0_1, %c0_2] : memref<640x128xbf16, #tpu.memory_space<vmem>>, vector<640x128xbf16>
    %cst = arith.constant dense<0.000000e+00> : vector<32x128xf32>
    %2 = tpu.matmul %0, %1, %cst {dimension_numbers = #tpu.dot_dimension_numbers<[1], [0], [0], [1], [0, 0, 1, 1], [], []>} : vector<32x640xbf16>, vector<640x128xbf16>, vector<32x128xf32> -> vector<32x128xf32>
    %c0_3 = arith.constant 0 : index
    %c0_4 = arith.constant 0 : index
    %3 = vector.load %arg3[%c0_3, %c0_4] : memref<1x128xf32, #tpu.memory_space<vmem>>, vector<1x128xf32>
    %4 = vector.broadcast %3 : vector<1x128xf32> to vector<32x128xf32>
    %5 = arith.addf %2, %4 : vector<32x128xf32>
    %6 = arith.negf %5 : vector<32x128xf32>
    %7 = math.exp %6 : vector<32x128xf32>
    %cst_5 = arith.constant 1.000000e+00 : f32
    %8 = vector.broadcast %cst_5 : f32 to vector<32x128xf32>
    %9 = arith.addf %8, %7 : vector<32x128xf32>
    %10 = arith.divf %8, %9 : vector<32x128xf32>
    %11 = arith.truncf %10 : vector<32x128xf32> to vector<32x128xbf16>
    %c0_6 = arith.constant 0 : index
    %c0_7 = arith.constant 0 : index
    %12 = vector.load %arg4[%c0_6, %c0_7] : memref<32x128xbf16, #tpu.memory_space<vmem>>, vector<32x128xbf16>
    tpu.vector_store %arg4[%c0_6, %c0_7], %11 {strides = array<i32>} : memref<32x128xbf16, #tpu.memory_space<vmem>>, vector<32x128xbf16>,
    return
  }
  func.func @transform_0(%arg0: i32) -> (i32, i32) {
    %c0_i32 = arith.constant 0 : i32
    %c0_i32_0 = arith.constant 0 : i32
    return %arg0, %c0_i32 : i32, i32
  }
  func.func @transform_1(%arg0: i32) -> (i32, i32) {
    %c0_i32 = arith.constant 0 : i32
    %c0_i32_0 = arith.constant 0 : i32
    %c0_i32_1 = arith.constant 0 : i32
    return %c0_i32, %c0_i32_0 : i32, i32
  }
  func.func @transform_2(%arg0: i32) -> (i32, i32) {
    %c0_i32 = arith.constant 0 : i32
    %c0_i32_0 = arith.constant 0 : i32
    %c0_i32_1 = arith.constant 0 : i32
    return %c0_i32, %c0_i32_0 : i32, i32
  }
  func.func @transform_3(%arg0: i32) -> (i32, i32) {
    %c0_i32 = arith.constant 0 : i32
    %c0_i32_0 = arith.constant 0 : i32
    return %arg0, %c0_i32 : i32, i32
  }
}

module attributes {stable_mosaic.version = 11 : i64} {
  func.func @_matmul_bias_act_kernel(%arg0: i32, %arg1: memref<128x256xbf16, #tpu.memory_space<vmem>>, %arg2: memref<256x128xbf16, #tpu.memory_space<vmem>>, %arg3: memref<1x128xf32, #tpu.memory_space<vmem>>, %arg4: memref<128x128xf32, #tpu.memory_space<vmem>>) attributes {dimension_semantics = [#tpu.dimension_semantics<parallel>], iteration_bounds = array<i64: 1>, scalar_prefetch = 0 : i64, scratch_operands = 0 : i64, tpu.core_type = #tpu.core_type<tc>, window_params = [{transform_indices = @transform_0, window_bounds = array<i64: 128, 256>}, {pipeline_mode = #tpu.pipeline_mode<synchronous>, transform_indices = @transform_1, window_bounds = array<i64: 256, 128>}, {pipeline_mode = #tpu.pipeline_mode<synchronous>, transform_indices = @transform_2, window_bounds = array<i64: 1, 128>}, {transform_indices = @transform_3, window_bounds = array<i64: 128, 128>}]} {
    %c0 = arith.constant 0 : index
    %c0_0 = arith.constant 0 : index
    %0 = vector.load %arg1[%c0, %c0_0] : memref<128x256xbf16, #tpu.memory_space<vmem>>, vector<128x256xbf16>
    %c0_1 = arith.constant 0 : index
    %c0_2 = arith.constant 0 : index
    %1 = vector.load %arg2[%c0_1, %c0_2] : memref<256x128xbf16, #tpu.memory_space<vmem>>, vector<256x128xbf16>
    %cst = arith.constant dense<0.000000e+00> : vector<128x128xf32>
    %2 = tpu.matmul %0, %1, %cst {dimension_numbers = #tpu.dot_dimension_numbers<[1], [0], [0], [1], [0, 0, 1, 1], [], []>} : vector<128x256xbf16>, vector<256x128xbf16>, vector<128x128xf32> -> vector<128x128xf32>
    %c0_3 = arith.constant 0 : index
    %c0_4 = arith.constant 0 : index
    %3 = vector.load %arg3[%c0_3, %c0_4] : memref<1x128xf32, #tpu.memory_space<vmem>>, vector<1x128xf32>
    %4 = vector.broadcast %3 : vector<1x128xf32> to vector<128x128xf32>
    %5 = arith.addf %2, %4 : vector<128x128xf32>
    %6 = arith.negf %5 : vector<128x128xf32>
    %7 = math.exp %6 : vector<128x128xf32>
    %cst_5 = arith.constant 1.000000e+00 : f32
    %8 = vector.broadcast %cst_5 : f32 to vector<128x128xf32>
    %9 = arith.addf %8, %7 : vector<128x128xf32>
    %10 = arith.divf %8, %9 : vector<128x128xf32>
    %c0_6 = arith.constant 0 : index
    %c0_7 = arith.constant 0 : index
    %11 = vector.load %arg4[%c0_6, %c0_7] : memref<128x128xf32, #tpu.memory_space<vmem>>, vector<128x128xf32>
    tpu.vector_store %arg4[%c0_6, %c0_7], %10 {strides = array<i32>} : memref<128x128xf32, #tpu.memory_space<vmem>>, vector<128x128xf32>,
    return
  }
  func.func @transform_0(%arg0: i32) -> (i32, i32) {
    %c0_i32 = arith.constant 0 : i32
    %c0_i32_0 = arith.constant 0 : i32
    return %arg0, %c0_i32 : i32, i32
  }
  func.func @transform_1(%arg0: i32) -> (i32, i32) {
    %c0_i32 = arith.constant 0 : i32
    %c0_i32_0 = arith.constant 0 : i32
    %c0_i32_1 = arith.constant 0 : i32
    return %c0_i32, %c0_i32_0 : i32, i32
  }
  func.func @transform_2(%arg0: i32) -> (i32, i32) {
    %c0_i32 = arith.constant 0 : i32
    %c0_i32_0 = arith.constant 0 : i32
    %c0_i32_1 = arith.constant 0 : i32
    return %c0_i32, %c0_i32_0 : i32, i32
  }
  func.func @transform_3(%arg0: i32) -> (i32, i32) {
    %c0_i32 = arith.constant 0 : i32
    %c0_i32_0 = arith.constant 0 : i32
    return %arg0, %c0_i32 : i32, i32
  }
}

module attributes {stable_mosaic.version = 11 : i64} {
  func.func @_attn_kernel(%arg0: i32, %arg1: memref<1x16x32xbf16, #tpu.memory_space<vmem>>, %arg2: memref<32x128xbf16, #tpu.memory_space<vmem>>, %arg3: memref<32x128xbf16, #tpu.memory_space<vmem>>, %arg4: memref<32x128xbf16, #tpu.memory_space<vmem>>, %arg5: memref<1x16x32xf32, #tpu.memory_space<vmem>>) attributes {dimension_semantics = [#tpu.dimension_semantics<parallel>], iteration_bounds = array<i64: 2>, scalar_prefetch = 0 : i64, scratch_operands = 0 : i64, tpu.core_type = #tpu.core_type<tc>, window_params = [{transform_indices = @transform_0, window_bounds = array<i64: 1, 16, 32>}, {pipeline_mode = #tpu.pipeline_mode<synchronous>, transform_indices = @transform_1, window_bounds = array<i64: 32, 128>}, {pipeline_mode = #tpu.pipeline_mode<synchronous>, transform_indices = @transform_2, window_bounds = array<i64: 32, 128>}, {pipeline_mode = #tpu.pipeline_mode<synchronous>, transform_indices = @transform_3, window_bounds = array<i64: 32, 128>}, {transform_indices = @transform_4, window_bounds = array<i64: 1, 16, 32>}]} {
    %c0 = arith.constant 0 : index
    %c0_0 = arith.constant 0 : index
    %c0_1 = arith.constant 0 : index
    %0 = vector.load %arg1[%c0, %c0_0, %c0_1] : memref<1x16x32xbf16, #tpu.memory_space<vmem>>, vector<1x16x32xbf16>
    %1 = vector.shape_cast %0 : vector<1x16x32xbf16> to vector<16x32xbf16>
    %c0_2 = arith.constant 0 : index
    %c0_3 = arith.constant 0 : index
    %2 = vector.load %arg2[%c0_2, %c0_3] : memref<32x128xbf16, #tpu.memory_space<vmem>>, vector<32x128xbf16>
    %cst = arith.constant dense<0.000000e+00> : vector<16x128xf32>
    %3 = tpu.matmul %1, %2, %cst {dimension_numbers = #tpu.dot_dimension_numbers<[1], [0], [0], [1], [0, 0, 1, 1], [], []>} : vector<16x32xbf16>, vector<32x128xbf16>, vector<16x128xf32> -> vector<16x128xf32>
    %c0_4 = arith.constant 0 : index
    %c0_5 = arith.constant 0 : index
    %4 = vector.load %arg3[%c0_4, %c0_5] : memref<32x128xbf16, #tpu.memory_space<vmem>>, vector<32x128xbf16>
    %cst_6 = arith.constant dense<0.000000e+00> : vector<16x128xf32>
    %5 = tpu.matmul %1, %4, %cst_6 {dimension_numbers = #tpu.dot_dimension_numbers<[1], [0], [0], [1], [0, 0, 1, 1], [], []>} : vector<16x32xbf16>, vector<32x128xbf16>, vector<16x128xf32> -> vector<16x128xf32>
    %c0_7 = arith.constant 0 : index
    %c0_8 = arith.constant 0 : index
    %6 = vector.load %arg4[%c0_7, %c0_8] : memref<32x128xbf16, #tpu.memory_space<vmem>>, vector<32x128xbf16>
    %cst_9 = arith.constant dense<0.000000e+00> : vector<16x128xf32>
    %7 = tpu.matmul %1, %6, %cst_9 {dimension_numbers = #tpu.dot_dimension_numbers<[1], [0], [0], [1], [0, 0, 1, 1], [], []>} : vector<16x32xbf16>, vector<32x128xbf16>, vector<16x128xf32> -> vector<16x128xf32>
    %8 = arith.truncf %3 : vector<16x128xf32> to vector<16x128xbf16>
    %9 = arith.truncf %5 : vector<16x128xf32> to vector<16x128xbf16>
    %10 = tpu.transpose %9, [1, 0] : vector<16x128xbf16> -> vector<128x16xbf16>
    %cst_10 = arith.constant dense<0.000000e+00> : vector<16x16xf32>
    %11 = tpu.matmul %8, %10, %cst_10 {dimension_numbers = #tpu.dot_dimension_numbers<[1], [0], [0], [1], [0, 0, 1, 1], [], []>} : vector<16x128xbf16>, vector<128x16xbf16>, vector<16x16xf32> -> vector<16x16xf32>
    %cst_11 = arith.constant dense<0xFF800000> : vector<16xf32>
    %12 = vector.multi_reduction <maximumf>, %11, %cst_11 [1] : vector<16x16xf32> to vector<16xf32>
    %13 = vector.shape_cast %12 : vector<16xf32> to vector<16x1xf32>
    %14 = vector.broadcast %13 : vector<16x1xf32> to vector<16x16xf32>
    %15 = arith.subf %11, %14 : vector<16x16xf32>
    %16 = math.exp %15 : vector<16x16xf32>
    %cst_12 = arith.constant dense<0.000000e+00> : vector<16xf32>
    %17 = vector.multi_reduction <add>, %16, %cst_12 [1] : vector<16x16xf32> to vector<16xf32>
    %18 = vector.shape_cast %17 : vector<16xf32> to vector<16x1xf32>
    %19 = tpu.reciprocal %18 {approx = true} : vector<16x1xf32> -> vector<16x1xf32>
    %20 = vector.broadcast %19 : vector<16x1xf32> to vector<16x16xf32>
    %21 = arith.mulf %16, %20 : vector<16x16xf32>
    %22 = arith.truncf %21 : vector<16x16xf32> to vector<16x16xbf16>
    %23 = arith.truncf %7 : vector<16x128xf32> to vector<16x128xbf16>
    %cst_13 = arith.constant dense<0.000000e+00> : vector<16x128xf32>
    %24 = tpu.matmul %22, %23, %cst_13 {dimension_numbers = #tpu.dot_dimension_numbers<[1], [0], [0], [1], [0, 0, 1, 1], [], []>} : vector<16x16xbf16>, vector<16x128xbf16>, vector<16x128xf32> -> vector<16x128xf32>
    %25 = vector.extract_strided_slice %24 {offsets = [0, 0], sizes = [16, 32], strides = [1, 1]} : vector<16x128xf32> to vector<16x32xf32>
    %cst_14 = arith.constant 5.000000e-01 : f32
    %26 = vector.broadcast %cst_14 : f32 to vector<16x32xf32>
    %27 = arith.mulf %26, %25 : vector<16x32xf32>
    %28 = arith.extf %1 : vector<16x32xbf16> to vector<16x32xf32>
    %29 = arith.addf %27, %28 : vector<16x32xf32>
    %30 = vector.shape_cast %29 : vector<16x32xf32> to vector<1x16x32xf32>
    %c0_15 = arith.constant 0 : index
    %c0_16 = arith.constant 0 : index
    %c0_17 = arith.constant 0 : index
    %31 = vector.load %arg5[%c0_15, %c0_16, %c0_17] : memref<1x16x32xf32, #tpu.memory_space<vmem>>, vector<1x16x32xf32>
    tpu.vector_store %arg5[%c0_15, %c0_16, %c0_17], %30 {strides = array<i32>} : memref<1x16x32xf32, #tpu.memory_space<vmem>>, vector<1x16x32xf32>,
    return
  }
  func.func @transform_0(%arg0: i32) -> (i32, i32, i32) {
    %c0_i32 = arith.constant 0 : i32
    %c0_i32_0 = arith.constant 0 : i32
    %c0_i32_1 = arith.constant 0 : i32
    return %arg0, %c0_i32, %c0_i32_0 : i32, i32, i32
  }
  func.func @transform_1(%arg0: i32) -> (i32, i32) {
    %c0_i32 = arith.constant 0 : i32
    %c0_i32_0 = arith.constant 0 : i32
    %c0_i32_1 = arith.constant 0 : i32
    return %c0_i32, %c0_i32_0 : i32, i32
  }
  func.func @transform_2(%arg0: i32) -> (i32, i32) {
    %c0_i32 = arith.constant 0 : i32
    %c0_i32_0 = arith.constant 0 : i32
    %c0_i32_1 = arith.constant 0 : i32
    return %c0_i32, %c0_i32_0 : i32, i32
  }
  func.func @transform_3(%arg0: i32) -> (i32, i32) {
    %c0_i32 = arith.constant 0 : i32
    %c0_i32_0 = arith.constant 0 : i32
    %c0_i32_1 = arith.constant 0 : i32
    return %c0_i32, %c0_i32_0 : i32, i32
  }
  func.func @transform_4(%arg0: i32) -> (i32, i32, i32) {
    %c0_i32 = arith.constant 0 : i32
    %c0_i32_0 = arith.constant 0 : i32
    %c0_i32_1 = arith.constant 0 : i32
    return %arg0, %c0_i32, %c0_i32_0 : i32, i32, i32
  }
}

module attributes {stable_mosaic.version = 11 : i64} {
  func.func @_matmul_bias_act_kernel(%arg0: i32, %arg1: memref<50x256xbf16, #tpu.memory_space<vmem>>, %arg2: memref<256x128xbf16, #tpu.memory_space<vmem>>, %arg3: memref<1x128xf32, #tpu.memory_space<vmem>>, %arg4: memref<50x128xbf16, #tpu.memory_space<vmem>>) attributes {dimension_semantics = [#tpu.dimension_semantics<parallel>], iteration_bounds = array<i64: 1>, scalar_prefetch = 0 : i64, scratch_operands = 0 : i64, tpu.core_type = #tpu.core_type<tc>, window_params = [{transform_indices = @transform_0, window_bounds = array<i64: 50, 256>}, {pipeline_mode = #tpu.pipeline_mode<synchronous>, transform_indices = @transform_1, window_bounds = array<i64: 256, 128>}, {pipeline_mode = #tpu.pipeline_mode<synchronous>, transform_indices = @transform_2, window_bounds = array<i64: 1, 128>}, {transform_indices = @transform_3, window_bounds = array<i64: 50, 128>}]} {
    %c0 = arith.constant 0 : index
    %c0_0 = arith.constant 0 : index
    %0 = vector.load %arg1[%c0, %c0_0] : memref<50x256xbf16, #tpu.memory_space<vmem>>, vector<50x256xbf16>
    %c0_1 = arith.constant 0 : index
    %c0_2 = arith.constant 0 : index
    %1 = vector.load %arg2[%c0_1, %c0_2] : memref<256x128xbf16, #tpu.memory_space<vmem>>, vector<256x128xbf16>
    %cst = arith.constant dense<0.000000e+00> : vector<50x128xf32>
    %2 = tpu.matmul %0, %1, %cst {dimension_numbers = #tpu.dot_dimension_numbers<[1], [0], [0], [1], [0, 0, 1, 1], [], []>} : vector<50x256xbf16>, vector<256x128xbf16>, vector<50x128xf32> -> vector<50x128xf32>
    %c0_3 = arith.constant 0 : index
    %c0_4 = arith.constant 0 : index
    %3 = vector.load %arg3[%c0_3, %c0_4] : memref<1x128xf32, #tpu.memory_space<vmem>>, vector<1x128xf32>
    %4 = vector.broadcast %3 : vector<1x128xf32> to vector<50x128xf32>
    %5 = arith.addf %2, %4 : vector<50x128xf32>
    %6 = arith.truncf %5 : vector<50x128xf32> to vector<50x128xbf16>
    %c0_5 = arith.constant 0 : index
    %c0_6 = arith.constant 0 : index
    %7 = vector.load %arg4[%c0_5, %c0_6] : memref<50x128xbf16, #tpu.memory_space<vmem>>, vector<50x128xbf16>
    tpu.vector_store %arg4[%c0_5, %c0_6], %6 {strides = array<i32>} : memref<50x128xbf16, #tpu.memory_space<vmem>>, vector<50x128xbf16>,
    return
  }
  func.func @transform_0(%arg0: i32) -> (i32, i32) {
    %c0_i32 = arith.constant 0 : i32
    %c0_i32_0 = arith.constant 0 : i32
    return %arg0, %c0_i32 : i32, i32
  }
  func.func @transform_1(%arg0: i32) -> (i32, i32) {
    %c0_i32 = arith.constant 0 : i32
    %c0_i32_0 = arith.constant 0 : i32
    %c0_i32_1 = arith.constant 0 : i32
    return %c0_i32, %c0_i32_0 : i32, i32
  }
  func.func @transform_2(%arg0: i32) -> (i32, i32) {
    %c0_i32 = arith.constant 0 : i32
    %c0_i32_0 = arith.constant 0 : i32
    %c0_i32_1 = arith.constant 0 : i32
    return %c0_i32, %c0_i32_0 : i32, i32
  }
  func.func @transform_3(%arg0: i32) -> (i32, i32) {
    %c0_i32 = arith.constant 0 : i32
    %c0_i32_0 = arith.constant 0 : i32
    return %arg0, %c0_i32 : i32, i32
  }
}

module attributes {stable_mosaic.version = 11 : i64} {
  func.func @_gn_relu_kernel(%arg0: i32, %arg1: memref<1x64x32xbf16, #tpu.memory_space<vmem>>, %arg2: memref<1x32xf32, #tpu.memory_space<vmem>>, %arg3: memref<1x32xf32, #tpu.memory_space<vmem>>, %arg4: memref<32x32xf32, #tpu.memory_space<vmem>>, %arg5: memref<1x64x32xbf16, #tpu.memory_space<vmem>>) attributes {dimension_semantics = [#tpu.dimension_semantics<parallel>], iteration_bounds = array<i64: 2>, scalar_prefetch = 0 : i64, scratch_operands = 0 : i64, tpu.core_type = #tpu.core_type<tc>, window_params = [{transform_indices = @transform_0, window_bounds = array<i64: 1, 64, 32>}, {pipeline_mode = #tpu.pipeline_mode<synchronous>, transform_indices = @transform_1, window_bounds = array<i64: 1, 32>}, {pipeline_mode = #tpu.pipeline_mode<synchronous>, transform_indices = @transform_2, window_bounds = array<i64: 1, 32>}, {pipeline_mode = #tpu.pipeline_mode<synchronous>, transform_indices = @transform_3, window_bounds = array<i64: 32, 32>}, {transform_indices = @transform_4, window_bounds = array<i64: 1, 64, 32>}]} {
    %c0 = arith.constant 0 : index
    %c0_0 = arith.constant 0 : index
    %c0_1 = arith.constant 0 : index
    %0 = vector.load %arg1[%c0, %c0_0, %c0_1] : memref<1x64x32xbf16, #tpu.memory_space<vmem>>, vector<1x64x32xbf16>
    %1 = vector.shape_cast %0 : vector<1x64x32xbf16> to vector<64x32xbf16>
    %2 = arith.extf %1 : vector<64x32xbf16> to vector<64x32xf32>
    %cst = arith.constant dense<0.000000e+00> : vector<32xf32>
    %3 = vector.multi_reduction <add>, %2, %cst [0] : vector<64x32xf32> to vector<32xf32>
    %4 = vector.shape_cast %3 : vector<32xf32> to vector<1x32xf32>
    %cst_2 = arith.constant 6.400000e+01 : f32
    %5 = vector.broadcast %cst_2 : f32 to vector<1x32xf32>
    %6 = arith.divf %4, %5 : vector<1x32xf32>
    %7 = arith.mulf %2, %2 : vector<64x32xf32>
    %cst_3 = arith.constant dense<0.000000e+00> : vector<32xf32>
    %8 = vector.multi_reduction <add>, %7, %cst_3 [0] : vector<64x32xf32> to vector<32xf32>
    %9 = vector.shape_cast %8 : vector<32xf32> to vector<1x32xf32>
    %cst_4 = arith.constant 6.400000e+01 : f32
    %10 = vector.broadcast %cst_4 : f32 to vector<1x32xf32>
    %11 = arith.divf %9, %10 : vector<1x32xf32>
    %c0_5 = arith.constant 0 : index
    %c0_6 = arith.constant 0 : index
    %12 = vector.load %arg4[%c0_5, %c0_6] : memref<32x32xf32, #tpu.memory_space<vmem>>, vector<32x32xf32>
    %cst_7 = arith.constant dense<0.000000e+00> : vector<1x32xf32>
    %13 = tpu.matmul %6, %12, %cst_7 {dimension_numbers = #tpu.dot_dimension_numbers<[1], [0], [0], [1], [0, 0, 1, 1], [], []>} : vector<1x32xf32>, vector<32x32xf32>, vector<1x32xf32> -> vector<1x32xf32>
    %cst_8 = arith.constant dense<0.000000e+00> : vector<1x32xf32>
    %14 = tpu.matmul %11, %12, %cst_8 {dimension_numbers = #tpu.dot_dimension_numbers<[1], [0], [0], [1], [0, 0, 1, 1], [], []>} : vector<1x32xf32>, vector<32x32xf32>, vector<1x32xf32> -> vector<1x32xf32>
    %15 = arith.mulf %13, %13 : vector<1x32xf32>
    %16 = arith.subf %14, %15 : vector<1x32xf32>
    %cst_9 = arith.constant 9.99999974E-6 : f32
    %17 = vector.broadcast %cst_9 : f32 to vector<1x32xf32>
    %18 = arith.addf %16, %17 : vector<1x32xf32>
    %19 = math.rsqrt %18 : vector<1x32xf32>
    %20 = vector.broadcast %13 : vector<1x32xf32> to vector<64x32xf32>
    %21 = arith.subf %2, %20 : vector<64x32xf32>
    %22 = vector.broadcast %19 : vector<1x32xf32> to vector<64x32xf32>
    %23 = arith.mulf %21, %22 : vector<64x32xf32>
    %c0_10 = arith.constant 0 : index
    %c0_11 = arith.constant 0 : index
    %24 = vector.load %arg2[%c0_10, %c0_11] : memref<1x32xf32, #tpu.memory_space<vmem>>, vector<1x32xf32>
    %25 = vector.broadcast %24 : vector<1x32xf32> to vector<64x32xf32>
    %26 = arith.mulf %23, %25 : vector<64x32xf32>
    %c0_12 = arith.constant 0 : index
    %c0_13 = arith.constant 0 : index
    %27 = vector.load %arg3[%c0_12, %c0_13] : memref<1x32xf32, #tpu.memory_space<vmem>>, vector<1x32xf32>
    %28 = vector.broadcast %27 : vector<1x32xf32> to vector<64x32xf32>
    %29 = arith.addf %26, %28 : vector<64x32xf32>
    %cst_14 = arith.constant 0.000000e+00 : f32
    %30 = vector.broadcast %cst_14 : f32 to vector<64x32xf32>
    %31 = arith.maximumf %29, %30 : vector<64x32xf32>
    %32 = vector.shape_cast %31 : vector<64x32xf32> to vector<1x64x32xf32>
    %33 = arith.truncf %32 : vector<1x64x32xf32> to vector<1x64x32xbf16>
    %c0_15 = arith.constant 0 : index
    %c0_16 = arith.constant 0 : index
    %c0_17 = arith.constant 0 : index
    %34 = vector.load %arg5[%c0_15, %c0_16, %c0_17] : memref<1x64x32xbf16, #tpu.memory_space<vmem>>, vector<1x64x32xbf16>
    tpu.vector_store %arg5[%c0_15, %c0_16, %c0_17], %33 {strides = array<i32>} : memref<1x64x32xbf16, #tpu.memory_space<vmem>>, vector<1x64x32xbf16>,
    return
  }
  func.func @transform_0(%arg0: i32) -> (i32, i32, i32) {
    %c0_i32 = arith.constant 0 : i32
    %c0_i32_0 = arith.constant 0 : i32
    %c0_i32_1 = arith.constant 0 : i32
    return %arg0, %c0_i32, %c0_i32_0 : i32, i32, i32
  }
  func.func @transform_1(%arg0: i32) -> (i32, i32) {
    %c0_i32 = arith.constant 0 : i32
    %c0_i32_0 = arith.constant 0 : i32
    %c0_i32_1 = arith.constant 0 : i32
    return %c0_i32, %c0_i32_0 : i32, i32
  }
  func.func @transform_2(%arg0: i32) -> (i32, i32) {
    %c0_i32 = arith.constant 0 : i32
    %c0_i32_0 = arith.constant 0 : i32
    %c0_i32_1 = arith.constant 0 : i32
    return %c0_i32, %c0_i32_0 : i32, i32
  }
  func.func @transform_3(%arg0: i32) -> (i32, i32) {
    %c0_i32 = arith.constant 0 : i32
    %c0_i32_0 = arith.constant 0 : i32
    %c0_i32_1 = arith.constant 0 : i32
    return %c0_i32, %c0_i32_0 : i32, i32
  }
  func.func @transform_4(%arg0: i32) -> (i32, i32, i32) {
    %c0_i32 = arith.constant 0 : i32
    %c0_i32_0 = arith.constant 0 : i32
    %c0_i32_1 = arith.constant 0 : i32
    return %arg0, %c0_i32, %c0_i32_0 : i32, i32, i32
  }
}

module attributes {stable_mosaic.version = 11 : i64} {
  func.func @_matmul_bias_act_kernel(%arg0: i32, %arg1: memref<162x128xbf16, #tpu.memory_space<vmem>>, %arg2: memref<128x128xbf16, #tpu.memory_space<vmem>>, %arg3: memref<1x128xf32, #tpu.memory_space<vmem>>, %arg4: memref<162x128xbf16, #tpu.memory_space<vmem>>) attributes {dimension_semantics = [#tpu.dimension_semantics<parallel>], iteration_bounds = array<i64: 1>, scalar_prefetch = 0 : i64, scratch_operands = 0 : i64, tpu.core_type = #tpu.core_type<tc>, window_params = [{transform_indices = @transform_0, window_bounds = array<i64: 162, 128>}, {pipeline_mode = #tpu.pipeline_mode<synchronous>, transform_indices = @transform_1, window_bounds = array<i64: 128, 128>}, {pipeline_mode = #tpu.pipeline_mode<synchronous>, transform_indices = @transform_2, window_bounds = array<i64: 1, 128>}, {transform_indices = @transform_3, window_bounds = array<i64: 162, 128>}]} {
    %c0 = arith.constant 0 : index
    %c0_0 = arith.constant 0 : index
    %0 = vector.load %arg1[%c0, %c0_0] : memref<162x128xbf16, #tpu.memory_space<vmem>>, vector<162x128xbf16>
    %c0_1 = arith.constant 0 : index
    %c0_2 = arith.constant 0 : index
    %1 = vector.load %arg2[%c0_1, %c0_2] : memref<128x128xbf16, #tpu.memory_space<vmem>>, vector<128x128xbf16>
    %cst = arith.constant dense<0.000000e+00> : vector<162x128xf32>
    %2 = tpu.matmul %0, %1, %cst {dimension_numbers = #tpu.dot_dimension_numbers<[1], [0], [0], [1], [0, 0, 1, 1], [], []>} : vector<162x128xbf16>, vector<128x128xbf16>, vector<162x128xf32> -> vector<162x128xf32>
    %c0_3 = arith.constant 0 : index
    %c0_4 = arith.constant 0 : index
    %3 = vector.load %arg3[%c0_3, %c0_4] : memref<1x128xf32, #tpu.memory_space<vmem>>, vector<1x128xf32>
    %4 = vector.broadcast %3 : vector<1x128xf32> to vector<162x128xf32>
    %5 = arith.addf %2, %4 : vector<162x128xf32>
    %6 = arith.truncf %5 : vector<162x128xf32> to vector<162x128xbf16>
    %c0_5 = arith.constant 0 : index
    %c0_6 = arith.constant 0 : index
    %7 = vector.load %arg4[%c0_5, %c0_6] : memref<162x128xbf16, #tpu.memory_space<vmem>>, vector<162x128xbf16>
    tpu.vector_store %arg4[%c0_5, %c0_6], %6 {strides = array<i32>} : memref<162x128xbf16, #tpu.memory_space<vmem>>, vector<162x128xbf16>,
    return
  }
  func.func @transform_0(%arg0: i32) -> (i32, i32) {
    %c0_i32 = arith.constant 0 : i32
    %c0_i32_0 = arith.constant 0 : i32
    return %arg0, %c0_i32 : i32, i32
  }
  func.func @transform_1(%arg0: i32) -> (i32, i32) {
    %c0_i32 = arith.constant 0 : i32
    %c0_i32_0 = arith.constant 0 : i32
    %c0_i32_1 = arith.constant 0 : i32
    return %c0_i32, %c0_i32_0 : i32, i32
  }
  func.func @transform_2(%arg0: i32) -> (i32, i32) {
    %c0_i32 = arith.constant 0 : i32
    %c0_i32_0 = arith.constant 0 : i32
    %c0_i32_1 = arith.constant 0 : i32
    return %c0_i32, %c0_i32_0 : i32, i32
  }
  func.func @transform_3(%arg0: i32) -> (i32, i32) {
    %c0_i32 = arith.constant 0 : i32
    %c0_i32_0 = arith.constant 0 : i32
    return %arg0, %c0_i32 : i32, i32
  }
}

module attributes {stable_mosaic.version = 11 : i64} {
  func.func @_gn_relu_kernel(%arg0: i32, %arg1: memref<1x256x16xbf16, #tpu.memory_space<vmem>>, %arg2: memref<1x16xf32, #tpu.memory_space<vmem>>, %arg3: memref<1x16xf32, #tpu.memory_space<vmem>>, %arg4: memref<16x16xf32, #tpu.memory_space<vmem>>, %arg5: memref<1x256x16xbf16, #tpu.memory_space<vmem>>) attributes {dimension_semantics = [#tpu.dimension_semantics<parallel>], iteration_bounds = array<i64: 2>, scalar_prefetch = 0 : i64, scratch_operands = 0 : i64, tpu.core_type = #tpu.core_type<tc>, window_params = [{transform_indices = @transform_0, window_bounds = array<i64: 1, 256, 16>}, {pipeline_mode = #tpu.pipeline_mode<synchronous>, transform_indices = @transform_1, window_bounds = array<i64: 1, 16>}, {pipeline_mode = #tpu.pipeline_mode<synchronous>, transform_indices = @transform_2, window_bounds = array<i64: 1, 16>}, {pipeline_mode = #tpu.pipeline_mode<synchronous>, transform_indices = @transform_3, window_bounds = array<i64: 16, 16>}, {transform_indices = @transform_4, window_bounds = array<i64: 1, 256, 16>}]} {
    %c0 = arith.constant 0 : index
    %c0_0 = arith.constant 0 : index
    %c0_1 = arith.constant 0 : index
    %0 = vector.load %arg1[%c0, %c0_0, %c0_1] : memref<1x256x16xbf16, #tpu.memory_space<vmem>>, vector<1x256x16xbf16>
    %1 = vector.shape_cast %0 : vector<1x256x16xbf16> to vector<256x16xbf16>
    %2 = arith.extf %1 : vector<256x16xbf16> to vector<256x16xf32>
    %cst = arith.constant dense<0.000000e+00> : vector<16xf32>
    %3 = vector.multi_reduction <add>, %2, %cst [0] : vector<256x16xf32> to vector<16xf32>
    %4 = vector.shape_cast %3 : vector<16xf32> to vector<1x16xf32>
    %cst_2 = arith.constant 2.560000e+02 : f32
    %5 = vector.broadcast %cst_2 : f32 to vector<1x16xf32>
    %6 = arith.divf %4, %5 : vector<1x16xf32>
    %7 = arith.mulf %2, %2 : vector<256x16xf32>
    %cst_3 = arith.constant dense<0.000000e+00> : vector<16xf32>
    %8 = vector.multi_reduction <add>, %7, %cst_3 [0] : vector<256x16xf32> to vector<16xf32>
    %9 = vector.shape_cast %8 : vector<16xf32> to vector<1x16xf32>
    %cst_4 = arith.constant 2.560000e+02 : f32
    %10 = vector.broadcast %cst_4 : f32 to vector<1x16xf32>
    %11 = arith.divf %9, %10 : vector<1x16xf32>
    %c0_5 = arith.constant 0 : index
    %c0_6 = arith.constant 0 : index
    %12 = vector.load %arg4[%c0_5, %c0_6] : memref<16x16xf32, #tpu.memory_space<vmem>>, vector<16x16xf32>
    %cst_7 = arith.constant dense<0.000000e+00> : vector<1x16xf32>
    %13 = tpu.matmul %6, %12, %cst_7 {dimension_numbers = #tpu.dot_dimension_numbers<[1], [0], [0], [1], [0, 0, 1, 1], [], []>} : vector<1x16xf32>, vector<16x16xf32>, vector<1x16xf32> -> vector<1x16xf32>
    %cst_8 = arith.constant dense<0.000000e+00> : vector<1x16xf32>
    %14 = tpu.matmul %11, %12, %cst_8 {dimension_numbers = #tpu.dot_dimension_numbers<[1], [0], [0], [1], [0, 0, 1, 1], [], []>} : vector<1x16xf32>, vector<16x16xf32>, vector<1x16xf32> -> vector<1x16xf32>
    %15 = arith.mulf %13, %13 : vector<1x16xf32>
    %16 = arith.subf %14, %15 : vector<1x16xf32>
    %cst_9 = arith.constant 9.99999974E-6 : f32
    %17 = vector.broadcast %cst_9 : f32 to vector<1x16xf32>
    %18 = arith.addf %16, %17 : vector<1x16xf32>
    %19 = math.rsqrt %18 : vector<1x16xf32>
    %20 = vector.broadcast %13 : vector<1x16xf32> to vector<256x16xf32>
    %21 = arith.subf %2, %20 : vector<256x16xf32>
    %22 = vector.broadcast %19 : vector<1x16xf32> to vector<256x16xf32>
    %23 = arith.mulf %21, %22 : vector<256x16xf32>
    %c0_10 = arith.constant 0 : index
    %c0_11 = arith.constant 0 : index
    %24 = vector.load %arg2[%c0_10, %c0_11] : memref<1x16xf32, #tpu.memory_space<vmem>>, vector<1x16xf32>
    %25 = vector.broadcast %24 : vector<1x16xf32> to vector<256x16xf32>
    %26 = arith.mulf %23, %25 : vector<256x16xf32>
    %c0_12 = arith.constant 0 : index
    %c0_13 = arith.constant 0 : index
    %27 = vector.load %arg3[%c0_12, %c0_13] : memref<1x16xf32, #tpu.memory_space<vmem>>, vector<1x16xf32>
    %28 = vector.broadcast %27 : vector<1x16xf32> to vector<256x16xf32>
    %29 = arith.addf %26, %28 : vector<256x16xf32>
    %cst_14 = arith.constant 0.000000e+00 : f32
    %30 = vector.broadcast %cst_14 : f32 to vector<256x16xf32>
    %31 = arith.maximumf %29, %30 : vector<256x16xf32>
    %32 = vector.shape_cast %31 : vector<256x16xf32> to vector<1x256x16xf32>
    %33 = arith.truncf %32 : vector<1x256x16xf32> to vector<1x256x16xbf16>
    %c0_15 = arith.constant 0 : index
    %c0_16 = arith.constant 0 : index
    %c0_17 = arith.constant 0 : index
    %34 = vector.load %arg5[%c0_15, %c0_16, %c0_17] : memref<1x256x16xbf16, #tpu.memory_space<vmem>>, vector<1x256x16xbf16>
    tpu.vector_store %arg5[%c0_15, %c0_16, %c0_17], %33 {strides = array<i32>} : memref<1x256x16xbf16, #tpu.memory_space<vmem>>, vector<1x256x16xbf16>,
    return
  }
  func.func @transform_0(%arg0: i32) -> (i32, i32, i32) {
    %c0_i32 = arith.constant 0 : i32
    %c0_i32_0 = arith.constant 0 : i32
    %c0_i32_1 = arith.constant 0 : i32
    return %arg0, %c0_i32, %c0_i32_0 : i32, i32, i32
  }
  func.func @transform_1(%arg0: i32) -> (i32, i32) {
    %c0_i32 = arith.constant 0 : i32
    %c0_i32_0 = arith.constant 0 : i32
    %c0_i32_1 = arith.constant 0 : i32
    return %c0_i32, %c0_i32_0 : i32, i32
  }
  func.func @transform_2(%arg0: i32) -> (i32, i32) {
    %c0_i32 = arith.constant 0 : i32
    %c0_i32_0 = arith.constant 0 : i32
    %c0_i32_1 = arith.constant 0 : i32
    return %c0_i32, %c0_i32_0 : i32, i32
  }
  func.func @transform_3(%arg0: i32) -> (i32, i32) {
    %c0_i32 = arith.constant 0 : i32
    %c0_i32_0 = arith.constant 0 : i32
    %c0_i32_1 = arith.constant 0 : i32
    return %c0_i32, %c0_i32_0 : i32, i32
  }
  func.func @transform_4(%arg0: i32) -> (i32, i32, i32) {
    %c0_i32 = arith.constant 0 : i32
    %c0_i32_0 = arith.constant 0 : i32
    %c0_i32_1 = arith.constant 0 : i32
    return %arg0, %c0_i32, %c0_i32_0 : i32, i32, i32
  }
}

module attributes {stable_mosaic.version = 11 : i64} {
  func.func @_matmul_bias_act_kernel(%arg0: i32, %arg1: memref<256x256xbf16, #tpu.memory_space<vmem>>, %arg2: memref<256x128xbf16, #tpu.memory_space<vmem>>, %arg3: memref<1x128xf32, #tpu.memory_space<vmem>>, %arg4: memref<256x128xf32, #tpu.memory_space<vmem>>) attributes {dimension_semantics = [#tpu.dimension_semantics<parallel>], iteration_bounds = array<i64: 2>, scalar_prefetch = 0 : i64, scratch_operands = 0 : i64, tpu.core_type = #tpu.core_type<tc>, window_params = [{transform_indices = @transform_0, window_bounds = array<i64: 256, 256>}, {pipeline_mode = #tpu.pipeline_mode<synchronous>, transform_indices = @transform_1, window_bounds = array<i64: 256, 128>}, {pipeline_mode = #tpu.pipeline_mode<synchronous>, transform_indices = @transform_2, window_bounds = array<i64: 1, 128>}, {transform_indices = @transform_3, window_bounds = array<i64: 256, 128>}]} {
    %c0 = arith.constant 0 : index
    %c0_0 = arith.constant 0 : index
    %0 = vector.load %arg1[%c0, %c0_0] : memref<256x256xbf16, #tpu.memory_space<vmem>>, vector<256x256xbf16>
    %c0_1 = arith.constant 0 : index
    %c0_2 = arith.constant 0 : index
    %1 = vector.load %arg2[%c0_1, %c0_2] : memref<256x128xbf16, #tpu.memory_space<vmem>>, vector<256x128xbf16>
    %cst = arith.constant dense<0.000000e+00> : vector<256x128xf32>
    %2 = tpu.matmul %0, %1, %cst {dimension_numbers = #tpu.dot_dimension_numbers<[1], [0], [0], [1], [0, 0, 1, 1], [], []>} : vector<256x256xbf16>, vector<256x128xbf16>, vector<256x128xf32> -> vector<256x128xf32>
    %c0_3 = arith.constant 0 : index
    %c0_4 = arith.constant 0 : index
    %3 = vector.load %arg3[%c0_3, %c0_4] : memref<1x128xf32, #tpu.memory_space<vmem>>, vector<1x128xf32>
    %4 = vector.broadcast %3 : vector<1x128xf32> to vector<256x128xf32>
    %5 = arith.addf %2, %4 : vector<256x128xf32>
    %c0_5 = arith.constant 0 : index
    %c0_6 = arith.constant 0 : index
    %6 = vector.load %arg4[%c0_5, %c0_6] : memref<256x128xf32, #tpu.memory_space<vmem>>, vector<256x128xf32>
    tpu.vector_store %arg4[%c0_5, %c0_6], %5 {strides = array<i32>} : memref<256x128xf32, #tpu.memory_space<vmem>>, vector<256x128xf32>,
    return
  }
  func.func @transform_0(%arg0: i32) -> (i32, i32) {
    %c0_i32 = arith.constant 0 : i32
    %c0_i32_0 = arith.constant 0 : i32
    return %arg0, %c0_i32 : i32, i32
  }
  func.func @transform_1(%arg0: i32) -> (i32, i32) {
    %c0_i32 = arith.constant 0 : i32
    %c0_i32_0 = arith.constant 0 : i32
    %c0_i32_1 = arith.constant 0 : i32
    return %c0_i32, %c0_i32_0 : i32, i32
  }
  func.func @transform_2(%arg0: i32) -> (i32, i32) {
    %c0_i32 = arith.constant 0 : i32
    %c0_i32_0 = arith.constant 0 : i32
    %c0_i32_1 = arith.constant 0 : i32
    return %c0_i32, %c0_i32_0 : i32, i32
  }
  func.func @transform_3(%arg0: i32) -> (i32, i32) {
    %c0_i32 = arith.constant 0 : i32
    %c0_i32_0 = arith.constant 0 : i32
    return %arg0, %c0_i32 : i32, i32
  }
}

</mosaic_0001>

<llo_original>
// kernel: forward.32
$region0: #{forward.32}
  #allocation0 [shape = 'u32[]', space=smem, size = 0x4, offset = 0x4, fixed_abs, tag = 'smem constant byte address 0x4 - core index']
  #allocation1 [shape = 'u32[144,128]{1,0:T(1,128)}', space=vmem, size = 0x12000, scoped, tag = 'internal scratch']
  %s0 = inlined_call_operand.vmem [shape: bf16[128,128], index: 0, kind: input, shape index: {}]
  %s1 = inlined_call_operand.vmem [shape: bf16[128,128], index: 1, kind: input, shape index: {}]
  %s2 = inlined_call_operand.vmem [shape: f32[1,128], index: 2, kind: input, shape index: {}]
  %s3 = inlined_call_operand.vmem [shape: bf16[128,128], index: 3, kind: output, shape index: {}]
  %s4 = sld [smem:[#allocation0]]
  $region22: #{forward.32} parent=0
    _
  %s6 = ssub.s32 1, %s4
  %s7 = scalar_select 0, %s6, %s4
  // Predicated region
  $region2: #{forward.32} parent=0 // pred_check
    _
  $region3: #{forward.32} parent=0 // pred_check_branch
    %9 = sbr.rel (0) target = $region5
  $region4: #{forward.32} parent=0 // pred_region
    _
  $region5: #{forward.32} parent=0 // pred_fallthru
    _
  // Predicated region
  $region6: #{forward.32} parent=0 // pred_check
    _
  $region7: #{forward.32} parent=0 // pred_check_branch
    %11 = sbr.rel (0) target = $region9
  $region8: #{forward.32} parent=0 // pred_region
    _
  $region9: #{forward.32} parent=0 // pred_fallthru
    _
  // Predicated region
  $region10: #{forward.32} parent=0 // pred_check
    _
  $region11: #{forward.32} parent=0 // pred_check_branch
    %13 = sbr.rel (0) target = $region13
  $region12: #{forward.32} parent=0 // pred_region
    _
  $region13: #{forward.32} parent=0 // pred_fallthru
    _
  %v15 = vld [vmem:[%s0] sm:$0xf]
  %v16 = vld [vmem:[%s0 + $0x4] sm:$0xf]
  %v17 = vld [vmem:[%s0 + $0x8] sm:$0xf]
  %v18 = vld [vmem:[%s0 + $0xc] sm:$0xf]
  %v19 = vld [vmem:[%s0 + $0x10] sm:$0xf]
  %v20 = vld [vmem:[%s0 + $0x14] sm:$0xf]
  %v21 = vld [vmem:[%s0 + $0x18] sm:$0xf]
  %v22 = vld [vmem:[%s0 + $0x1c] sm:$0xf]
  %v23 = vld [vmem:[%s0 + $0x20] sm:$0xf]
  %v24 = vld [vmem:[%s0 + $0x24] sm:$0xf]
  %v25 = vld [vmem:[%s0 + $0x28] sm:$0xf]
  %v26 = vld [vmem:[%s0 + $0x2c] sm:$0xf]
  %v27 = vld [vmem:[%s0 + $0x30] sm:$0xf]
  %v28 = vld [vmem:[%s0 + $0x34] sm:$0xf]
  %v29 = vld [vmem:[%s0 + $0x38] sm:$0xf]
  %v30 = vld [vmem:[%s0 + $0x3c] sm:$0xf]
  %v31 = vld [vmem:[%s1] sm:$0xf]
  %v32 = vld [vmem:[%s1 + $0x4] sm:$0xf]
  %v33 = vld [vmem:[%s1 + $0x8] sm:$0xf]
  %v34 = vld [vmem:[%s1 + $0xc] sm:$0xf]
  %v35 = vld [vmem:[%s1 + $0x10] sm:$0xf]
  %v36 = vld [vmem:[%s1 + $0x14] sm:$0xf]
  %v37 = vld [vmem:[%s1 + $0x18] sm:$0xf]
  %v38 = vld [vmem:[%s1 + $0x1c] sm:$0xf]
  %v39 = vld [vmem:[%s1 + $0x20] sm:$0xf]
  %v40 = vld [vmem:[%s1 + $0x24] sm:$0xf]
  %v41 = vld [vmem:[%s1 + $0x28] sm:$0xf]
  %v42 = vld [vmem:[%s1 + $0x2c] sm:$0xf]
  %v43 = vld [vmem:[%s1 + $0x30] sm:$0xf]
  %v44 = vld [vmem:[%s1 + $0x34] sm:$0xf]
  %v45 = vld [vmem:[%s1 + $0x38] sm:$0xf]
  %v46 = vld [vmem:[%s1 + $0x3c] sm:$0xf]
  %v47 = vld [vmem:[%s2] sm:$0x1]
  %v49 = vlaneseq
  %v50 = vshrl.u32 %v49, 7
  %v51 = vsub.s32 0, %v50
  %v52 = vrot.slane %v47, %v51
  %v70 = vunpack.c.l.b16 %v15
  %v71 = vunpack.c.l.b16 %v16
  %v72 = vunpack.c.l.b16 %v17
  %v73 = vunpack.c.l.b16 %v18
  %v74 = vunpack.c.l.b16 %v19
  %v75 = vunpack.c.l.b16 %v20
  %v76 = vunpack.c.l.b16 %v21
  %v77 = vunpack.c.l.b16 %v22
  %v78 = vunpack.c.l.b16 %v23
  %v79 = vunpack.c.l.b16 %v24
  %v80 = vunpack.c.l.b16 %v25
  %v81 = vunpack.c.l.b16 %v26
  %v82 = vunpack.c.l.b16 %v27
  %v83 = vunpack.c.l.b16 %v28
  %v84 = vunpack.c.l.b16 %v29
  %v85 = vunpack.c.l.b16 %v30
  %v86 = vpack.c.b16 %v71, %v70
  %v87 = vpack.c.b16 %v73, %v72
  %v88 = vpack.c.b16 %v75, %v74
  %v89 = vpack.c.b16 %v77, %v76
  %v90 = vpack.c.b16 %v79, %v78
  %v91 = vpack.c.b16 %v81, %v80
  %v92 = vpack.c.b16 %v83, %v82
  %v93 = vpack.c.b16 %v85, %v84
  %v118 = vunpack.c.l.b16 %v31
  %v119 = vunpack.c.l.b16 %v32
  %v120 = vunpack.c.l.b16 %v33
  %v121 = vunpack.c.l.b16 %v34
  %v122 = vunpack.c.l.b16 %v35
  %v123 = vunpack.c.l.b16 %v36
  %v124 = vunpack.c.l.b16 %v37
  %v125 = vunpack.c.l.b16 %v38
  %v126 = vunpack.c.l.b16 %v39
  %v127 = vunpack.c.l.b16 %v40
  %v128 = vunpack.c.l.b16 %v41
  %v129 = vunpack.c.l.b16 %v42
  %v130 = vunpack.c.l.b16 %v43
  %v131 = vunpack.c.l.b16 %v44
  %v132 = vunpack.c.l.b16 %v45
  %v133 = vunpack.c.l.b16 %v46
  %v134 = vpack.c.b16 %v119, %v118
  %v135 = vpack.c.b16 %v121, %v120
  %v136 = vpack.c.b16 %v123, %v122
  %v137 = vpack.c.b16 %v125, %v124
  %v138 = vpack.c.b16 %v127, %v126
  %v139 = vpack.c.b16 %v129, %v128
  %v140 = vpack.c.b16 %v131, %v130
  %v141 = vpack.c.b16 %v133, %v132
  %150 = vmatprep.subr.bf16.mxu0 0
  %151 = vmatpush1.bf16.msra.mxu0 %v134
  %152 = vmatprep.subr.bf16.mxu0 0
  %153 = vmatpush1.bf16.msra.mxu0 %v135
  %154 = vmatprep.subr.bf16.mxu0 0
  %155 = vmatpush1.bf16.msra.mxu0 %v136
  %156 = vmatprep.subr.bf16.mxu0 0
  %157 = vmatpush1.bf16.msra.mxu0 %v137
  %158 = vmatprep.subr.bf16.mxu0 0
  %159 = vmatpush1.bf16.msra.mxu0 %v138
  %160 = vmatprep.subr.bf16.mxu0 0
  %161 = vmatpush1.bf16.msra.mxu0 %v139
  %162 = vmatprep.subr.bf16.mxu0 0
  %163 = vmatpush1.bf16.msra.mxu0 %v140
  %164 = vmatprep.subr.bf16.mxu0 0
  %165 = vmatpush1.bf16.msra.mxu0 %v141
  %166 = vmatprep.subr.bf16.mxu0 0
  %167 = vmatpush1.bf16.msra.mxu0 0
  %168 = vmatprep.subr.bf16.mxu0 0
  %169 = vmatpush1.bf16.msra.mxu0 0
  %170 = vmatprep.subr.bf16.mxu0 0
  %171 = vmatpush1.bf16.msra.mxu0 0
  %172 = vmatprep.subr.bf16.mxu0 0
  %173 = vmatpush1.bf16.msra.mxu0 0
  %174 = vmatprep.subr.bf16.mxu0 0
  %175 = vmatpush1.bf16.msra.mxu0 0
  %176 = vmatprep.subr.bf16.mxu0 0
  %177 = vmatpush1.bf16.msra.mxu0 0
  %178 = vmatprep.subr.bf16.mxu0 0
  %179 = vmatpush1.bf16.msra.mxu0 0
  %180 = vmatprep.subr.bf16.mxu0 0
  %181 = vmatpush1.bf16.msra.mxu0 0
  %182 = vmatprep.mubr.bf16.mxu0 0
  %183 = vmatmul.mubr.bf16.gmra.mrb[0].mxu0 %v86
  %v184 = vpop.f32.mrb[0].mxu0
  %v185 = vadd.f32 %v52, %v184
  %v186 = vpop.f32.mrb[0].mxu0
  %v187 = vpop.f32.mrb[0].mxu0
  %v188 = vadd.f32 %v52, %v187
  %v189 = vpop.f32.mrb[0].mxu0
  %190 = vmatprep.mubr.bf16.mxu0 0
  %191 = vmatmul.mubr.bf16.gmra.mrb[0].mxu0 %v87
  %v192 = vpop.f32.mrb[0].mxu0
  %v193 = vadd.f32 %v52, %v192
  %v194 = vpop.f32.mrb[0].mxu0
  %v195 = vpop.f32.mrb[0].mxu0
  %v196 = vadd.f32 %v52, %v195
  %v197 = vpop.f32.mrb[0].mxu0
  %198 = vmatprep.mubr.bf16.mxu0 0
  %199 = vmatmul.mubr.bf16.gmra.mrb[0].mxu0 %v88
  %v200 = vpop.f32.mrb[0].mxu0
  %v201 = vadd.f32 %v52, %v200
  %v202 = vpop.f32.mrb[0].mxu0
  %v203 = vpop.f32.mrb[0].mxu0
  %v204 = vadd.f32 %v52, %v203
  %v205 = vpop.f32.mrb[0].mxu0
  %206 = vmatprep.mubr.bf16.mxu0 0
  %207 = vmatmul.mubr.bf16.gmra.mrb[0].mxu0 %v89
  %v208 = vpop.f32.mrb[0].mxu0
  %v209 = vadd.f32 %v52, %v208
  %v210 = vpop.f32.mrb[0].mxu0
  %v211 = vpop.f32.mrb[0].mxu0
  %v212 = vadd.f32 %v52, %v211
  %v213 = vpop.f32.mrb[0].mxu0
  %214 = vmatprep.mubr.bf16.mxu0 0
  %215 = vmatmul.mubr.bf16.gmra.mrb[0].mxu0 %v90
  %v216 = vpop.f32.mrb[0].mxu0
  %v217 = vadd.f32 %v52, %v216
  %v218 = vpop.f32.mrb[0].mxu0
  %v219 = vpop.f32.mrb[0].mxu0
  %v220 = vadd.f32 %v52, %v219
  %v221 = vpop.f32.mrb[0].mxu0
  %222 = vmatprep.mubr.bf16.mxu0 0
  %223 = vmatmul.mubr.bf16.gmra.mrb[0].mxu0 %v91
  %v224 = vpop.f32.mrb[0].mxu0
  %v225 = vadd.f32 %v52, %v224
  %v226 = vpop.f32.mrb[0].mxu0
  %v227 = vpop.f32.mrb[0].mxu0
  %v228 = vadd.f32 %v52, %v227
  %v229 = vpop.f32.mrb[0].mxu0
  %230 = vmatprep.mubr.bf16.mxu0 0
  %231 = vmatmul.mubr.bf16.gmra.mrb[0].mxu0 %v92
  %v232 = vpop.f32.mrb[0].mxu0
  %v233 = vadd.f32 %v52, %v232
  %v234 = vpop.f32.mrb[0].mxu0
  %v235 = vpop.f32.mrb[0].mxu0
  %v236 = vadd.f32 %v52, %v235
  %v237 = vpop.f32.mrb[0].mxu0
  %238 = vmatprep.mubr.bf16.mxu0 0
  %239 = vmatmul.mubr.bf16.gmra.mrb[0].mxu0 %v93
  %v240 = vpop.f32.mrb[0].mxu0
  %v241 = vadd.f32 %v52, %v240
  %v242 = vpop.f32.mrb[0].mxu0
  %v243 = vpop.f32.mrb[0].mxu0
  %v244 = vadd.f32 %v52, %v243
  %v245 = vpop.f32.mrb[0].mxu0
  %246 = vdwg.mxu0
  %v247 = vmax.f32 %v185, 0.0
  %v248 = vmax.f32 %v188, 0.0
  %v249 = vmax.f32 %v193, 0.0
  %v250 = vmax.f32 %v196, 0.0
  %v251 = vmax.f32 %v201, 0.0
  %v252 = vmax.f32 %v204, 0.0
  %v253 = vmax.f32 %v209, 0.0
  %v254 = vmax.f32 %v212, 0.0
  %v255 = vmax.f32 %v217, 0.0
  %v256 = vmax.f32 %v220, 0.0
  %v257 = vmax.f32 %v225, 0.0
  %v258 = vmax.f32 %v228, 0.0
  %v259 = vmax.f32 %v233, 0.0
  %v260 = vmax.f32 %v236, 0.0
  %v261 = vmax.f32 %v241, 0.0
  %v262 = vmax.f32 %v244, 0.0
  %v263 = vpack.c.bf16 %v248, %v247
  %v264 = vpack.c.bf16 %v250, %v249
  %v265 = vpack.c.bf16 %v252, %v251
  %v266 = vpack.c.bf16 %v254, %v253
  %v267 = vpack.c.bf16 %v256, %v255
  %v268 = vpack.c.bf16 %v258, %v257
  %v269 = vpack.c.bf16 %v260, %v259
  %v270 = vpack.c.bf16 %v262, %v261
  %v279 = vunpack.c.l.b16 %v263
  %v280 = vunpack.c.h.b16 %v263
  %v281 = vunpack.c.l.b16 %v264
  %v282 = vunpack.c.h.b16 %v264
  %v283 = vunpack.c.l.b16 %v265
  %v284 = vunpack.c.h.b16 %v265
  %v285 = vunpack.c.l.b16 %v266
  %v286 = vunpack.c.h.b16 %v266
  %v287 = vunpack.c.l.b16 %v267
  %v288 = vunpack.c.h.b16 %v267
  %v289 = vunpack.c.l.b16 %v268
  %v290 = vunpack.c.h.b16 %v268
  %v291 = vunpack.c.l.b16 %v269
  %v292 = vunpack.c.h.b16 %v269
  %v293 = vunpack.c.l.b16 %v270
  %v294 = vunpack.c.h.b16 %v270
  %v295 = vpack.c.b16 %v279, %v279
  %v296 = vpack.c.b16 %v280, %v280
  %v297 = vpack.c.b16 %v281, %v281
  %v298 = vpack.c.b16 %v282, %v282
  %v299 = vpack.c.b16 %v283, %v283
  %v300 = vpack.c.b16 %v284, %v284
  %v301 = vpack.c.b16 %v285, %v285
  %v302 = vpack.c.b16 %v286, %v286
  %v303 = vpack.c.b16 %v287, %v287
  %v304 = vpack.c.b16 %v288, %v288
  %v305 = vpack.c.b16 %v289, %v289
  %v306 = vpack.c.b16 %v290, %v290
  %v307 = vpack.c.b16 %v291, %v291
  %v308 = vpack.c.b16 %v292, %v292
  %v309 = vpack.c.b16 %v293, %v293
  %v310 = vpack.c.b16 %v294, %v294
  %327 = vst [vmem:[%s3] sm:$0xf] %v295
  %328 = vst [vmem:[%s3 + $0x4] sm:$0xf] %v296
  %329 = vst [vmem:[%s3 + $0x8] sm:$0xf] %v297
  %330 = vst [vmem:[%s3 + $0xc] sm:$0xf] %v298
  %331 = vst [vmem:[%s3 + $0x10] sm:$0xf] %v299
  %332 = vst [vmem:[%s3 + $0x14] sm:$0xf] %v300
  %333 = vst [vmem:[%s3 + $0x18] sm:$0xf] %v301
  %334 = vst [vmem:[%s3 + $0x1c] sm:$0xf] %v302
  %335 = vst [vmem:[%s3 + $0x20] sm:$0xf] %v303
  %336 = vst [vmem:[%s3 + $0x24] sm:$0xf] %v304
  %337 = vst [vmem:[%s3 + $0x28] sm:$0xf] %v305
  %338 = vst [vmem:[%s3 + $0x2c] sm:$0xf] %v306
  %339 = vst [vmem:[%s3 + $0x30] sm:$0xf] %v307
  %340 = vst [vmem:[%s3 + $0x34] sm:$0xf] %v308
  %341 = vst [vmem:[%s3 + $0x38] sm:$0xf] %v309
  %342 = vst [vmem:[%s3 + $0x3c] sm:$0xf] %v310
  // Predicated region
  $region14: #{forward.32} parent=0 // pred_check
    _
  $region15: #{forward.32} parent=0 // pred_check_branch
    %344 = sbr.rel (0) target = $region17
  $region16: #{forward.32} parent=0 // pred_region
    _
  $region17: #{forward.32} parent=0 // pred_fallthru
    _
  // Predicated region
  $region18: #{forward.32} parent=0 // pred_check
    _
  $region19: #{forward.32} parent=0 // pred_check_branch
    %346 = sbr.rel (0) target = $region21
  $region20: #{forward.32} parent=0 // pred_region
    _
  $region21: #{forward.32} parent=0 // pred_fallthru
    _

// kernel: forward.33
$region0: #{forward.33}
  #allocation0 [shape = 'u32[]', space=smem, size = 0x4, offset = 0x4, fixed_abs, tag = 'smem constant byte address 0x4 - core index']
  #allocation1 [shape = 'u32[144,128]{1,0:T(1,128)}', space=vmem, size = 0x12000, scoped, tag = 'internal scratch']
  %s0 = inlined_call_operand.vmem [shape: bf16[32,384], index: 0, kind: input, shape index: {}]
  %s1 = inlined_call_operand.vmem [shape: bf16[384,128], index: 1, kind: input, shape index: {}]
  %s2 = inlined_call_operand.vmem [shape: f32[1,128], index: 2, kind: input, shape index: {}]
  %s3 = inlined_call_operand.vmem [shape: bf16[32,128], index: 3, kind: output, shape index: {}]
  %s4 = sld [smem:[#allocation0]]
  $region22: #{forward.33} parent=0
    _
  %s6 = ssub.s32 1, %s4
  %s7 = scalar_select 0, %s6, %s4
  // Predicated region
  $region2: #{forward.33} parent=0 // pred_check
    _
  $region3: #{forward.33} parent=0 // pred_check_branch
    %9 = sbr.rel (0) target = $region5
  $region4: #{forward.33} parent=0 // pred_region
    _
  $region5: #{forward.33} parent=0 // pred_fallthru
    _
  // Predicated region
  $region6: #{forward.33} parent=0 // pred_check
    _
  $region7: #{forward.33} parent=0 // pred_check_branch
    %11 = sbr.rel (0) target = $region9
  $region8: #{forward.33} parent=0 // pred_region
    _
  $region9: #{forward.33} parent=0 // pred_fallthru
    _
  // Predicated region
  $region10: #{forward.33} parent=0 // pred_check
    _
  $region11: #{forward.33} parent=0 // pred_check_branch
    %13 = sbr.rel (0) target = $region13
  $region12: #{forward.33} parent=0 // pred_region
    _
  $region13: #{forward.33} parent=0 // pred_fallthru
    _
  %v15 = vld [vmem:[%s0] sm:$0xff]
  %v16 = vld [vmem:[%s0 + $0x8] sm:$0xf]
  %v17 = vld [vmem:[%s0 + $0xc] sm:$0xff]
  %v18 = vld [vmem:[%s0 + $0x14] sm:$0xf]
  %v19 = vld [vmem:[%s0 + $0x18] sm:$0xff]
  %v20 = vld [vmem:[%s0 + $0x20] sm:$0xf]
  %v21 = vld [vmem:[%s0 + $0x24] sm:$0xff]
  %v22 = vld [vmem:[%s0 + $0x2c] sm:$0xf]
  %v23 = vld [vmem:[%s1] sm:$0xf]
  %v24 = vld [vmem:[%s1 + $0x4] sm:$0xf]
  %v25 = vld [vmem:[%s1 + $0x8] sm:$0xf]
  %v26 = vld [vmem:[%s1 + $0xc] sm:$0xf]
  %v27 = vld [vmem:[%s1 + $0x10] sm:$0xf]
  %v28 = vld [vmem:[%s1 + $0x14] sm:$0xf]
  %v29 = vld [vmem:[%s1 + $0x18] sm:$0xf]
  %v30 = vld [vmem:[%s1 + $0x1c] sm:$0xf]
  %v31 = vld [vmem:[%s1 + $0x20] sm:$0xf]
  %v32 = vld [vmem:[%s1 + $0x24] sm:$0xf]
  %v33 = vld [vmem:[%s1 + $0x28] sm:$0xf]
  %v34 = vld [vmem:[%s1 + $0x2c] sm:$0xf]
  %v35 = vld [vmem:[%s1 + $0x30] sm:$0xf]
  %v36 = vld [vmem:[%s1 + $0x34] sm:$0xf]
  %v37 = vld [vmem:[%s1 + $0x38] sm:$0xf]
  %v38 = vld [vmem:[%s1 + $0x3c] sm:$0xf]
  %v39 = vld [vmem:[%s1 + $0x40] sm:$0xf]
  %v40 = vld [vmem:[%s1 + $0x44] sm:$0xf]
  %v41 = vld [vmem:[%s1 + $0x48] sm:$0xf]
  %v42 = vld [vmem:[%s1 + $0x4c] sm:$0xf]
  %v43 = vld [vmem:[%s1 + $0x50] sm:$0xf]
  %v44 = vld [vmem:[%s1 + $0x54] sm:$0xf]
  %v45 = vld [vmem:[%s1 + $0x58] sm:$0xf]
  %v46 = vld [vmem:[%s1 + $0x5c] sm:$0xf]
  %v47 = vld [vmem:[%s1 + $0x60] sm:$0xf]
  %v48 = vld [vmem:[%s1 + $0x64] sm:$0xf]
  %v49 = vld [vmem:[%s1 + $0x68] sm:$0xf]
  %v50 = vld [vmem:[%s1 + $0x6c] sm:$0xf]
  %v51 = vld [vmem:[%s1 + $0x70] sm:$0xf]
  %v52 = vld [vmem:[%s1 + $0x74] sm:$0xf]
  %v53 = vld [vmem:[%s1 + $0x78] sm:$0xf]
  %v54 = vld [vmem:[%s1 + $0x7c] sm:$0xf]
  %v55 = vld [vmem:[%s1 + $0x80] sm:$0xf]
  %v56 = vld [vmem:[%s1 + $0x84] sm:$0xf]
  %v57 = vld [vmem:[%s1 + $0x88] sm:$0xf]
  %v58 = vld [vmem:[%s1 + $0x8c] sm:$0xf]
  %v59 = vld [vmem:[%s1 + $0x90] sm:$0xf]
  %v60 = vld [vmem:[%s1 + $0x94] sm:$0xf]
  %v61 = vld [vmem:[%s1 + $0x98] sm:$0xf]
  %v62 = vld [vmem:[%s1 + $0x9c] sm:$0xf]
  %v63 = vld [vmem:[%s1 + $0xa0] sm:$0xf]
  %v64 = vld [vmem:[%s1 + $0xa4] sm:$0xf]
  %v65 = vld [vmem:[%s1 + $0xa8] sm:$0xf]
  %v66 = vld [vmem:[%s1 + $0xac] sm:$0xf]
  %v67 = vld [vmem:[%s1 + $0xb0] sm:$0xf]
  %v68 = vld [vmem:[%s1 + $0xb4] sm:$0xf]
  %v69 = vld [vmem:[%s1 + $0xb8] sm:$0xf]
  %v70 = vld [vmem:[%s1 + $0xbc] sm:$0xf]
  %v71 = vld [vmem:[%s2] sm:$0x1]
  %v73 = vlaneseq
  %v74 = vshrl.u32 %v73, 7
  %v75 = vsub.s32 0, %v74
  %v76 = vrot.slane %v71, %v75
  %v86 = vunpack.c.l.b16 %v15
  %v87 = vunpack.c.h.b16 %v15
  %v88 = vunpack.c.l.b16 %v16
  %v89 = vunpack.c.l.b16 %v17
  %v90 = vunpack.c.h.b16 %v17
  %v91 = vunpack.c.l.b16 %v18
  %v92 = vunpack.c.l.b16 %v19
  %v93 = vunpack.c.h.b16 %v19
  %v94 = vunpack.c.l.b16 %v20
  %v95 = vunpack.c.l.b16 %v21
  %v96 = vunpack.c.h.b16 %v21
  %v97 = vunpack.c.l.b16 %v22
  %v98 = vpack.c.b16 %v89, %v86
  %v99 = vpack.c.b16 %v90, %v87
  %v100 = vpack.c.b16 %v91, %v88
  %v101 = vpack.c.b16 %v95, %v92
  %v102 = vpack.c.b16 %v96, %v93
  %v103 = vpack.c.b16 %v97, %v94
  %v158 = vunpack.c.l.b16 %v23
  %v159 = vunpack.c.l.b16 %v24
  %v160 = vunpack.c.l.b16 %v25
  %v161 = vunpack.c.l.b16 %v26
  %v162 = vunpack.c.l.b16 %v27
  %v163 = vunpack.c.l.b16 %v28
  %v164 = vunpack.c.l.b16 %v29
  %v165 = vunpack.c.l.b16 %v30
  %v166 = vunpack.c.l.b16 %v31
  %v167 = vunpack.c.l.b16 %v32
  %v168 = vunpack.c.l.b16 %v33
  %v169 = vunpack.c.l.b16 %v34
  %v170 = vunpack.c.l.b16 %v35
  %v171 = vunpack.c.l.b16 %v36
  %v172 = vunpack.c.l.b16 %v37
  %v173 = vunpack.c.l.b16 %v38
  %v174 = vunpack.c.l.b16 %v39
  %v175 = vunpack.c.l.b16 %v40
  %v176 = vunpack.c.l.b16 %v41
  %v177 = vunpack.c.l.b16 %v42
  %v178 = vunpack.c.l.b16 %v43
  %v179 = vunpack.c.l.b16 %v44
  %v180 = vunpack.c.l.b16 %v45
  %v181 = vunpack.c.l.b16 %v46
  %v182 = vunpack.c.l.b16 %v47
  %v183 = vunpack.c.l.b16 %v48
  %v184 = vunpack.c.l.b16 %v49
  %v185 = vunpack.c.l.b16 %v50
  %v186 = vunpack.c.l.b16 %v51
  %v187 = vunpack.c.l.b16 %v52
  %v188 = vunpack.c.l.b16 %v53
  %v189 = vunpack.c.l.b16 %v54
  %v190 = vunpack.c.l.b16 %v55
  %v191 = vunpack.c.l.b16 %v56
  %v192 = vunpack.c.l.b16 %v57
  %v193 = vunpack.c.l.b16 %v58
  %v194 = vunpack.c.l.b16 %v59
  %v195 = vunpack.c.l.b16 %v60
  %v196 = vunpack.c.l.b16 %v61
  %v197 = vunpack.c.l.b16 %v62
  %v198 = vunpack.c.l.b16 %v63
  %v199 = vunpack.c.l.b16 %v64
  %v200 = vunpack.c.l.b16 %v65
  %v201 = vunpack.c.l.b16 %v66
  %v202 = vunpack.c.l.b16 %v67
  %v203 = vunpack.c.l.b16 %v68
  %v204 = vunpack.c.l.b16 %v69
  %v205 = vunpack.c.l.b16 %v70
  %v206 = vpack.c.b16 %v159, %v158
  %v207 = vpack.c.b16 %v161, %v160
  %v208 = vpack.c.b16 %v163, %v162
  %v209 = vpack.c.b16 %v165, %v164
  %v210 = vpack.c.b16 %v167, %v166
  %v211 = vpack.c.b16 %v169, %v168
  %v212 = vpack.c.b16 %v171, %v170
  %v213 = vpack.c.b16 %v173, %v172
  %v214 = vpack.c.b16 %v175, %v174
  %v215 = vpack.c.b16 %v177, %v176
  %v216 = vpack.c.b16 %v179, %v178
  %v217 = vpack.c.b16 %v181, %v180
  %v218 = vpack.c.b16 %v183, %v182
  %v219 = vpack.c.b16 %v185, %v184
  %v220 = vpack.c.b16 %v187, %v186
  %v221 = vpack.c.b16 %v189, %v188
  %v222 = vpack.c.b16 %v191, %v190
  %v223 = vpack.c.b16 %v193, %v192
  %v224 = vpack.c.b16 %v195, %v194
  %v225 = vpack.c.b16 %v197, %v196
  %v226 = vpack.c.b16 %v199, %v198
  %v227 = vpack.c.b16 %v201, %v200
  %v228 = vpack.c.b16 %v203, %v202
  %v229 = vpack.c.b16 %v205, %v204
  %254 = vmatprep.subr.bf16.mxu0 0
  %255 = vmatpush1.bf16.msra.mxu0 %v206
  %256 = vmatprep.subr.bf16.mxu0 0
  %257 = vmatpush1.bf16.msra.mxu0 %v207
  %258 = vmatprep.subr.bf16.mxu0 0
  %259 = vmatpush1.bf16.msra.mxu0 %v208
  %260 = vmatprep.subr.bf16.mxu0 0
  %261 = vmatpush1.bf16.msra.mxu0 %v209
  %262 = vmatprep.subr.bf16.mxu0 0
  %263 = vmatpush1.bf16.msra.mxu0 %v210
  %264 = vmatprep.subr.bf16.mxu0 0
  %265 = vmatpush1.bf16.msra.mxu0 %v211
  %266 = vmatprep.subr.bf16.mxu0 0
  %267 = vmatpush1.bf16.msra.mxu0 %v212
  %268 = vmatprep.subr.bf16.mxu0 0
  %269 = vmatpush1.bf16.msra.mxu0 %v213
  %270 = vmatprep.subr.bf16.mxu0 0
  %271 = vmatpush1.bf16.msra.mxu0 %v214
  %272 = vmatprep.subr.bf16.mxu0 0
  %273 = vmatpush1.bf16.msra.mxu0 %v215
  %274 = vmatprep.subr.bf16.mxu0 0
  %275 = vmatpush1.bf16.msra.mxu0 %v216
  %276 = vmatprep.subr.bf16.mxu0 0
  %277 = vmatpush1.bf16.msra.mxu0 %v217
  %278 = vmatprep.subr.bf16.mxu0 0
  %279 = vmatpush1.bf16.msra.mxu0 %v218
  %280 = vmatprep.subr.bf16.mxu0 0
  %281 = vmatpush1.bf16.msra.mxu0 %v219
  %282 = vmatprep.subr.bf16.mxu0 0
  %283 = vmatpush1.bf16.msra.mxu0 %v220
  %284 = vmatprep.subr.bf16.mxu0 0
  %285 = vmatpush1.bf16.msra.mxu0 %v221
  %286 = vmatprep.mubr.bf16.mxu0 %v99
  %287 = vmatmul.mubr.bf16.gmra.mrb[0].mxu0 %v98
  %v288 = vpop.f32.mrb[0].mxu0
  %v289 = vadd.f32 %v76, %v288
  %v290 = vpop.f32.mrb[0].mxu0
  %v291 = vpop.f32.mrb[0].mxu0
  %v292 = vadd.f32 %v76, %v291
  %v293 = vpop.f32.mrb[0].mxu0
  %294 = vmatprep.mubr.bf16.mxu0 %v102
  %295 = vmatmul.mubr.bf16.gmra.mrb[0].mxu0 %v101
  %v296 = vpop.f32.mrb[0].mxu0
  %v297 = vadd.f32 %v76, %v296
  %v298 = vpop.f32.mrb[0].mxu0
  %v299 = vpop.f32.mrb[0].mxu0
  %v300 = vadd.f32 %v76, %v299
  %v301 = vpop.f32.mrb[0].mxu0
  %302 = vdwg.mxu0
  %303 = vmatprep.subr.bf16.mxu0 0
  %304 = vmatpush1.bf16.msra.mxu0 %v222
  %305 = vmatprep.subr.bf16.mxu0 0
  %306 = vmatpush1.bf16.msra.mxu0 %v223
  %307 = vmatprep.subr.bf16.mxu0 0
  %308 = vmatpush1.bf16.msra.mxu0 %v224
  %309 = vmatprep.subr.bf16.mxu0 0
  %310 = vmatpush1.bf16.msra.mxu0 %v225
  %311 = vmatprep.subr.bf16.mxu0 0
  %312 = vmatpush1.bf16.msra.mxu0 %v226
  %313 = vmatprep.subr.bf16.mxu0 0
  %314 = vmatpush1.bf16.msra.mxu0 %v227
  %315 = vmatprep.subr.bf16.mxu0 0
  %316 = vmatpush1.bf16.msra.mxu0 %v228
  %317 = vmatprep.subr.bf16.mxu0 0
  %318 = vmatpush1.bf16.msra.mxu0 %v229
  %319 = vmatprep.subr.bf16.mxu0 0
  %320 = vmatpush1.bf16.msra.mxu0 0
  %321 = vmatprep.subr.bf16.mxu0 0
  %322 = vmatpush1.bf16.msra.mxu0 0
  %323 = vmatprep.subr.bf16.mxu0 0
  %324 = vmatpush1.bf16.msra.mxu0 0
  %325 = vmatprep.subr.bf16.mxu0 0
  %326 = vmatpush1.bf16.msra.mxu0 0
  %327 = vmatprep.subr.bf16.mxu0 0
  %328 = vmatpush1.bf16.msra.mxu0 0
  %329 = vmatprep.subr.bf16.mxu0 0
  %330 = vmatpush1.bf16.msra.mxu0 0
  %331 = vmatprep.subr.bf16.mxu0 0
  %332 = vmatpush1.bf16.msra.mxu0 0
  %333 = vmatprep.subr.bf16.mxu0 0
  %334 = vmatpush1.bf16.msra.mxu0 0
  %335 = vmatprep.mubr.bf16.mxu0 0
  %336 = vmatmul.mubr.bf16.gmra.mrb[0].mxu0 %v100
  %v337 = vpop.f32.mrb[0].mxu0
  %v338 = vadd.f32 %v289, %v337
  %v339 = vpop.f32.mrb[0].mxu0
  %v340 = vpop.f32.mrb[0].mxu0
  %v341 = vadd.f32 %v292, %v340
  %v342 = vpop.f32.mrb[0].mxu0
  %343 = vmatprep.mubr.bf16.mxu0 0
  %344 = vmatmul.mubr.bf16.gmra.mrb[0].mxu0 %v103
  %v345 = vpop.f32.mrb[0].mxu0
  %v346 = vadd.f32 %v297, %v345
  %v347 = vpop.f32.mrb[0].mxu0
  %v348 = vpop.f32.mrb[0].mxu0
  %v349 = vadd.f32 %v300, %v348
  %v350 = vpop.f32.mrb[0].mxu0
  %351 = vdwg.mxu0
  %v352 = vmax.f32 %v338, 0.0
  %v353 = vmax.f32 %v341, 0.0
  %v354 = vmax.f32 %v346, 0.0
  %v355 = vmax.f32 %v349, 0.0
  %v356 = vpack.c.bf16 %v353, %v352
  %v357 = vpack.c.bf16 %v355, %v354
  %v360 = vunpack.c.l.b16 %v356
  %v361 = vunpack.c.h.b16 %v356
  %v362 = vunpack.c.l.b16 %v357
  %v363 = vunpack.c.h.b16 %v357
  %v364 = vpack.c.b16 %v360, %v360
  %v365 = vpack.c.b16 %v361, %v361
  %v366 = vpack.c.b16 %v362, %v362
  %v367 = vpack.c.b16 %v363, %v363
  %372 = vst [vmem:[%s3] sm:$0xf] %v364
  %373 = vst [vmem:[%s3 + $0x4] sm:$0xf] %v365
  %374 = vst [vmem:[%s3 + $0x8] sm:$0xf] %v366
  %375 = vst [vmem:[%s3 + $0xc] sm:$0xf] %v367
  // Predicated region
  $region14: #{forward.33} parent=0 // pred_check
    _
  $region15: #{forward.33} parent=0 // pred_check_branch
    %377 = sbr.rel (0) target = $region17
  $region16: #{forward.33} parent=0 // pred_region
    _
  $region17: #{forward.33} parent=0 // pred_fallthru
    _
  // Predicated region
  $region18: #{forward.33} parent=0 // pred_check
    _
  $region19: #{forward.33} parent=0 // pred_check_branch
    %379 = sbr.rel (0) target = $region21
  $region20: #{forward.33} parent=0 // pred_region
    _
  $region21: #{forward.33} parent=0 // pred_fallthru
    _

// kernel: forward.34
$region0: #{forward.34}
  #allocation0 [shape = 'u32[]', space=smem, size = 0x4, offset = 0x4, fixed_abs, tag = 'smem constant byte address 0x4 - core index']
  #allocation1 [shape = 'u32[144,128]{1,0:T(1,128)}', space=vmem, size = 0x12000, scoped, tag = 'internal scratch']
  %s0 = inlined_call_operand.vmem [shape: bf16[32,640], index: 0, kind: input, shape index: {}]
  %s1 = inlined_call_operand.vmem [shape: bf16[640,128], index: 1, kind: input, shape index: {}]
  %s2 = inlined_call_operand.vmem [shape: f32[1,128], index: 2, kind: input, shape index: {}]
  %s3 = inlined_call_operand.vmem [shape: bf16[32,128], index: 3, kind: output, shape index: {}]
  %s4 = sld [smem:[#allocation0]]
  $region22: #{forward.34} parent=0
    _
  %s6 = ssub.s32 1, %s4
  %s7 = scalar_select 0, %s6, %s4
  // Predicated region
  $region2: #{forward.34} parent=0 // pred_check
    _
  $region3: #{forward.34} parent=0 // pred_check_branch
    %9 = sbr.rel (0) target = $region5
  $region4: #{forward.34} parent=0 // pred_region
    _
  $region5: #{forward.34} parent=0 // pred_fallthru
    _
  // Predicated region
  $region6: #{forward.34} parent=0 // pred_check
    _
  $region7: #{forward.34} parent=0 // pred_check_branch
    %11 = sbr.rel (0) target = $region9
  $region8: #{forward.34} parent=0 // pred_region
    _
  $region9: #{forward.34} parent=0 // pred_fallthru
    _
  // Predicated region
  $region10: #{forward.34} parent=0 // pred_check
    _
  $region11: #{forward.34} parent=0 // pred_check_branch
    %13 = sbr.rel (0) target = $region13
  $region12: #{forward.34} parent=0 // pred_region
    _
  $region13: #{forward.34} parent=0 // pred_fallthru
    _
  %v15 = vld [vmem:[%s0] sm:$0xff]
  %v16 = vld [vmem:[%s0 + $0x8] sm:$0xff]
  %v17 = vld [vmem:[%s0 + $0x10] sm:$0xf]
  %v18 = vld [vmem:[%s0 + $0x14] sm:$0xff]
  %v19 = vld [vmem:[%s0 + $0x1c] sm:$0xff]
  %v20 = vld [vmem:[%s0 + $0x24] sm:$0xf]
  %v21 = vld [vmem:[%s0 + $0x28] sm:$0xff]
  %v22 = vld [vmem:[%s0 + $0x30] sm:$0xff]
  %v23 = vld [vmem:[%s0 + $0x38] sm:$0xf]
  %v24 = vld [vmem:[%s0 + $0x3c] sm:$0xff]
  %v25 = vld [vmem:[%s0 + $0x44] sm:$0xff]
  %v26 = vld [vmem:[%s0 + $0x4c] sm:$0xf]
  %v27 = vld [vmem:[%s1] sm:$0xf]
  %v28 = vld [vmem:[%s1 + $0x4] sm:$0xf]
  %v29 = vld [vmem:[%s1 + $0x8] sm:$0xf]
  %v30 = vld [vmem:[%s1 + $0xc] sm:$0xf]
  %v31 = vld [vmem:[%s1 + $0x10] sm:$0xf]
  %v32 = vld [vmem:[%s1 + $0x14] sm:$0xf]
  %v33 = vld [vmem:[%s1 + $0x18] sm:$0xf]
  %v34 = vld [vmem:[%s1 + $0x1c] sm:$0xf]
  %v35 = vld [vmem:[%s1 + $0x20] sm:$0xf]
  %v36 = vld [vmem:[%s1 + $0x24] sm:$0xf]
  %v37 = vld [vmem:[%s1 + $0x28] sm:$0xf]
  %v38 = vld [vmem:[%s1 + $0x2c] sm:$0xf]
  %v39 = vld [vmem:[%s1 + $0x30] sm:$0xf]
  %v40 = vld [vmem:[%s1 + $0x34] sm:$0xf]
  %v41 = vld [vmem:[%s1 + $0x38] sm:$0xf]
  %v42 = vld [vmem:[%s1 + $0x3c] sm:$0xf]
  %v43 = vld [vmem:[%s1 + $0x40] sm:$0xf]
  %v44 = vld [vmem:[%s1 + $0x44] sm:$0xf]
  %v45 = vld [vmem:[%s1 + $0x48] sm:$0xf]
  %v46 = vld [vmem:[%s1 + $0x4c] sm:$0xf]
  %v47 = vld [vmem:[%s1 + $0x50] sm:$0xf]
  %v48 = vld [vmem:[%s1 + $0x54] sm:$0xf]
  %v49 = vld [vmem:[%s1 + $0x58] sm:$0xf]
  %v50 = vld [vmem:[%s1 + $0x5c] sm:$0xf]
  %v51 = vld [vmem:[%s1 + $0x60] sm:$0xf]
  %v52 = vld [vmem:[%s1 + $0x64] sm:$0xf]
  %v53 = vld [vmem:[%s1 + $0x68] sm:$0xf]
  %v54 = vld [vmem:[%s1 + $0x6c] sm:$0xf]
  %v55 = vld [vmem:[%s1 + $0x70] sm:$0xf]
  %v56 = vld [vmem:[%s1 + $0x74] sm:$0xf]
  %v57 = vld [vmem:[%s1 + $0x78] sm:$0xf]
  %v58 = vld [vmem:[%s1 + $0x7c] sm:$0xf]
  %v59 = vld [vmem:[%s1 + $0x80] sm:$0xf]
  %v60 = vld [vmem:[%s1 + $0x84] sm:$0xf]
  %v61 = vld [vmem:[%s1 + $0x88] sm:$0xf]
  %v62 = vld [vmem:[%s1 + $0x8c] sm:$0xf]
  %v63 = vld [vmem:[%s1 + $0x90] sm:$0xf]
  %v64 = vld [vmem:[%s1 + $0x94] sm:$0xf]
  %v65 = vld [vmem:[%s1 + $0x98] sm:$0xf]
  %v66 = vld [vmem:[%s1 + $0x9c] sm:$0xf]
  %v67 = vld [vmem:[%s1 + $0xa0] sm:$0xf]
  %v68 = vld [vmem:[%s1 + $0xa4] sm:$0xf]
  %v69 = vld [vmem:[%s1 + $0xa8] sm:$0xf]
  %v70 = vld [vmem:[%s1 + $0xac] sm:$0xf]
  %v71 = vld [vmem:[%s1 + $0xb0] sm:$0xf]
  %v72 = vld [vmem:[%s1 + $0xb4] sm:$0xf]
  %v73 = vld [vmem:[%s1 + $0xb8] sm:$0xf]
  %v74 = vld [vmem:[%s1 + $0xbc] sm:$0xf]
  %v75 = vld [vmem:[%s1 + $0xc0] sm:$0xf]
  %v76 = vld [vmem:[%s1 + $0xc4] sm:$0xf]
  %v77 = vld [vmem:[%s1 + $0xc8] sm:$0xf]
  %v78 = vld [vmem:[%s1 + $0xcc] sm:$0xf]
  %v79 = vld [vmem:[%s1 + $0xd0] sm:$0xf]
  %v80 = vld [vmem:[%s1 + $0xd4] sm:$0xf]
  %v81 = vld [vmem:[%s1 + $0xd8] sm:$0xf]
  %v82 = vld [vmem:[%s1 + $0xdc] sm:$0xf]
  %v83 = vld [vmem:[%s1 + $0xe0] sm:$0xf]
  %v84 = vld [vmem:[%s1 + $0xe4] sm:$0xf]
  %v85 = vld [vmem:[%s1 + $0xe8] sm:$0xf]
  %v86 = vld [vmem:[%s1 + $0xec] sm:$0xf]
  %v87 = vld [vmem:[%s1 + $0xf0] sm:$0xf]
  %v88 = vld [vmem:[%s1 + $0xf4] sm:$0xf]
  %v89 = vld [vmem:[%s1 + $0xf8] sm:$0xf]
  %v90 = vld [vmem:[%s1 + $0xfc] sm:$0xf]
  %v91 = vld [vmem:[%s1 + $0x100] sm:$0xf]
  %v92 = vld [vmem:[%s1 + $0x104] sm:$0xf]
  %v93 = vld [vmem:[%s1 + $0x108] sm:$0xf]
  %v94 = vld [vmem:[%s1 + $0x10c] sm:$0xf]
  %v95 = vld [vmem:[%s1 + $0x110] sm:$0xf]
  %v96 = vld [vmem:[%s1 + $0x114] sm:$0xf]
  %v97 = vld [vmem:[%s1 + $0x118] sm:$0xf]
  %v98 = vld [vmem:[%s1 + $0x11c] sm:$0xf]
  %v99 = vld [vmem:[%s1 + $0x120] sm:$0xf]
  %v100 = vld [vmem:[%s1 + $0x124] sm:$0xf]
  %v101 = vld [vmem:[%s1 + $0x128] sm:$0xf]
  %v102 = vld [vmem:[%s1 + $0x12c] sm:$0xf]
  %v103 = vld [vmem:[%s1 + $0x130] sm:$0xf]
  %v104 = vld [vmem:[%s1 + $0x134] sm:$0xf]
  %v105 = vld [vmem:[%s1 + $0x138] sm:$0xf]
  %v106 = vld [vmem:[%s1 + $0x13c] sm:$0xf]
  %v107 = vld [vmem:[%s2] sm:$0x1]
  %v109 = vlaneseq
  %v110 = vshrl.u32 %v109, 7
  %v111 = vsub.s32 0, %v110
  %v112 = vrot.slane %v107, %v111
  %v126 = vunpack.c.l.b16 %v15
  %v127 = vunpack.c.h.b16 %v15
  %v128 = vunpack.c.l.b16 %v16
  %v129 = vunpack.c.h.b16 %v16
  %v130 = vunpack.c.l.b16 %v17
  %v131 = vunpack.c.l.b16 %v18
  %v132 = vunpack.c.h.b16 %v18
  %v133 = vunpack.c.l.b16 %v19
  %v134 = vunpack.c.h.b16 %v19
  %v135 = vunpack.c.l.b16 %v20
  %v136 = vunpack.c.l.b16 %v21
  %v137 = vunpack.c.h.b16 %v21
  %v138 = vunpack.c.l.b16 %v22
  %v139 = vunpack.c.h.b16 %v22
  %v140 = vunpack.c.l.b16 %v23
  %v141 = vunpack.c.l.b16 %v24
  %v142 = vunpack.c.h.b16 %v24
  %v143 = vunpack.c.l.b16 %v25
  %v144 = vunpack.c.h.b16 %v25
  %v145 = vunpack.c.l.b16 %v26
  %v146 = vpack.c.b16 %v131, %v126
  %v147 = vpack.c.b16 %v132, %v127
  %v148 = vpack.c.b16 %v133, %v128
  %v149 = vpack.c.b16 %v134, %v129
  %v150 = vpack.c.b16 %v135, %v130
  %v151 = vpack.c.b16 %v141, %v136
  %v152 = vpack.c.b16 %v142, %v137
  %v153 = vpack.c.b16 %v143, %v138
  %v154 = vpack.c.b16 %v144, %v139
  %v155 = vpack.c.b16 %v145, %v140
  %v246 = vunpack.c.l.b16 %v27
  %v247 = vunpack.c.l.b16 %v28
  %v248 = vunpack.c.l.b16 %v29
  %v249 = vunpack.c.l.b16 %v30
  %v250 = vunpack.c.l.b16 %v31
  %v251 = vunpack.c.l.b16 %v32
  %v252 = vunpack.c.l.b16 %v33
  %v253 = vunpack.c.l.b16 %v34
  %v254 = vunpack.c.l.b16 %v35
  %v255 = vunpack.c.l.b16 %v36
  %v256 = vunpack.c.l.b16 %v37
  %v257 = vunpack.c.l.b16 %v38
  %v258 = vunpack.c.l.b16 %v39
  %v259 = vunpack.c.l.b16 %v40
  %v260 = vunpack.c.l.b16 %v41
  %v261 = vunpack.c.l.b16 %v42
  %v262 = vunpack.c.l.b16 %v43
  %v263 = vunpack.c.l.b16 %v44
  %v264 = vunpack.c.l.b16 %v45
  %v265 = vunpack.c.l.b16 %v46
  %v266 = vunpack.c.l.b16 %v47
  %v267 = vunpack.c.l.b16 %v48
  %v268 = vunpack.c.l.b16 %v49
  %v269 = vunpack.c.l.b16 %v50
  %v270 = vunpack.c.l.b16 %v51
  %v271 = vunpack.c.l.b16 %v52
  %v272 = vunpack.c.l.b16 %v53
  %v273 = vunpack.c.l.b16 %v54
  %v274 = vunpack.c.l.b16 %v55
  %v275 = vunpack.c.l.b16 %v56
  %v276 = vunpack.c.l.b16 %v57
  %v277 = vunpack.c.l.b16 %v58
  %v278 = vunpack.c.l.b16 %v59
  %v279 = vunpack.c.l.b16 %v60
  %v280 = vunpack.c.l.b16 %v61
  %v281 = vunpack.c.l.b16 %v62
  %v282 = vunpack.c.l.b16 %v63
  %v283 = vunpack.c.l.b16 %v64
  %v284 = vunpack.c.l.b16 %v65
  %v285 = vunpack.c.l.b16 %v66
  %v286 = vunpack.c.l.b16 %v67
  %v287 = vunpack.c.l.b16 %v68
  %v288 = vunpack.c.l.b16 %v69
  %v289 = vunpack.c.l.b16 %v70
  %v290 = vunpack.c.l.b16 %v71
  %v291 = vunpack.c.l.b16 %v72
  %v292 = vunpack.c.l.b16 %v73
  %v293 = vunpack.c.l.b16 %v74
  %v294 = vunpack.c.l.b16 %v75
  %v295 = vunpack.c.l.b16 %v76
  %v296 = vunpack.c.l.b16 %v77
  %v297 = vunpack.c.l.b16 %v78
  %v298 = vunpack.c.l.b16 %v79
  %v299 = vunpack.c.l.b16 %v80
  %v300 = vunpack.c.l.b16 %v81
  %v301 = vunpack.c.l.b16 %v82
  %v302 = vunpack.c.l.b16 %v83
  %v303 = vunpack.c.l.b16 %v84
  %v304 = vunpack.c.l.b16 %v85
  %v305 = vunpack.c.l.b16 %v86
  %v306 = vunpack.c.l.b16 %v87
  %v307 = vunpack.c.l.b16 %v88
  %v308 = vunpack.c.l.b16 %v89
  %v309 = vunpack.c.l.b16 %v90
  %v310 = vunpack.c.l.b16 %v91
  %v311 = vunpack.c.l.b16 %v92
  %v312 = vunpack.c.l.b16 %v93
  %v313 = vunpack.c.l.b16 %v94
  %v314 = vunpack.c.l.b16 %v95
  %v315 = vunpack.c.l.b16 %v96
  %v316 = vunpack.c.l.b16 %v97
  %v317 = vunpack.c.l.b16 %v98
  %v318 = vunpack.c.l.b16 %v99
  %v319 = vunpack.c.l.b16 %v100
  %v320 = vunpack.c.l.b16 %v101
  %v321 = vunpack.c.l.b16 %v102
  %v322 = vunpack.c.l.b16 %v103
  %v323 = vunpack.c.l.b16 %v104
  %v324 = vunpack.c.l.b16 %v105
  %v325 = vunpack.c.l.b16 %v106
  %v326 = vpack.c.b16 %v247, %v246
  %v327 = vpack.c.b16 %v249, %v248
  %v328 = vpack.c.b16 %v251, %v250
  %v329 = vpack.c.b16 %v253, %v252
  %v330 = vpack.c.b16 %v255, %v254
  %v331 = vpack.c.b16 %v257, %v256
  %v332 = vpack.c.b16 %v259, %v258
  %v333 = vpack.c.b16 %v261, %v260
  %v334 = vpack.c.b16 %v263, %v262
  %v335 = vpack.c.b16 %v265, %v264
  %v336 = vpack.c.b16 %v267, %v266
  %v337 = vpack.c.b16 %v269, %v268
  %v338 = vpack.c.b16 %v271, %v270
  %v339 = vpack.c.b16 %v273, %v272
  %v340 = vpack.c.b16 %v275, %v274
  %v341 = vpack.c.b16 %v277, %v276
  %v342 = vpack.c.b16 %v279, %v278
  %v343 = vpack.c.b16 %v281, %v280
  %v344 = vpack.c.b16 %v283, %v282
  %v345 = vpack.c.b16 %v285, %v284
  %v346 = vpack.c.b16 %v287, %v286
  %v347 = vpack.c.b16 %v289, %v288
  %v348 = vpack.c.b16 %v291, %v290
  %v349 = vpack.c.b16 %v293, %v292
  %v350 = vpack.c.b16 %v295, %v294
  %v351 = vpack.c.b16 %v297, %v296
  %v352 = vpack.c.b16 %v299, %v298
  %v353 = vpack.c.b16 %v301, %v300
  %v354 = vpack.c.b16 %v303, %v302
  %v355 = vpack.c.b16 %v305, %v304
  %v356 = vpack.c.b16 %v307, %v306
  %v357 = vpack.c.b16 %v309, %v308
  %v358 = vpack.c.b16 %v311, %v310
  %v359 = vpack.c.b16 %v313, %v312
  %v360 = vpack.c.b16 %v315, %v314
  %v361 = vpack.c.b16 %v317, %v316
  %v362 = vpack.c.b16 %v319, %v318
  %v363 = vpack.c.b16 %v321, %v320
  %v364 = vpack.c.b16 %v323, %v322
  %v365 = vpack.c.b16 %v325, %v324
  %406 = vmatprep.subr.bf16.mxu0 0
  %407 = vmatpush1.bf16.msra.mxu0 %v326
  %408 = vmatprep.subr.bf16.mxu0 0
  %409 = vmatpush1.bf16.msra.mxu0 %v327
  %410 = vmatprep.subr.bf16.mxu0 0
  %411 = vmatpush1.bf16.msra.mxu0 %v328
  %412 = vmatprep.subr.bf16.mxu0 0
  %413 = vmatpush1.bf16.msra.mxu0 %v329
  %414 = vmatprep.subr.bf16.mxu0 0
  %415 = vmatpush1.bf16.msra.mxu0 %v330
  %416 = vmatprep.subr.bf16.mxu0 0
  %417 = vmatpush1.bf16.msra.mxu0 %v331
  %418 = vmatprep.subr.bf16.mxu0 0
  %419 = vmatpush1.bf16.msra.mxu0 %v332
  %420 = vmatprep.subr.bf16.mxu0 0
  %421 = vmatpush1.bf16.msra.mxu0 %v333
  %422 = vmatprep.subr.bf16.mxu0 0
  %423 = vmatpush1.bf16.msra.mxu0 %v334
  %424 = vmatprep.subr.bf16.mxu0 0
  %425 = vmatpush1.bf16.msra.mxu0 %v335
  %426 = vmatprep.subr.bf16.mxu0 0
  %427 = vmatpush1.bf16.msra.mxu0 %v336
  %428 = vmatprep.subr.bf16.mxu0 0
  %429 = vmatpush1.bf16.msra.mxu0 %v337
  %430 = vmatprep.subr.bf16.mxu0 0
  %431 = vmatpush1.bf16.msra.mxu0 %v338
  %432 = vmatprep.subr.bf16.mxu0 0
  %433 = vmatpush1.bf16.msra.mxu0 %v339
  %434 = vmatprep.subr.bf16.mxu0 0
  %435 = vmatpush1.bf16.msra.mxu0 %v340
  %436 = vmatprep.subr.bf16.mxu0 0
  %437 = vmatpush1.bf16.msra.mxu0 %v341
  %438 = vmatprep.mubr.bf16.mxu0 %v147
  %439 = vmatmul.mubr.bf16.gmra.mrb[0].mxu0 %v146
  %v440 = vpop.f32.mrb[0].mxu0
  %v441 = vadd.f32 %v112, %v440
  %v442 = vpop.f32.mrb[0].mxu0
  %v443 = vpop.f32.mrb[0].mxu0
  %v444 = vadd.f32 %v112, %v443
  %v445 = vpop.f32.mrb[0].mxu0
  %446 = vmatprep.mubr.bf16.mxu0 %v152
  %447 = vmatmul.mubr.bf16.gmra.mrb[0].mxu0 %v151
  %v448 = vpop.f32.mrb[0].mxu0
  %v449 = vadd.f32 %v112, %v448
  %v450 = vpop.f32.mrb[0].mxu0
  %v451 = vpop.f32.mrb[0].mxu0
  %v452 = vadd.f32 %v112, %v451
  %v453 = vpop.f32.mrb[0].mxu0
  %454 = vdwg.mxu0
  %455 = vmatprep.subr.bf16.mxu0 0
  %456 = vmatpush1.bf16.msra.mxu0 %v342
  %457 = vmatprep.subr.bf16.mxu0 0
  %458 = vmatpush1.bf16.msra.mxu0 %v343
  %459 = vmatprep.subr.bf16.mxu0 0
  %460 = vmatpush1.bf16.msra.mxu0 %v344
  %461 = vmatprep.subr.bf16.mxu0 0
  %462 = vmatpush1.bf16.msra.mxu0 %v345
  %463 = vmatprep.subr.bf16.mxu0 0
  %464 = vmatpush1.bf16.msra.mxu0 %v346
  %465 = vmatprep.subr.bf16.mxu0 0
  %466 = vmatpush1.bf16.msra.mxu0 %v347
  %467 = vmatprep.subr.bf16.mxu0 0
  %468 = vmatpush1.bf16.msra.mxu0 %v348
  %469 = vmatprep.subr.bf16.mxu0 0
  %470 = vmatpush1.bf16.msra.mxu0 %v349
  %471 = vmatprep.subr.bf16.mxu0 0
  %472 = vmatpush1.bf16.msra.mxu0 %v350
  %473 = vmatprep.subr.bf16.mxu0 0
  %474 = vmatpush1.bf16.msra.mxu0 %v351
  %475 = vmatprep.subr.bf16.mxu0 0
  %476 = vmatpush1.bf16.msra.mxu0 %v352
  %477 = vmatprep.subr.bf16.mxu0 0
  %478 = vmatpush1.bf16.msra.mxu0 %v353
  %479 = vmatprep.subr.bf16.mxu0 0
  %480 = vmatpush1.bf16.msra.mxu0 %v354
  %481 = vmatprep.subr.bf16.mxu0 0
  %482 = vmatpush1.bf16.msra.mxu0 %v355
  %483 = vmatprep.subr.bf16.mxu0 0
  %484 = vmatpush1.bf16.msra.mxu0 %v356
  %485 = vmatprep.subr.bf16.mxu0 0
  %486 = vmatpush1.bf16.msra.mxu0 %v357
  %487 = vmatprep.mubr.bf16.mxu0 %v149
  %488 = vmatmul.mubr.bf16.gmra.mrb[0].mxu0 %v148
  %v489 = vpop.f32.mrb[0].mxu0
  %v490 = vadd.f32 %v441, %v489
  %v491 = vpop.f32.mrb[0].mxu0
  %v492 = vpop.f32.mrb[0].mxu0
  %v493 = vadd.f32 %v444, %v492
  %v494 = vpop.f32.mrb[0].mxu0
  %495 = vmatprep.mubr.bf16.mxu0 %v154
  %496 = vmatmul.mubr.bf16.gmra.mrb[0].mxu0 %v153
  %v497 = vpop.f32.mrb[0].mxu0
  %v498 = vadd.f32 %v449, %v497
  %v499 = vpop.f32.mrb[0].mxu0
  %v500 = vpop.f32.mrb[0].mxu0
  %v501 = vadd.f32 %v452, %v500
  %v502 = vpop.f32.mrb[0].mxu0
  %503 = vdwg.mxu0
  %504 = vmatprep.subr.bf16.mxu0 0
  %505 = vmatpush1.bf16.msra.mxu0 %v358
  %506 = vmatprep.subr.bf16.mxu0 0
  %507 = vmatpush1.bf16.msra.mxu0 %v359
  %508 = vmatprep.subr.bf16.mxu0 0
  %509 = vmatpush1.bf16.msra.mxu0 %v360
  %510 = vmatprep.subr.bf16.mxu0 0
  %511 = vmatpush1.bf16.msra.mxu0 %v361
  %512 = vmatprep.subr.bf16.mxu0 0
  %513 = vmatpush1.bf16.msra.mxu0 %v362
  %514 = vmatprep.subr.bf16.mxu0 0
  %515 = vmatpush1.bf16.msra.mxu0 %v363
  %516 = vmatprep.subr.bf16.mxu0 0
  %517 = vmatpush1.bf16.msra.mxu0 %v364
  %518 = vmatprep.subr.bf16.mxu0 0
  %519 = vmatpush1.bf16.msra.mxu0 %v365
  %520 = vmatprep.subr.bf16.mxu0 0
  %521 = vmatpush1.bf16.msra.mxu0 0
  %522 = vmatprep.subr.bf16.mxu0 0
  %523 = vmatpush1.bf16.msra.mxu0 0
  %524 = vmatprep.subr.bf16.mxu0 0
  %525 = vmatpush1.bf16.msra.mxu0 0
  %526 = vmatprep.subr.bf16.mxu0 0
  %527 = vmatpush1.bf16.msra.mxu0 0
  %528 = vmatprep.subr.bf16.mxu0 0
  %529 = vmatpush1.bf16.msra.mxu0 0
  %530 = vmatprep.subr.bf16.mxu0 0
  %531 = vmatpush1.bf16.msra.mxu0 0
  %532 = vmatprep.subr.bf16.mxu0 0
  %533 = vmatpush1.bf16.msra.mxu0 0
  %534 = vmatprep.subr.bf16.mxu0 0
  %535 = vmatpush1.bf16.msra.mxu0 0
  %536 = vmatprep.mubr.bf16.mxu0 0
  %537 = vmatmul.mubr.bf16.gmra.mrb[0].mxu0 %v150
  %v538 = vpop.f32.mrb[0].mxu0
  %v539 = vadd.f32 %v490, %v538
  %v540 = vpop.f32.mrb[0].mxu0
  %v541 = vpop.f32.mrb[0].mxu0
  %v542 = vadd.f32 %v493, %v541
  %v543 = vpop.f32.mrb[0].mxu0
  %544 = vmatprep.mubr.bf16.mxu0 0
  %545 = vmatmul.mubr.bf16.gmra.mrb[0].mxu0 %v155
  %v546 = vpop.f32.mrb[0].mxu0
  %v547 = vadd.f32 %v498, %v546
  %v548 = vpop.f32.mrb[0].mxu0
  %v549 = vpop.f32.mrb[0].mxu0
  %v550 = vadd.f32 %v501, %v549
  %v551 = vpop.f32.mrb[0].mxu0
  %552 = vdwg.mxu0
  %v553 = vmax.f32 %v539, 0.0
  %v554 = vmax.f32 %v542, 0.0
  %v555 = vmax.f32 %v547, 0.0
  %v556 = vmax.f32 %v550, 0.0
  %v557 = vpack.c.bf16 %v554, %v553
  %v558 = vpack.c.bf16 %v556, %v555
  %v561 = vunpack.c.l.b16 %v557
  %v562 = vunpack.c.h.b16 %v557
  %v563 = vunpack.c.l.b16 %v558
  %v564 = vunpack.c.h.b16 %v558
  %v565 = vpack.c.b16 %v561, %v561
  %v566 = vpack.c.b16 %v562, %v562
  %v567 = vpack.c.b16 %v563, %v563
  %v568 = vpack.c.b16 %v564, %v564
  %573 = vst [vmem:[%s3] sm:$0xf] %v565
  %574 = vst [vmem:[%s3 + $0x4] sm:$0xf] %v566
  %575 = vst [vmem:[%s3 + $0x8] sm:$0xf] %v567
  %576 = vst [vmem:[%s3 + $0xc] sm:$0xf] %v568
  // Predicated region
  $region14: #{forward.34} parent=0 // pred_check
    _
  $region15: #{forward.34} parent=0 // pred_check_branch
    %578 = sbr.rel (0) target = $region17
  $region16: #{forward.34} parent=0 // pred_region
    _
  $region17: #{forward.34} parent=0 // pred_fallthru
    _
  // Predicated region
  $region18: #{forward.34} parent=0 // pred_check
    _
  $region19: #{forward.34} parent=0 // pred_check_branch
    %580 = sbr.rel (0) target = $region21
  $region20: #{forward.34} parent=0 // pred_region
    _
  $region21: #{forward.34} parent=0 // pred_fallthru
    _

// kernel: forward.35
$region0: #{forward.35}
  #allocation0 [shape = 'u32[]', space=smem, size = 0x4, offset = 0x4, fixed_abs, tag = 'smem constant byte address 0x4 - core index']
  #allocation1 [shape = 'u32[144,128]{1,0:T(1,128)}', space=vmem, size = 0x12000, scoped, tag = 'internal scratch']
  %s0 = inlined_call_operand.vmem [shape: bf16[32,640], index: 0, kind: input, shape index: {}]
  %s1 = inlined_call_operand.vmem [shape: bf16[640,128], index: 1, kind: input, shape index: {}]
  %s2 = inlined_call_operand.vmem [shape: f32[1,128], index: 2, kind: input, shape index: {}]
  %s3 = inlined_call_operand.vmem [shape: bf16[32,128], index: 3, kind: output, shape index: {}]
  %s4 = sld [smem:[#allocation0]]
  $region22: #{forward.35} parent=0
    _
  %s6 = ssub.s32 1, %s4
  %s7 = scalar_select 0, %s6, %s4
  // Predicated region
  $region2: #{forward.35} parent=0 // pred_check
    _
  $region3: #{forward.35} parent=0 // pred_check_branch
    %9 = sbr.rel (0) target = $region5
  $region4: #{forward.35} parent=0 // pred_region
    _
  $region5: #{forward.35} parent=0 // pred_fallthru
    _
  // Predicated region
  $region6: #{forward.35} parent=0 // pred_check
    _
  $region7: #{forward.35} parent=0 // pred_check_branch
    %11 = sbr.rel (0) target = $region9
  $region8: #{forward.35} parent=0 // pred_region
    _
  $region9: #{forward.35} parent=0 // pred_fallthru
    _
  // Predicated region
  $region10: #{forward.35} parent=0 // pred_check
    _
  $region11: #{forward.35} parent=0 // pred_check_branch
    %13 = sbr.rel (0) target = $region13
  $region12: #{forward.35} parent=0 // pred_region
    _
  $region13: #{forward.35} parent=0 // pred_fallthru
    _
  %v15 = vld [vmem:[%s0] sm:$0xff]
  %v16 = vld [vmem:[%s0 + $0x8] sm:$0xff]
  %v17 = vld [vmem:[%s0 + $0x10] sm:$0xf]
  %v18 = vld [vmem:[%s0 + $0x14] sm:$0xff]
  %v19 = vld [vmem:[%s0 + $0x1c] sm:$0xff]
  %v20 = vld [vmem:[%s0 + $0x24] sm:$0xf]
  %v21 = vld [vmem:[%s0 + $0x28] sm:$0xff]
  %v22 = vld [vmem:[%s0 + $0x30] sm:$0xff]
  %v23 = vld [vmem:[%s0 + $0x38] sm:$0xf]
  %v24 = vld [vmem:[%s0 + $0x3c] sm:$0xff]
  %v25 = vld [vmem:[%s0 + $0x44] sm:$0xff]
  %v26 = vld [vmem:[%s0 + $0x4c] sm:$0xf]
  %v27 = vld [vmem:[%s1] sm:$0xf]
  %v28 = vld [vmem:[%s1 + $0x4] sm:$0xf]
  %v29 = vld [vmem:[%s1 + $0x8] sm:$0xf]
  %v30 = vld [vmem:[%s1 + $0xc] sm:$0xf]
  %v31 = vld [vmem:[%s1 + $0x10] sm:$0xf]
  %v32 = vld [vmem:[%s1 + $0x14] sm:$0xf]
  %v33 = vld [vmem:[%s1 + $0x18] sm:$0xf]
  %v34 = vld [vmem:[%s1 + $0x1c] sm:$0xf]
  %v35 = vld [vmem:[%s1 + $0x20] sm:$0xf]
  %v36 = vld [vmem:[%s1 + $0x24] sm:$0xf]
  %v37 = vld [vmem:[%s1 + $0x28] sm:$0xf]
  %v38 = vld [vmem:[%s1 + $0x2c] sm:$0xf]
  %v39 = vld [vmem:[%s1 + $0x30] sm:$0xf]
  %v40 = vld [vmem:[%s1 + $0x34] sm:$0xf]
  %v41 = vld [vmem:[%s1 + $0x38] sm:$0xf]
  %v42 = vld [vmem:[%s1 + $0x3c] sm:$0xf]
  %v43 = vld [vmem:[%s1 + $0x40] sm:$0xf]
  %v44 = vld [vmem:[%s1 + $0x44] sm:$0xf]
  %v45 = vld [vmem:[%s1 + $0x48] sm:$0xf]
  %v46 = vld [vmem:[%s1 + $0x4c] sm:$0xf]
  %v47 = vld [vmem:[%s1 + $0x50] sm:$0xf]
  %v48 = vld [vmem:[%s1 + $0x54] sm:$0xf]
  %v49 = vld [vmem:[%s1 + $0x58] sm:$0xf]
  %v50 = vld [vmem:[%s1 + $0x5c] sm:$0xf]
  %v51 = vld [vmem:[%s1 + $0x60] sm:$0xf]
  %v52 = vld [vmem:[%s1 + $0x64] sm:$0xf]
  %v53 = vld [vmem:[%s1 + $0x68] sm:$0xf]
  %v54 = vld [vmem:[%s1 + $0x6c] sm:$0xf]
  %v55 = vld [vmem:[%s1 + $0x70] sm:$0xf]
  %v56 = vld [vmem:[%s1 + $0x74] sm:$0xf]
  %v57 = vld [vmem:[%s1 + $0x78] sm:$0xf]
  %v58 = vld [vmem:[%s1 + $0x7c] sm:$0xf]
  %v59 = vld [vmem:[%s1 + $0x80] sm:$0xf]
  %v60 = vld [vmem:[%s1 + $0x84] sm:$0xf]
  %v61 = vld [vmem:[%s1 + $0x88] sm:$0xf]
  %v62 = vld [vmem:[%s1 + $0x8c] sm:$0xf]
  %v63 = vld [vmem:[%s1 + $0x90] sm:$0xf]
  %v64 = vld [vmem:[%s1 + $0x94] sm:$0xf]
  %v65 = vld [vmem:[%s1 + $0x98] sm:$0xf]
  %v66 = vld [vmem:[%s1 + $0x9c] sm:$0xf]
  %v67 = vld [vmem:[%s1 + $0xa0] sm:$0xf]
  %v68 = vld [vmem:[%s1 + $0xa4] sm:$0xf]
  %v69 = vld [vmem:[%s1 + $0xa8] sm:$0xf]
  %v70 = vld [vmem:[%s1 + $0xac] sm:$0xf]
  %v71 = vld [vmem:[%s1 + $0xb0] sm:$0xf]
  %v72 = vld [vmem:[%s1 + $0xb4] sm:$0xf]
  %v73 = vld [vmem:[%s1 + $0xb8] sm:$0xf]
  %v74 = vld [vmem:[%s1 + $0xbc] sm:$0xf]
  %v75 = vld [vmem:[%s1 + $0xc0] sm:$0xf]
  %v76 = vld [vmem:[%s1 + $0xc4] sm:$0xf]
  %v77 = vld [vmem:[%s1 + $0xc8] sm:$0xf]
  %v78 = vld [vmem:[%s1 + $0xcc] sm:$0xf]
  %v79 = vld [vmem:[%s1 + $0xd0] sm:$0xf]
  %v80 = vld [vmem:[%s1 + $0xd4] sm:$0xf]
  %v81 = vld [vmem:[%s1 + $0xd8] sm:$0xf]
  %v82 = vld [vmem:[%s1 + $0xdc] sm:$0xf]
  %v83 = vld [vmem:[%s1 + $0xe0] sm:$0xf]
  %v84 = vld [vmem:[%s1 + $0xe4] sm:$0xf]
  %v85 = vld [vmem:[%s1 + $0xe8] sm:$0xf]
  %v86 = vld [vmem:[%s1 + $0xec] sm:$0xf]
  %v87 = vld [vmem:[%s1 + $0xf0] sm:$0xf]
  %v88 = vld [vmem:[%s1 + $0xf4] sm:$0xf]
  %v89 = vld [vmem:[%s1 + $0xf8] sm:$0xf]
  %v90 = vld [vmem:[%s1 + $0xfc] sm:$0xf]
  %v91 = vld [vmem:[%s1 + $0x100] sm:$0xf]
  %v92 = vld [vmem:[%s1 + $0x104] sm:$0xf]
  %v93 = vld [vmem:[%s1 + $0x108] sm:$0xf]
  %v94 = vld [vmem:[%s1 + $0x10c] sm:$0xf]
  %v95 = vld [vmem:[%s1 + $0x110] sm:$0xf]
  %v96 = vld [vmem:[%s1 + $0x114] sm:$0xf]
  %v97 = vld [vmem:[%s1 + $0x118] sm:$0xf]
  %v98 = vld [vmem:[%s1 + $0x11c] sm:$0xf]
  %v99 = vld [vmem:[%s1 + $0x120] sm:$0xf]
  %v100 = vld [vmem:[%s1 + $0x124] sm:$0xf]
  %v101 = vld [vmem:[%s1 + $0x128] sm:$0xf]
  %v102 = vld [vmem:[%s1 + $0x12c] sm:$0xf]
  %v103 = vld [vmem:[%s1 + $0x130] sm:$0xf]
  %v104 = vld [vmem:[%s1 + $0x134] sm:$0xf]
  %v105 = vld [vmem:[%s1 + $0x138] sm:$0xf]
  %v106 = vld [vmem:[%s1 + $0x13c] sm:$0xf]
  %v107 = vld [vmem:[%s2] sm:$0x1]
  %v109 = vlaneseq
  %v110 = vshrl.u32 %v109, 7
  %v111 = vsub.s32 0, %v110
  %v112 = vrot.slane %v107, %v111
  %v126 = vunpack.c.l.b16 %v15
  %v127 = vunpack.c.h.b16 %v15
  %v128 = vunpack.c.l.b16 %v16
  %v129 = vunpack.c.h.b16 %v16
  %v130 = vunpack.c.l.b16 %v17
  %v131 = vunpack.c.l.b16 %v18
  %v132 = vunpack.c.h.b16 %v18
  %v133 = vunpack.c.l.b16 %v19
  %v134 = vunpack.c.h.b16 %v19
  %v135 = vunpack.c.l.b16 %v20
  %v136 = vunpack.c.l.b16 %v21
  %v137 = vunpack.c.h.b16 %v21
  %v138 = vunpack.c.l.b16 %v22
  %v139 = vunpack.c.h.b16 %v22
  %v140 = vunpack.c.l.b16 %v23
  %v141 = vunpack.c.l.b16 %v24
  %v142 = vunpack.c.h.b16 %v24
  %v143 = vunpack.c.l.b16 %v25
  %v144 = vunpack.c.h.b16 %v25
  %v145 = vunpack.c.l.b16 %v26
  %v146 = vpack.c.b16 %v131, %v126
  %v147 = vpack.c.b16 %v132, %v127
  %v148 = vpack.c.b16 %v133, %v128
  %v149 = vpack.c.b16 %v134, %v129
  %v150 = vpack.c.b16 %v135, %v130
  %v151 = vpack.c.b16 %v141, %v136
  %v152 = vpack.c.b16 %v142, %v137
  %v153 = vpack.c.b16 %v143, %v138
  %v154 = vpack.c.b16 %v144, %v139
  %v155 = vpack.c.b16 %v145, %v140
  %v246 = vunpack.c.l.b16 %v27
  %v247 = vunpack.c.l.b16 %v28
  %v248 = vunpack.c.l.b16 %v29
  %v249 = vunpack.c.l.b16 %v30
  %v250 = vunpack.c.l.b16 %v31
  %v251 = vunpack.c.l.b16 %v32
  %v252 = vunpack.c.l.b16 %v33
  %v253 = vunpack.c.l.b16 %v34
  %v254 = vunpack.c.l.b16 %v35
  %v255 = vunpack.c.l.b16 %v36
  %v256 = vunpack.c.l.b16 %v37
  %v257 = vunpack.c.l.b16 %v38
  %v258 = vunpack.c.l.b16 %v39
  %v259 = vunpack.c.l.b16 %v40
  %v260 = vunpack.c.l.b16 %v41
  %v261 = vunpack.c.l.b16 %v42
  %v262 = vunpack.c.l.b16 %v43
  %v263 = vunpack.c.l.b16 %v44
  %v264 = vunpack.c.l.b16 %v45
  %v265 = vunpack.c.l.b16 %v46
  %v266 = vunpack.c.l.b16 %v47
  %v267 = vunpack.c.l.b16 %v48
  %v268 = vunpack.c.l.b16 %v49
  %v269 = vunpack.c.l.b16 %v50
  %v270 = vunpack.c.l.b16 %v51
  %v271 = vunpack.c.l.b16 %v52
  %v272 = vunpack.c.l.b16 %v53
  %v273 = vunpack.c.l.b16 %v54
  %v274 = vunpack.c.l.b16 %v55
  %v275 = vunpack.c.l.b16 %v56
  %v276 = vunpack.c.l.b16 %v57
  %v277 = vunpack.c.l.b16 %v58
  %v278 = vunpack.c.l.b16 %v59
  %v279 = vunpack.c.l.b16 %v60
  %v280 = vunpack.c.l.b16 %v61
  %v281 = vunpack.c.l.b16 %v62
  %v282 = vunpack.c.l.b16 %v63
  %v283 = vunpack.c.l.b16 %v64
  %v284 = vunpack.c.l.b16 %v65
  %v285 = vunpack.c.l.b16 %v66
  %v286 = vunpack.c.l.b16 %v67
  %v287 = vunpack.c.l.b16 %v68
  %v288 = vunpack.c.l.b16 %v69
  %v289 = vunpack.c.l.b16 %v70
  %v290 = vunpack.c.l.b16 %v71
  %v291 = vunpack.c.l.b16 %v72
  %v292 = vunpack.c.l.b16 %v73
  %v293 = vunpack.c.l.b16 %v74
  %v294 = vunpack.c.l.b16 %v75
  %v295 = vunpack.c.l.b16 %v76
  %v296 = vunpack.c.l.b16 %v77
  %v297 = vunpack.c.l.b16 %v78
  %v298 = vunpack.c.l.b16 %v79
  %v299 = vunpack.c.l.b16 %v80
  %v300 = vunpack.c.l.b16 %v81
  %v301 = vunpack.c.l.b16 %v82
  %v302 = vunpack.c.l.b16 %v83
  %v303 = vunpack.c.l.b16 %v84
  %v304 = vunpack.c.l.b16 %v85
  %v305 = vunpack.c.l.b16 %v86
  %v306 = vunpack.c.l.b16 %v87
  %v307 = vunpack.c.l.b16 %v88
  %v308 = vunpack.c.l.b16 %v89
  %v309 = vunpack.c.l.b16 %v90
  %v310 = vunpack.c.l.b16 %v91
  %v311 = vunpack.c.l.b16 %v92
  %v312 = vunpack.c.l.b16 %v93
  %v313 = vunpack.c.l.b16 %v94
  %v314 = vunpack.c.l.b16 %v95
  %v315 = vunpack.c.l.b16 %v96
  %v316 = vunpack.c.l.b16 %v97
  %v317 = vunpack.c.l.b16 %v98
  %v318 = vunpack.c.l.b16 %v99
  %v319 = vunpack.c.l.b16 %v100
  %v320 = vunpack.c.l.b16 %v101
  %v321 = vunpack.c.l.b16 %v102
  %v322 = vunpack.c.l.b16 %v103
  %v323 = vunpack.c.l.b16 %v104
  %v324 = vunpack.c.l.b16 %v105
  %v325 = vunpack.c.l.b16 %v106
  %v326 = vpack.c.b16 %v247, %v246
  %v327 = vpack.c.b16 %v249, %v248
  %v328 = vpack.c.b16 %v251, %v250
  %v329 = vpack.c.b16 %v253, %v252
  %v330 = vpack.c.b16 %v255, %v254
  %v331 = vpack.c.b16 %v257, %v256
  %v332 = vpack.c.b16 %v259, %v258
  %v333 = vpack.c.b16 %v261, %v260
  %v334 = vpack.c.b16 %v263, %v262
  %v335 = vpack.c.b16 %v265, %v264
  %v336 = vpack.c.b16 %v267, %v266
  %v337 = vpack.c.b16 %v269, %v268
  %v338 = vpack.c.b16 %v271, %v270
  %v339 = vpack.c.b16 %v273, %v272
  %v340 = vpack.c.b16 %v275, %v274
  %v341 = vpack.c.b16 %v277, %v276
  %v342 = vpack.c.b16 %v279, %v278
  %v343 = vpack.c.b16 %v281, %v280
  %v344 = vpack.c.b16 %v283, %v282
  %v345 = vpack.c.b16 %v285, %v284
  %v346 = vpack.c.b16 %v287, %v286
  %v347 = vpack.c.b16 %v289, %v288
  %v348 = vpack.c.b16 %v291, %v290
  %v349 = vpack.c.b16 %v293, %v292
  %v350 = vpack.c.b16 %v295, %v294
  %v351 = vpack.c.b16 %v297, %v296
  %v352 = vpack.c.b16 %v299, %v298
  %v353 = vpack.c.b16 %v301, %v300
  %v354 = vpack.c.b16 %v303, %v302
  %v355 = vpack.c.b16 %v305, %v304
  %v356 = vpack.c.b16 %v307, %v306
  %v357 = vpack.c.b16 %v309, %v308
  %v358 = vpack.c.b16 %v311, %v310
  %v359 = vpack.c.b16 %v313, %v312
  %v360 = vpack.c.b16 %v315, %v314
  %v361 = vpack.c.b16 %v317, %v316
  %v362 = vpack.c.b16 %v319, %v318
  %v363 = vpack.c.b16 %v321, %v320
  %v364 = vpack.c.b16 %v323, %v322
  %v365 = vpack.c.b16 %v325, %v324
  %406 = vmatprep.subr.bf16.mxu0 0
  %407 = vmatpush1.bf16.msra.mxu0 %v326
  %408 = vmatprep.subr.bf16.mxu0 0
  %409 = vmatpush1.bf16.msra.mxu0 %v327
  %410 = vmatprep.subr.bf16.mxu0 0
  %411 = vmatpush1.bf16.msra.mxu0 %v328
  %412 = vmatprep.subr.bf16.mxu0 0
  %413 = vmatpush1.bf16.msra.mxu0 %v329
  %414 = vmatprep.subr.bf16.mxu0 0
  %415 = vmatpush1.bf16.msra.mxu0 %v330
  %416 = vmatprep.subr.bf16.mxu0 0
  %417 = vmatpush1.bf16.msra.mxu0 %v331
  %418 = vmatprep.subr.bf16.mxu0 0
  %419 = vmatpush1.bf16.msra.mxu0 %v332
  %420 = vmatprep.subr.bf16.mxu0 0
  %421 = vmatpush1.bf16.msra.mxu0 %v333
  %422 = vmatprep.subr.bf16.mxu0 0
  %423 = vmatpush1.bf16.msra.mxu0 %v334
  %424 = vmatprep.subr.bf16.mxu0 0
  %425 = vmatpush1.bf16.msra.mxu0 %v335
  %426 = vmatprep.subr.bf16.mxu0 0
  %427 = vmatpush1.bf16.msra.mxu0 %v336
  %428 = vmatprep.subr.bf16.mxu0 0
  %429 = vmatpush1.bf16.msra.mxu0 %v337
  %430 = vmatprep.subr.bf16.mxu0 0
  %431 = vmatpush1.bf16.msra.mxu0 %v338
  %432 = vmatprep.subr.bf16.mxu0 0
  %433 = vmatpush1.bf16.msra.mxu0 %v339
  %434 = vmatprep.subr.bf16.mxu0 0
  %435 = vmatpush1.bf16.msra.mxu0 %v340
  %436 = vmatprep.subr.bf16.mxu0 0
  %437 = vmatpush1.bf16.msra.mxu0 %v341
  %438 = vmatprep.mubr.bf16.mxu0 %v147
  %439 = vmatmul.mubr.bf16.gmra.mrb[0].mxu0 %v146
  %v440 = vpop.f32.mrb[0].mxu0
  %v441 = vadd.f32 %v112, %v440
  %v442 = vpop.f32.mrb[0].mxu0
  %v443 = vpop.f32.mrb[0].mxu0
  %v444 = vadd.f32 %v112, %v443
  %v445 = vpop.f32.mrb[0].mxu0
  %446 = vmatprep.mubr.bf16.mxu0 %v152
  %447 = vmatmul.mubr.bf16.gmra.mrb[0].mxu0 %v151
  %v448 = vpop.f32.mrb[0].mxu0
  %v449 = vadd.f32 %v112, %v448
  %v450 = vpop.f32.mrb[0].mxu0
  %v451 = vpop.f32.mrb[0].mxu0
  %v452 = vadd.f32 %v112, %v451
  %v453 = vpop.f32.mrb[0].mxu0
  %454 = vdwg.mxu0
  %455 = vmatprep.subr.bf16.mxu0 0
  %456 = vmatpush1.bf16.msra.mxu0 %v342
  %457 = vmatprep.subr.bf16.mxu0 0
  %458 = vmatpush1.bf16.msra.mxu0 %v343
  %459 = vmatprep.subr.bf16.mxu0 0
  %460 = vmatpush1.bf16.msra.mxu0 %v344
  %461 = vmatprep.subr.bf16.mxu0 0
  %462 = vmatpush1.bf16.msra.mxu0 %v345
  %463 = vmatprep.subr.bf16.mxu0 0
  %464 = vmatpush1.bf16.msra.mxu0 %v346
  %465 = vmatprep.subr.bf16.mxu0 0
  %466 = vmatpush1.bf16.msra.mxu0 %v347
  %467 = vmatprep.subr.bf16.mxu0 0
  %468 = vmatpush1.bf16.msra.mxu0 %v348
  %469 = vmatprep.subr.bf16.mxu0 0
  %470 = vmatpush1.bf16.msra.mxu0 %v349
  %471 = vmatprep.subr.bf16.mxu0 0
  %472 = vmatpush1.bf16.msra.mxu0 %v350
  %473 = vmatprep.subr.bf16.mxu0 0
  %474 = vmatpush1.bf16.msra.mxu0 %v351
  %475 = vmatprep.subr.bf16.mxu0 0
  %476 = vmatpush1.bf16.msra.mxu0 %v352
  %477 = vmatprep.subr.bf16.mxu0 0
  %478 = vmatpush1.bf16.msra.mxu0 %v353
  %479 = vmatprep.subr.bf16.mxu0 0
  %480 = vmatpush1.bf16.msra.mxu0 %v354
  %481 = vmatprep.subr.bf16.mxu0 0
  %482 = vmatpush1.bf16.msra.mxu0 %v355
  %483 = vmatprep.subr.bf16.mxu0 0
  %484 = vmatpush1.bf16.msra.mxu0 %v356
  %485 = vmatprep.subr.bf16.mxu0 0
  %486 = vmatpush1.bf16.msra.mxu0 %v357
  %487 = vmatprep.mubr.bf16.mxu0 %v149
  %488 = vmatmul.mubr.bf16.gmra.mrb[0].mxu0 %v148
  %v489 = vpop.f32.mrb[0].mxu0
  %v490 = vadd.f32 %v441, %v489
  %v491 = vpop.f32.mrb[0].mxu0
  %v492 = vpop.f32.mrb[0].mxu0
  %v493 = vadd.f32 %v444, %v492
  %v494 = vpop.f32.mrb[0].mxu0
  %495 = vmatprep.mubr.bf16.mxu0 %v154
  %496 = vmatmul.mubr.bf16.gmra.mrb[0].mxu0 %v153
  %v497 = vpop.f32.mrb[0].mxu0
  %v498 = vadd.f32 %v449, %v497
  %v499 = vpop.f32.mrb[0].mxu0
  %v500 = vpop.f32.mrb[0].mxu0
  %v501 = vadd.f32 %v452, %v500
  %v502 = vpop.f32.mrb[0].mxu0
  %503 = vdwg.mxu0
  %504 = vmatprep.subr.bf16.mxu0 0
  %505 = vmatpush1.bf16.msra.mxu0 %v358
  %506 = vmatprep.subr.bf16.mxu0 0
  %507 = vmatpush1.bf16.msra.mxu0 %v359
  %508 = vmatprep.subr.bf16.mxu0 0
  %509 = vmatpush1.bf16.msra.mxu0 %v360
  %510 = vmatprep.subr.bf16.mxu0 0
  %511 = vmatpush1.bf16.msra.mxu0 %v361
  %512 = vmatprep.subr.bf16.mxu0 0
  %513 = vmatpush1.bf16.msra.mxu0 %v362
  %514 = vmatprep.subr.bf16.mxu0 0
  %515 = vmatpush1.bf16.msra.mxu0 %v363
  %516 = vmatprep.subr.bf16.mxu0 0
  %517 = vmatpush1.bf16.msra.mxu0 %v364
  %518 = vmatprep.subr.bf16.mxu0 0
  %519 = vmatpush1.bf16.msra.mxu0 %v365
  %520 = vmatprep.subr.bf16.mxu0 0
  %521 = vmatpush1.bf16.msra.mxu0 0
  %522 = vmatprep.subr.bf16.mxu0 0
  %523 = vmatpush1.bf16.msra.mxu0 0
  %524 = vmatprep.subr.bf16.mxu0 0
  %525 = vmatpush1.bf16.msra.mxu0 0
  %526 = vmatprep.subr.bf16.mxu0 0
  %527 = vmatpush1.bf16.msra.mxu0 0
  %528 = vmatprep.subr.bf16.mxu0 0
  %529 = vmatpush1.bf16.msra.mxu0 0
  %530 = vmatprep.subr.bf16.mxu0 0
  %531 = vmatpush1.bf16.msra.mxu0 0
  %532 = vmatprep.subr.bf16.mxu0 0
  %533 = vmatpush1.bf16.msra.mxu0 0
  %534 = vmatprep.subr.bf16.mxu0 0
  %535 = vmatpush1.bf16.msra.mxu0 0
  %536 = vmatprep.mubr.bf16.mxu0 0
  %537 = vmatmul.mubr.bf16.gmra.mrb[0].mxu0 %v150
  %v538 = vpop.f32.mrb[0].mxu0
  %v539 = vadd.f32 %v490, %v538
  %v540 = vpop.f32.mrb[0].mxu0
  %v541 = vpop.f32.mrb[0].mxu0
  %v542 = vadd.f32 %v493, %v541
  %v543 = vpop.f32.mrb[0].mxu0
  %544 = vmatprep.mubr.bf16.mxu0 0
  %545 = vmatmul.mubr.bf16.gmra.mrb[0].mxu0 %v155
  %v546 = vpop.f32.mrb[0].mxu0
  %v547 = vadd.f32 %v498, %v546
  %v548 = vpop.f32.mrb[0].mxu0
  %v549 = vpop.f32.mrb[0].mxu0
  %v550 = vadd.f32 %v501, %v549
  %v551 = vpop.f32.mrb[0].mxu0
  %552 = vdwg.mxu0
  %v553 = vxor.u32 %v539, 2147483648
  %v554 = vxor.u32 %v542, 2147483648
  %v555 = vxor.u32 %v547, 2147483648
  %v556 = vxor.u32 %v550, 2147483648
  %v557 = vmul.f32 %v553, 1.442695
  %v558 = vpow.pop %v557
  %v559 = vmul.f32 %v554, 1.442695
  %v560 = vpow.pop %v559
  %v561 = vmul.f32 %v555, 1.442695
  %v562 = vpow.pop %v561
  %v563 = vmul.f32 %v556, 1.442695
  %v564 = vpow.pop %v563
  %v565 = vadd.f32 %v558, 1.0
  %v566 = vadd.f32 %v560, 1.0
  %v567 = vadd.f32 %v562, 1.0
  %v568 = vadd.f32 %v564, 1.0
  %v569 = vrcp.pop %v565
  %v570 = vmul.f32 1.0, %v569
  %v571 = vrcp.pop %v566
  %v572 = vmul.f32 1.0, %v571
  %v573 = vrcp.pop %v567
  %v574 = vmul.f32 1.0, %v573
  %v575 = vrcp.pop %v568
  %v576 = vmul.f32 1.0, %v575
  %v577 = vpack.c.bf16 %v572, %v570
  %v578 = vpack.c.bf16 %v576, %v574
  %v581 = vunpack.c.l.b16 %v577
  %v582 = vunpack.c.h.b16 %v577
  %v583 = vunpack.c.l.b16 %v578
  %v584 = vunpack.c.h.b16 %v578
  %v585 = vpack.c.b16 %v581, %v581
  %v586 = vpack.c.b16 %v582, %v582
  %v587 = vpack.c.b16 %v583, %v583
  %v588 = vpack.c.b16 %v584, %v584
  %593 = vst [vmem:[%s3] sm:$0xf] %v585
  %594 = vst [vmem:[%s3 + $0x4] sm:$0xf] %v586
  %595 = vst [vmem:[%s3 + $0x8] sm:$0xf] %v587
  %596 = vst [vmem:[%s3 + $0xc] sm:$0xf] %v588
  // Predicated region
  $region14: #{forward.35} parent=0 // pred_check
    _
  $region15: #{forward.35} parent=0 // pred_check_branch
    %598 = sbr.rel (0) target = $region17
  $region16: #{forward.35} parent=0 // pred_region
    _
  $region17: #{forward.35} parent=0 // pred_fallthru
    _
  // Predicated region
  $region18: #{forward.35} parent=0 // pred_check
    _
  $region19: #{forward.35} parent=0 // pred_check_branch
    %600 = sbr.rel (0) target = $region21
  $region20: #{forward.35} parent=0 // pred_region
    _
  $region21: #{forward.35} parent=0 // pred_fallthru
    _

// kernel: forward.37
$region0: #{forward.37}
  #allocation0 [shape = 'u32[]', space=smem, size = 0x4, offset = 0x4, fixed_abs, tag = 'smem constant byte address 0x4 - core index']
  #allocation1 [shape = 'u32[144,128]{1,0:T(1,128)}', space=vmem, size = 0x12000, scoped, tag = 'internal scratch']
  %s0 = inlined_call_operand.vmem [shape: bf16[128,256], index: 0, kind: input, shape index: {}]
  %s1 = inlined_call_operand.vmem [shape: bf16[256,128], index: 1, kind: input, shape index: {}]
  %s2 = inlined_call_operand.vmem [shape: f32[1,128], index: 2, kind: input, shape index: {}]
  %s3 = inlined_call_operand.vmem [shape: f32[128,128], index: 3, kind: output, shape index: {}]
  %s4 = sld [smem:[#allocation0]]
  $region22: #{forward.37} parent=0
    _
  %s6 = ssub.s32 1, %s4
  %s7 = scalar_select 0, %s6, %s4
  // Predicated region
  $region2: #{forward.37} parent=0 // pred_check
    _
  $region3: #{forward.37} parent=0 // pred_check_branch
    %9 = sbr.rel (0) target = $region5
  $region4: #{forward.37} parent=0 // pred_region
    _
  $region5: #{forward.37} parent=0 // pred_fallthru
    _
  // Predicated region
  $region6: #{forward.37} parent=0 // pred_check
    _
  $region7: #{forward.37} parent=0 // pred_check_branch
    %11 = sbr.rel (0) target = $region9
  $region8: #{forward.37} parent=0 // pred_region
    _
  $region9: #{forward.37} parent=0 // pred_fallthru
    _
  // Predicated region
  $region10: #{forward.37} parent=0 // pred_check
    _
  $region11: #{forward.37} parent=0 // pred_check_branch
    %13 = sbr.rel (0) target = $region13
  $region12: #{forward.37} parent=0 // pred_region
    _
  $region13: #{forward.37} parent=0 // pred_fallthru
    _
  %v15 = vld [vmem:[%s0] sm:$0xff]
  %v16 = vld [vmem:[%s0 + $0x8] sm:$0xff]
  %v17 = vld [vmem:[%s0 + $0x10] sm:$0xff]
  %v18 = vld [vmem:[%s0 + $0x18] sm:$0xff]
  %v19 = vld [vmem:[%s0 + $0x20] sm:$0xff]
  %v20 = vld [vmem:[%s0 + $0x28] sm:$0xff]
  %v21 = vld [vmem:[%s0 + $0x30] sm:$0xff]
  %v22 = vld [vmem:[%s0 + $0x38] sm:$0xff]
  %v23 = vld [vmem:[%s0 + $0x40] sm:$0xff]
  %v24 = vld [vmem:[%s0 + $0x48] sm:$0xff]
  %v25 = vld [vmem:[%s0 + $0x50] sm:$0xff]
  %v26 = vld [vmem:[%s0 + $0x58] sm:$0xff]
  %v27 = vld [vmem:[%s0 + $0x60] sm:$0xff]
  %v28 = vld [vmem:[%s0 + $0x68] sm:$0xff]
  %v29 = vld [vmem:[%s0 + $0x70] sm:$0xff]
  %v30 = vld [vmem:[%s0 + $0x78] sm:$0xff]
  %v31 = vld [vmem:[%s1] sm:$0xf]
  %v32 = vld [vmem:[%s1 + $0x4] sm:$0xf]
  %v33 = vld [vmem:[%s1 + $0x8] sm:$0xf]
  %v34 = vld [vmem:[%s1 + $0xc] sm:$0xf]
  %v35 = vld [vmem:[%s1 + $0x10] sm:$0xf]
  %v36 = vld [vmem:[%s1 + $0x14] sm:$0xf]
  %v37 = vld [vmem:[%s1 + $0x18] sm:$0xf]
  %v38 = vld [vmem:[%s1 + $0x1c] sm:$0xf]
  %v39 = vld [vmem:[%s1 + $0x20] sm:$0xf]
  %v40 = vld [vmem:[%s1 + $0x24] sm:$0xf]
  %v41 = vld [vmem:[%s1 + $0x28] sm:$0xf]
  %v42 = vld [vmem:[%s1 + $0x2c] sm:$0xf]
  %v43 = vld [vmem:[%s1 + $0x30] sm:$0xf]
  %v44 = vld [vmem:[%s1 + $0x34] sm:$0xf]
  %v45 = vld [vmem:[%s1 + $0x38] sm:$0xf]
  %v46 = vld [vmem:[%s1 + $0x3c] sm:$0xf]
  %v47 = vld [vmem:[%s1 + $0x40] sm:$0xf]
  %v48 = vld [vmem:[%s1 + $0x44] sm:$0xf]
  %v49 = vld [vmem:[%s1 + $0x48] sm:$0xf]
  %v50 = vld [vmem:[%s1 + $0x4c] sm:$0xf]
  %v51 = vld [vmem:[%s1 + $0x50] sm:$0xf]
  %v52 = vld [vmem:[%s1 + $0x54] sm:$0xf]
  %v53 = vld [vmem:[%s1 + $0x58] sm:$0xf]
  %v54 = vld [vmem:[%s1 + $0x5c] sm:$0xf]
  %v55 = vld [vmem:[%s1 + $0x60] sm:$0xf]
  %v56 = vld [vmem:[%s1 + $0x64] sm:$0xf]
  %v57 = vld [vmem:[%s1 + $0x68] sm:$0xf]
  %v58 = vld [vmem:[%s1 + $0x6c] sm:$0xf]
  %v59 = vld [vmem:[%s1 + $0x70] sm:$0xf]
  %v60 = vld [vmem:[%s1 + $0x74] sm:$0xf]
  %v61 = vld [vmem:[%s1 + $0x78] sm:$0xf]
  %v62 = vld [vmem:[%s1 + $0x7c] sm:$0xf]
  %v63 = vld [vmem:[%s2] sm:$0x1]
  %v65 = vlaneseq
  %v66 = vshrl.u32 %v65, 7
  %v67 = vsub.s32 0, %v66
  %v68 = vrot.slane %v63, %v67
  %v86 = vunpack.c.l.b16 %v15
  %v87 = vunpack.c.h.b16 %v15
  %v88 = vunpack.c.l.b16 %v16
  %v89 = vunpack.c.h.b16 %v16
  %v90 = vunpack.c.l.b16 %v17
  %v91 = vunpack.c.h.b16 %v17
  %v92 = vunpack.c.l.b16 %v18
  %v93 = vunpack.c.h.b16 %v18
  %v94 = vunpack.c.l.b16 %v19
  %v95 = vunpack.c.h.b16 %v19
  %v96 = vunpack.c.l.b16 %v20
  %v97 = vunpack.c.h.b16 %v20
  %v98 = vunpack.c.l.b16 %v21
  %v99 = vunpack.c.h.b16 %v21
  %v100 = vunpack.c.l.b16 %v22
  %v101 = vunpack.c.h.b16 %v22
  %v102 = vunpack.c.l.b16 %v23
  %v103 = vunpack.c.h.b16 %v23
  %v104 = vunpack.c.l.b16 %v24
  %v105 = vunpack.c.h.b16 %v24
  %v106 = vunpack.c.l.b16 %v25
  %v107 = vunpack.c.h.b16 %v25
  %v108 = vunpack.c.l.b16 %v26
  %v109 = vunpack.c.h.b16 %v26
  %v110 = vunpack.c.l.b16 %v27
  %v111 = vunpack.c.h.b16 %v27
  %v112 = vunpack.c.l.b16 %v28
  %v113 = vunpack.c.h.b16 %v28
  %v114 = vunpack.c.l.b16 %v29
  %v115 = vunpack.c.h.b16 %v29
  %v116 = vunpack.c.l.b16 %v30
  %v117 = vunpack.c.h.b16 %v30
  %v118 = vpack.c.b16 %v88, %v86
  %v119 = vpack.c.b16 %v89, %v87
  %v120 = vpack.c.b16 %v92, %v90
  %v121 = vpack.c.b16 %v93, %v91
  %v122 = vpack.c.b16 %v96, %v94
  %v123 = vpack.c.b16 %v97, %v95
  %v124 = vpack.c.b16 %v100, %v98
  %v125 = vpack.c.b16 %v101, %v99
  %v126 = vpack.c.b16 %v104, %v102
  %v127 = vpack.c.b16 %v105, %v103
  %v128 = vpack.c.b16 %v108, %v106
  %v129 = vpack.c.b16 %v109, %v107
  %v130 = vpack.c.b16 %v112, %v110
  %v131 = vpack.c.b16 %v113, %v111
  %v132 = vpack.c.b16 %v116, %v114
  %v133 = vpack.c.b16 %v117, %v115
  %v182 = vunpack.c.l.b16 %v31
  %v183 = vunpack.c.l.b16 %v32
  %v184 = vunpack.c.l.b16 %v33
  %v185 = vunpack.c.l.b16 %v34
  %v186 = vunpack.c.l.b16 %v35
  %v187 = vunpack.c.l.b16 %v36
  %v188 = vunpack.c.l.b16 %v37
  %v189 = vunpack.c.l.b16 %v38
  %v190 = vunpack.c.l.b16 %v39
  %v191 = vunpack.c.l.b16 %v40
  %v192 = vunpack.c.l.b16 %v41
  %v193 = vunpack.c.l.b16 %v42
  %v194 = vunpack.c.l.b16 %v43
  %v195 = vunpack.c.l.b16 %v44
  %v196 = vunpack.c.l.b16 %v45
  %v197 = vunpack.c.l.b16 %v46
  %v198 = vunpack.c.l.b16 %v47
  %v199 = vunpack.c.l.b16 %v48
  %v200 = vunpack.c.l.b16 %v49
  %v201 = vunpack.c.l.b16 %v50
  %v202 = vunpack.c.l.b16 %v51
  %v203 = vunpack.c.l.b16 %v52
  %v204 = vunpack.c.l.b16 %v53
  %v205 = vunpack.c.l.b16 %v54
  %v206 = vunpack.c.l.b16 %v55
  %v207 = vunpack.c.l.b16 %v56
  %v208 = vunpack.c.l.b16 %v57
  %v209 = vunpack.c.l.b16 %v58
  %v210 = vunpack.c.l.b16 %v59
  %v211 = vunpack.c.l.b16 %v60
  %v212 = vunpack.c.l.b16 %v61
  %v213 = vunpack.c.l.b16 %v62
  %v214 = vpack.c.b16 %v183, %v182
  %v215 = vpack.c.b16 %v185, %v184
  %v216 = vpack.c.b16 %v187, %v186
  %v217 = vpack.c.b16 %v189, %v188
  %v218 = vpack.c.b16 %v191, %v190
  %v219 = vpack.c.b16 %v193, %v192
  %v220 = vpack.c.b16 %v195, %v194
  %v221 = vpack.c.b16 %v197, %v196
  %v222 = vpack.c.b16 %v199, %v198
  %v223 = vpack.c.b16 %v201, %v200
  %v224 = vpack.c.b16 %v203, %v202
  %v225 = vpack.c.b16 %v205, %v204
  %v226 = vpack.c.b16 %v207, %v206
  %v227 = vpack.c.b16 %v209, %v208
  %v228 = vpack.c.b16 %v211, %v210
  %v229 = vpack.c.b16 %v213, %v212
  %246 = vmatprep.subr.bf16.mxu0 0
  %247 = vmatpush1.bf16.msra.mxu0 %v214
  %248 = vmatprep.subr.bf16.mxu0 0
  %249 = vmatpush1.bf16.msra.mxu0 %v215
  %250 = vmatprep.subr.bf16.mxu0 0
  %251 = vmatpush1.bf16.msra.mxu0 %v216
  %252 = vmatprep.subr.bf16.mxu0 0
  %253 = vmatpush1.bf16.msra.mxu0 %v217
  %254 = vmatprep.subr.bf16.mxu0 0
  %255 = vmatpush1.bf16.msra.mxu0 %v218
  %256 = vmatprep.subr.bf16.mxu0 0
  %257 = vmatpush1.bf16.msra.mxu0 %v219
  %258 = vmatprep.subr.bf16.mxu0 0
  %259 = vmatpush1.bf16.msra.mxu0 %v220
  %260 = vmatprep.subr.bf16.mxu0 0
  %261 = vmatpush1.bf16.msra.mxu0 %v221
  %262 = vmatprep.subr.bf16.mxu0 0
  %263 = vmatpush1.bf16.msra.mxu0 %v222
  %264 = vmatprep.subr.bf16.mxu0 0
  %265 = vmatpush1.bf16.msra.mxu0 %v223
  %266 = vmatprep.subr.bf16.mxu0 0
  %267 = vmatpush1.bf16.msra.mxu0 %v224
  %268 = vmatprep.subr.bf16.mxu0 0
  %269 = vmatpush1.bf16.msra.mxu0 %v225
  %270 = vmatprep.subr.bf16.mxu0 0
  %271 = vmatpush1.bf16.msra.mxu0 %v226
  %272 = vmatprep.subr.bf16.mxu0 0
  %273 = vmatpush1.bf16.msra.mxu0 %v227
  %274 = vmatprep.subr.bf16.mxu0 0
  %275 = vmatpush1.bf16.msra.mxu0 %v228
  %276 = vmatprep.subr.bf16.mxu0 0
  %277 = vmatpush1.bf16.msra.mxu0 %v229
  %278 = vmatprep.mubr.bf16.mxu0 %v119
  %279 = vmatmul.mubr.bf16.gmra.mrb[0].mxu0 %v118
  %v280 = vpop.f32.mrb[0].mxu0
  %v281 = vadd.f32 %v68, %v280
  %v282 = vpop.f32.mrb[0].mxu0
  %v283 = vpop.f32.mrb[0].mxu0
  %v284 = vadd.f32 %v68, %v283
  %v285 = vpop.f32.mrb[0].mxu0
  %286 = vmatprep.mubr.bf16.mxu0 %v121
  %287 = vmatmul.mubr.bf16.gmra.mrb[0].mxu0 %v120
  %v288 = vpop.f32.mrb[0].mxu0
  %v289 = vadd.f32 %v68, %v288
  %v290 = vpop.f32.mrb[0].mxu0
  %v291 = vpop.f32.mrb[0].mxu0
  %v292 = vadd.f32 %v68, %v291
  %v293 = vpop.f32.mrb[0].mxu0
  %294 = vmatprep.mubr.bf16.mxu0 %v123
  %295 = vmatmul.mubr.bf16.gmra.mrb[0].mxu0 %v122
  %v296 = vpop.f32.mrb[0].mxu0
  %v297 = vadd.f32 %v68, %v296
  %v298 = vpop.f32.mrb[0].mxu0
  %v299 = vpop.f32.mrb[0].mxu0
  %v300 = vadd.f32 %v68, %v299
  %v301 = vpop.f32.mrb[0].mxu0
  %302 = vmatprep.mubr.bf16.mxu0 %v125
  %303 = vmatmul.mubr.bf16.gmra.mrb[0].mxu0 %v124
  %v304 = vpop.f32.mrb[0].mxu0
  %v305 = vadd.f32 %v68, %v304
  %v306 = vpop.f32.mrb[0].mxu0
  %v307 = vpop.f32.mrb[0].mxu0
  %v308 = vadd.f32 %v68, %v307
  %v309 = vpop.f32.mrb[0].mxu0
  %310 = vmatprep.mubr.bf16.mxu0 %v127
  %311 = vmatmul.mubr.bf16.gmra.mrb[0].mxu0 %v126
  %v312 = vpop.f32.mrb[0].mxu0
  %v313 = vadd.f32 %v68, %v312
  %v314 = vpop.f32.mrb[0].mxu0
  %v315 = vpop.f32.mrb[0].mxu0
  %v316 = vadd.f32 %v68, %v315
  %v317 = vpop.f32.mrb[0].mxu0
  %318 = vmatprep.mubr.bf16.mxu0 %v129
  %319 = vmatmul.mubr.bf16.gmra.mrb[0].mxu0 %v128
  %v320 = vpop.f32.mrb[0].mxu0
  %v321 = vadd.f32 %v68, %v320
  %v322 = vpop.f32.mrb[0].mxu0
  %v323 = vpop.f32.mrb[0].mxu0
  %v324 = vadd.f32 %v68, %v323
  %v325 = vpop.f32.mrb[0].mxu0
  %326 = vmatprep.mubr.bf16.mxu0 %v131
  %327 = vmatmul.mubr.bf16.gmra.mrb[0].mxu0 %v130
  %v328 = vpop.f32.mrb[0].mxu0
  %v329 = vadd.f32 %v68, %v328
  %v330 = vpop.f32.mrb[0].mxu0
  %v331 = vpop.f32.mrb[0].mxu0
  %v332 = vadd.f32 %v68, %v331
  %v333 = vpop.f32.mrb[0].mxu0
  %334 = vmatprep.mubr.bf16.mxu0 %v133
  %335 = vmatmul.mubr.bf16.gmra.mrb[0].mxu0 %v132
  %v336 = vpop.f32.mrb[0].mxu0
  %v337 = vadd.f32 %v68, %v336
  %v338 = vpop.f32.mrb[0].mxu0
  %v339 = vpop.f32.mrb[0].mxu0
  %v340 = vadd.f32 %v68, %v339
  %v341 = vpop.f32.mrb[0].mxu0
  %342 = vdwg.mxu0
  %v343 = vxor.u32 %v281, 2147483648
  %v344 = vxor.u32 %v284, 2147483648
  %v345 = vxor.u32 %v289, 2147483648
  %v346 = vxor.u32 %v292, 2147483648
  %v347 = vxor.u32 %v297, 2147483648
  %v348 = vxor.u32 %v300, 2147483648
  %v349 = vxor.u32 %v305, 2147483648
  %v350 = vxor.u32 %v308, 2147483648
  %v351 = vxor.u32 %v313, 2147483648
  %v352 = vxor.u32 %v316, 2147483648
  %v353 = vxor.u32 %v321, 2147483648
  %v354 = vxor.u32 %v324, 2147483648
  %v355 = vxor.u32 %v329, 2147483648
  %v356 = vxor.u32 %v332, 2147483648
  %v357 = vxor.u32 %v337, 2147483648
  %v358 = vxor.u32 %v340, 2147483648
  %v359 = vmul.f32 %v343, 1.442695
  %v360 = vpow.pop %v359
  %v361 = vmul.f32 %v344, 1.442695
  %v362 = vpow.pop %v361
  %v363 = vmul.f32 %v345, 1.442695
  %v364 = vpow.pop %v363
  %v365 = vmul.f32 %v346, 1.442695
  %v366 = vpow.pop %v365
  %v367 = vmul.f32 %v347, 1.442695
  %v368 = vpow.pop %v367
  %v369 = vmul.f32 %v348, 1.442695
  %v370 = vpow.pop %v369
  %v371 = vmul.f32 %v349, 1.442695
  %v372 = vpow.pop %v371
  %v373 = vmul.f32 %v350, 1.442695
  %v374 = vpow.pop %v373
  %v375 = vmul.f32 %v351, 1.442695
  %v376 = vpow.pop %v375
  %v377 = vmul.f32 %v352, 1.442695
  %v378 = vpow.pop %v377
  %v379 = vmul.f32 %v353, 1.442695
  %v380 = vpow.pop %v379
  %v381 = vmul.f32 %v354, 1.442695
  %v382 = vpow.pop %v381
  %v383 = vmul.f32 %v355, 1.442695
  %v384 = vpow.pop %v383
  %v385 = vmul.f32 %v356, 1.442695
  %v386 = vpow.pop %v385
  %v387 = vmul.f32 %v357, 1.442695
  %v388 = vpow.pop %v387
  %v389 = vmul.f32 %v358, 1.442695
  %v390 = vpow.pop %v389
  %v391 = vadd.f32 %v360, 1.0
  %v392 = vadd.f32 %v362, 1.0
  %v393 = vadd.f32 %v364, 1.0
  %v394 = vadd.f32 %v366, 1.0
  %v395 = vadd.f32 %v368, 1.0
  %v396 = vadd.f32 %v370, 1.0
  %v397 = vadd.f32 %v372, 1.0
  %v398 = vadd.f32 %v374, 1.0
  %v399 = vadd.f32 %v376, 1.0
  %v400 = vadd.f32 %v378, 1.0
  %v401 = vadd.f32 %v380, 1.0
  %v402 = vadd.f32 %v382, 1.0
  %v403 = vadd.f32 %v384, 1.0
  %v404 = vadd.f32 %v386, 1.0
  %v405 = vadd.f32 %v388, 1.0
  %v406 = vadd.f32 %v390, 1.0
  %v407 = vrcp.pop %v391
  %v408 = vmul.f32 1.0, %v407
  %v409 = vrcp.pop %v392
  %v410 = vmul.f32 1.0, %v409
  %v411 = vrcp.pop %v393
  %v412 = vmul.f32 1.0, %v411
  %v413 = vrcp.pop %v394
  %v414 = vmul.f32 1.0, %v413
  %v415 = vrcp.pop %v395
  %v416 = vmul.f32 1.0, %v415
  %v417 = vrcp.pop %v396
  %v418 = vmul.f32 1.0, %v417
  %v419 = vrcp.pop %v397
  %v420 = vmul.f32 1.0, %v419
  %v421 = vrcp.pop %v398
  %v422 = vmul.f32 1.0, %v421
  %v423 = vrcp.pop %v399
  %v424 = vmul.f32 1.0, %v423
  %v425 = vrcp.pop %v400
  %v426 = vmul.f32 1.0, %v425
  %v427 = vrcp.pop %v401
  %v428 = vmul.f32 1.0, %v427
  %v429 = vrcp.pop %v402
  %v430 = vmul.f32 1.0, %v429
  %v431 = vrcp.pop %v403
  %v432 = vmul.f32 1.0, %v431
  %v433 = vrcp.pop %v404
  %v434 = vmul.f32 1.0, %v433
  %v435 = vrcp.pop %v405
  %v436 = vmul.f32 1.0, %v435
  %v437 = vrcp.pop %v406
  %v438 = vmul.f32 1.0, %v437
  %439 = vst [vmem:[%s3] sm:$0xff] %v408
  %440 = vst [vmem:[%s3 + $0x8] sm:$0xff] %v410
  %441 = vst [vmem:[%s3 + $0x10] sm:$0xff] %v412
  %442 = vst [vmem:[%s3 + $0x18] sm:$0xff] %v414
  %443 = vst [vmem:[%s3 + $0x20] sm:$0xff] %v416
  %444 = vst [vmem:[%s3 + $0x28] sm:$0xff] %v418
  %445 = vst [vmem:[%s3 + $0x30] sm:$0xff] %v420
  %446 = vst [vmem:[%s3 + $0x38] sm:$0xff] %v422
  %447 = vst [vmem:[%s3 + $0x40] sm:$0xff] %v424
  %448 = vst [vmem:[%s3 + $0x48] sm:$0xff] %v426
  %449 = vst [vmem:[%s3 + $0x50] sm:$0xff] %v428
  %450 = vst [vmem:[%s3 + $0x58] sm:$0xff] %v430
  %451 = vst [vmem:[%s3 + $0x60] sm:$0xff] %v432
  %452 = vst [vmem:[%s3 + $0x68] sm:$0xff] %v434
  %453 = vst [vmem:[%s3 + $0x70] sm:$0xff] %v436
  %454 = vst [vmem:[%s3 + $0x78] sm:$0xff] %v438
  // Predicated region
  $region14: #{forward.37} parent=0 // pred_check
    _
  $region15: #{forward.37} parent=0 // pred_check_branch
    %456 = sbr.rel (0) target = $region17
  $region16: #{forward.37} parent=0 // pred_region
    _
  $region17: #{forward.37} parent=0 // pred_fallthru
    _
  // Predicated region
  $region18: #{forward.37} parent=0 // pred_check
    _
  $region19: #{forward.37} parent=0 // pred_check_branch
    %458 = sbr.rel (0) target = $region21
  $region20: #{forward.37} parent=0 // pred_region
    _
  $region21: #{forward.37} parent=0 // pred_fallthru
    _

// kernel: forward.41
$region0: #{forward.41}
  #allocation0 [shape = 'u32[]', space=smem, size = 0x4, offset = 0x4, fixed_abs, tag = 'smem constant byte address 0x4 - core index']
  #allocation1 [shape = 'u32[144,128]{1,0:T(1,128)}', space=vmem, size = 0x12000, scoped, tag = 'internal scratch']
  %s0 = inlined_call_operand.vmem [shape: bf16[2,16,32], index: 0, kind: input, shape index: {}]
  %s1 = inlined_call_operand.vmem [shape: bf16[32,128], index: 1, kind: input, shape index: {}]
  %s2 = inlined_call_operand.vmem [shape: bf16[32,128], index: 2, kind: input, shape index: {}]
  %s3 = inlined_call_operand.vmem [shape: bf16[32,128], index: 3, kind: input, shape index: {}]
  %s4 = inlined_call_operand.vmem [shape: f32[2,16,32], index: 4, kind: output, shape index: {}]
  %s5 = sld [smem:[#allocation0]]
  $region49: #{forward.41} parent=0
    _
  %s7 = ssub.s32 1, %s5
  %s8 = scalar_select 0, %s7, %s5
  loop: start=0, step=1, limit=4
  $region2: #{forward.41} parent=0 // loop_pre_header
    _
  $region3: #{forward.41} parent=0 // loop_header
    %s10 = sphi 0, %s14
    %p11 = scmp.ge.s32.totalorder %s10, 4
    %s20 = sphi 0, %s22
    %s23 = sphi 0, %s20
    %s24 = sphi 0, %s23
    %s40 = sphi 0, %s24
    %s44 = sphi 0, %s44
    %s46 = sphi 0, %s44
    %s47 = sphi 0, %s46
    %s61 = sphi 0, %s47
    %s65 = sphi 0, %s65
    %s67 = sphi 0, %s65
    %s68 = sphi 0, %s67
    %s82 = sphi 0, %s68
    %s86 = sphi 0, %s86
    %s88 = sphi 0, %s86
    %s89 = sphi 0, %s88
    %s103 = sphi 0, %s89
    %s109 = sphi 0, %s111
    %s112 = sphi 0, %s109
    %s113 = sphi 0, %s112
    %s129 = sphi 0, %s113
  $region4: #{forward.41} parent=0 // loop_header_branch
    %13 = sbr.rel (%p11) target = $region8
  $region5: #{forward.41} parent=0 // loop_body
    %s15 = ssub.s32 %s10, 1
    %s16 = ssub.s32 %s10, 2
    %s17 = sadd.s32 %s10, 1
    %s18 = ssub.s32 %s10, %s17
    %p19 = scmp.eq.s32.totalorder %s18, 0
    %s21 = sadd.s32 %s20, 1
    %s22 = scalar_select %p19, %s20, %s21
    %p25 = pneg %p19
    %p26 = scmp.eq.s32.totalorder %s10, 1
    %p27 = por %p25, %p26
    %p28 = scmp.ne.s32.totalorder %s20, %s23
    %p29 = scmp.eq.s32.totalorder %s10, 0
    %p30 = por %p28, %p29
    %p31 = scmp.ne.s32.totalorder %s20, %s23
    %p32 = scmp.eq.s32.totalorder %s15, 1
    %p33 = por %p31, %p32
    %p34 = scmp.ne.s32.totalorder %s23, %s24
    %p35 = scmp.eq.s32.totalorder %s15, 0
    %p36 = por %p34, %p35
    %p37 = scmp.ne.s32.totalorder %s23, %s24
    %p38 = scmp.eq.s32.totalorder %s16, 1
    %p39 = por %p37, %p38
    %p41 = scmp.ne.s32.totalorder %s24, %s40
    %p42 = scmp.eq.s32.totalorder %s16, 0
    %p43 = por %p41, %p42
    %s45 = sadd.s32 %s44, 1
    %p48 = scmp.eq.s32.totalorder %s10, 1
    %p49 = scmp.ne.s32.totalorder %s44, %s46
    %p50 = scmp.eq.s32.totalorder %s10, 0
    %p51 = por %p49, %p50
    %p52 = scmp.ne.s32.totalorder %s44, %s46
    %p53 = scmp.eq.s32.totalorder %s15, 1
    %p54 = por %p52, %p53
    %p55 = scmp.ne.s32.totalorder %s46, %s47
    %p56 = scmp.eq.s32.totalorder %s15, 0
    %p57 = por %p55, %p56
    %p58 = scmp.ne.s32.totalorder %s46, %s47
    %p59 = scmp.eq.s32.totalorder %s16, 1
    %p60 = por %p58, %p59
    %p62 = scmp.ne.s32.totalorder %s47, %s61
    %p63 = scmp.eq.s32.totalorder %s16, 0
    %p64 = por %p62, %p63
    %s66 = sadd.s32 %s65, 1
    %p69 = scmp.eq.s32.totalorder %s10, 1
    %p70 = scmp.ne.s32.totalorder %s65, %s67
    %p71 = scmp.eq.s32.totalorder %s10, 0
    %p72 = por %p70, %p71
    %p73 = scmp.ne.s32.totalorder %s65, %s67
    %p74 = scmp.eq.s32.totalorder %s15, 1
    %p75 = por %p73, %p74
    %p76 = scmp.ne.s32.totalorder %s67, %s68
    %p77 = scmp.eq.s32.totalorder %s15, 0
    %p78 = por %p76, %p77
    %p79 = scmp.ne.s32.totalorder %s67, %s68
    %p80 = scmp.eq.s32.totalorder %s16, 1
    %p81 = por %p79, %p80
    %p83 = scmp.ne.s32.totalorder %s68, %s82
    %p84 = scmp.eq.s32.totalorder %s16, 0
    %p85 = por %p83, %p84
    %s87 = sadd.s32 %s86, 1
    %p90 = scmp.eq.s32.totalorder %s10, 1
    %p91 = scmp.ne.s32.totalorder %s86, %s88
    %p92 = scmp.eq.s32.totalorder %s10, 0
    %p93 = por %p91, %p92
    %p94 = scmp.ne.s32.totalorder %s86, %s88
    %p95 = scmp.eq.s32.totalorder %s15, 1
    %p96 = por %p94, %p95
    %p97 = scmp.ne.s32.totalorder %s88, %s89
    %p98 = scmp.eq.s32.totalorder %s15, 0
    %p99 = por %p97, %p98
    %p100 = scmp.ne.s32.totalorder %s88, %s89
    %p101 = scmp.eq.s32.totalorder %s16, 1
    %p102 = por %p100, %p101
    %p104 = scmp.ne.s32.totalorder %s89, %s103
    %p105 = scmp.eq.s32.totalorder %s16, 0
    %p106 = por %p104, %p105
    %s107 = ssub.s32 %s10, %s17
    %p108 = scmp.eq.s32.totalorder %s107, 0
    %s110 = sadd.s32 %s109, 1
    %s111 = scalar_select %p108, %s109, %s110
    %p114 = pneg %p108
    %p115 = scmp.eq.s32.totalorder %s10, 1
    %p116 = por %p114, %p115
    %p117 = scmp.ne.s32.totalorder %s109, %s112
    %p118 = scmp.eq.s32.totalorder %s10, 0
    %p119 = por %p117, %p118
    %p120 = scmp.ne.s32.totalorder %s109, %s112
    %p121 = scmp.eq.s32.totalorder %s15, 1
    %p122 = por %p120, %p121
    %p123 = scmp.ne.s32.totalorder %s112, %s113
    %p124 = scmp.eq.s32.totalorder %s15, 0
    %p125 = por %p123, %p124
    %p126 = scmp.ne.s32.totalorder %s112, %s113
    %p127 = scmp.eq.s32.totalorder %s16, 1
    %p128 = por %p126, %p127
    %p130 = scmp.ne.s32.totalorder %s113, %s129
    %p131 = scmp.eq.s32.totalorder %s16, 0
    %p132 = por %p130, %p131
    %p133 = scmp.le.s32.totalorder 1, %s10
    %p134 = scmp.lt.s32.totalorder %s10, 3
    %p135 = pnand %p133, %p134
    %p136 = pneg %p135
    // Predicated region
    $region9: #{forward.41} parent=5 // pred_check
      _
    $region10: #{forward.41} parent=5 // pred_check_branch
      %138 = sbr.rel (%p135) target = $region12
    $region11: #{forward.41} parent=5 // pred_region
      %s139 = ssub.s32 %s10, 1
      // Predicated region
      $region13: #{forward.41} parent=11 // pred_check
        %p140 = pneg %p57
      $region14: #{forward.41} parent=11 // pred_check_branch
        %142 = sbr.rel (%p140) target = $region16
      $region15: #{forward.41} parent=11 // pred_region
        _
      $region16: #{forward.41} parent=11 // pred_fallthru
        _
      // Predicated region
      $region17: #{forward.41} parent=11 // pred_check
        %p143 = pneg %p78
      $region18: #{forward.41} parent=11 // pred_check_branch
        %145 = sbr.rel (%p143) target = $region20
      $region19: #{forward.41} parent=11 // pred_region
        _
      $region20: #{forward.41} parent=11 // pred_fallthru
        _
      // Predicated region
      $region21: #{forward.41} parent=11 // pred_check
        %p146 = pneg %p99
      $region22: #{forward.41} parent=11 // pred_check_branch
        %148 = sbr.rel (%p146) target = $region24
      $region23: #{forward.41} parent=11 // pred_region
        _
      $region24: #{forward.41} parent=11 // pred_fallthru
        _
    $region12: #{forward.41} parent=5 // pred_fallthru
      _
    %p149 = scmp.lt.s32.totalorder %s10, 2
    // Predicated region
    $region25: #{forward.41} parent=5 // pred_check
      %p150 = pneg %p149
    $region26: #{forward.41} parent=5 // pred_check_branch
      %152 = sbr.rel (%p150) target = $region28
    $region27: #{forward.41} parent=5 // pred_region
      // Predicated region
      $region29: #{forward.41} parent=27 // pred_check
        %p153 = pneg %p30
      $region30: #{forward.41} parent=27 // pred_check_branch
        %155 = sbr.rel (%p153) target = $region32
      $region31: #{forward.41} parent=27 // pred_region
        %p156 = scmp.lt.s32.totalorder %s10, 1
        %s157 = scalar_select %p156, %s10, 1
        %s158 = smul.addr %s157, 2
        %s159 = smul.addr %s158, 4
        %s160 = scalar_lea.vmem %s0, %s159
      $region32: #{forward.41} parent=27 // pred_fallthru
        _
    $region28: #{forward.41} parent=5 // pred_fallthru
      _
    %p161 = scmp.le.s32.totalorder 1, %s10
    %p162 = scmp.lt.s32.totalorder %s10, 3
    %p163 = pnand %p161, %p162
    %p164 = pneg %p163
    // Predicated region
    $region33: #{forward.41} parent=5 // pred_check
      _
    $region34: #{forward.41} parent=5 // pred_check_branch
      %166 = sbr.rel (%p163) target = $region36
    $region35: #{forward.41} parent=5 // pred_region
      %s167 = ssub.s32 %s10, 1
      %p168 = scmp.lt.s32.totalorder %s15, 1
      %s169 = scalar_select %p168, %s15, 1
      %s170 = smul.addr %s169, 2
      %s171 = smul.addr %s170, 4
      %s172 = scalar_lea.vmem %s0, %s171
      %p173 = pneg %p36
      %p174 = pneg %p33
      %p175 = pneg %p57
      %p176 = pneg %p54
      %p177 = pneg %p78
      %p178 = pneg %p75
      %p179 = pneg %p99
      %p180 = pneg %p96
      %p181 = pneg %p125
      %p182 = pneg %p122
      %p183 = scmp.lt.s32.totalorder %s15, 1
      %s184 = scalar_select %p183, %s15, 1
      %s185 = smul.addr %s184, 2
      %s186 = smul.addr %s185, 8
      %s187 = scalar_lea.vmem %s4, %s186
      %p188 = scmp.lt.s32.totalorder %s15, 1
      %s189 = scalar_select %p188, %s15, 1
      %s190 = smul.addr %s189, 2
      %s191 = smul.addr %s190, 4
      %s192 = scalar_lea.vmem %s0, %s191
      %p193 = scmp.lt.s32.totalorder %s15, 1
      %s194 = scalar_select %p193, %s15, 1
      %s195 = smul.addr %s194, 2
      %s196 = smul.addr %s195, 8
      %s197 = scalar_lea.vmem %s4, %s196
      %v199 = vld [vmem:[%s192] sm:$0xf]
      %v200 = vld [vmem:[%s192 + $0x4] sm:$0xf]
      %v201 = vld [vmem:[%s1] sm:$0xf]
      %v202 = vld [vmem:[%s1 + $0x4] sm:$0xf]
      %v203 = vld [vmem:[%s1 + $0x8] sm:$0xf]
      %v204 = vld [vmem:[%s1 + $0xc] sm:$0xf]
      %v207 = vunpack.c.l.b16 %v199
      %v208 = vunpack.c.l.b16 %v200
      %v209 = vpack.c.b16 %v208, %v207
      %v214 = vunpack.c.l.b16 %v201
      %v215 = vunpack.c.l.b16 %v202
      %v216 = vunpack.c.l.b16 %v203
      %v217 = vunpack.c.l.b16 %v204
      %v218 = vpack.c.b16 %v215, %v214
      %v219 = vpack.c.b16 %v217, %v216
      %vm222 = vcmask 261120
      %v224 = vsel %vm222, %v209, 0
      %226 = vmatprep.subr.bf16.mxu0 0
      %227 = vmatpush1.bf16.msra.mxu0 %v218
      %228 = vmatprep.subr.bf16.mxu0 0
      %229 = vmatpush1.bf16.msra.mxu0 %v219
      %230 = vmatprep.subr.bf16.mxu0 0
      %231 = vmatpush1.bf16.msra.mxu0 0
      %232 = vmatprep.subr.bf16.mxu0 0
      %233 = vmatpush1.bf16.msra.mxu0 0
      %234 = vmatprep.subr.bf16.mxu0 0
      %235 = vmatpush1.bf16.msra.mxu0 0
      %236 = vmatprep.subr.bf16.mxu0 0
      %237 = vmatpush1.bf16.msra.mxu0 0
      %238 = vmatprep.subr.bf16.mxu0 0
      %239 = vmatpush1.bf16.msra.mxu0 0
      %240 = vmatprep.subr.bf16.mxu0 0
      %241 = vmatpush1.bf16.msra.mxu0 0
      %242 = vmatprep.subr.bf16.mxu0 0
      %243 = vmatpush1.bf16.msra.mxu0 0
      %244 = vmatprep.subr.bf16.mxu0 0
      %245 = vmatpush1.bf16.msra.mxu0 0
      %246 = vmatprep.subr.bf16.mxu0 0
      %247 = vmatpush1.bf16.msra.mxu0 0
      %248 = vmatprep.subr.bf16.mxu0 0
      %249 = vmatpush1.bf16.msra.mxu0 0
      %250 = vmatprep.subr.bf16.mxu0 0
      %251 = vmatpush1.bf16.msra.mxu0 0
      %252 = vmatprep.subr.bf16.mxu0 0
      %253 = vmatpush1.bf16.msra.mxu0 0
      %254 = vmatprep.subr.bf16.mxu0 0
      %255 = vmatpush1.bf16.msra.mxu0 0
      %256 = vmatprep.subr.bf16.mxu0 0
      %257 = vmatpush1.bf16.msra.mxu0 0
      %258 = vmatprep.mubr.bf16.mxu0 0
      %259 = vmatmul.mubr.bf16.gmra.mrb[0].mxu0 %v224
      %v260 = vpop.f32.mrb[0].mxu0
      %v261 = vadd.f32 0.0, %v260
      %v262 = vpop.f32.mrb[0].mxu0
      %v263 = vpop.f32.mrb[0].mxu0
      %v264 = vadd.f32 0.0, %v263
      %v265 = vpop.f32.mrb[0].mxu0
      %266 = vdwg.mxu0
      %v267 = vld [vmem:[%s2] sm:$0xf]
      %v268 = vld [vmem:[%s2 + $0x4] sm:$0xf]
      %v269 = vld [vmem:[%s2 + $0x8] sm:$0xf]
      %v270 = vld [vmem:[%s2 + $0xc] sm:$0xf]
      %v275 = vunpack.c.l.b16 %v267
      %v276 = vunpack.c.l.b16 %v268
      %v277 = vunpack.c.l.b16 %v269
      %v278 = vunpack.c.l.b16 %v270
      %v279 = vpack.c.b16 %v276, %v275
      %v280 = vpack.c.b16 %v278, %v277
      %283 = vmatprep.subr.bf16.mxu0 0
      %284 = vmatpush1.bf16.msra.mxu0 %v279
      %285 = vmatprep.subr.bf16.mxu0 0
      %286 = vmatpush1.bf16.msra.mxu0 %v280
      %287 = vmatprep.subr.bf16.mxu0 0
      %288 = vmatpush1.bf16.msra.mxu0 0
      %289 = vmatprep.subr.bf16.mxu0 0
      %290 = vmatpush1.bf16.msra.mxu0 0
      %291 = vmatprep.subr.bf16.mxu0 0
      %292 = vmatpush1.bf16.msra.mxu0 0
      %293 = vmatprep.subr.bf16.mxu0 0
      %294 = vmatpush1.bf16.msra.mxu0 0
      %295 = vmatprep.subr.bf16.mxu0 0
      %296 = vmatpush1.bf16.msra.mxu0 0
      %297 = vmatprep.subr.bf16.mxu0 0
      %298 = vmatpush1.bf16.msra.mxu0 0
      %299 = vmatprep.subr.bf16.mxu0 0
      %300 = vmatpush1.bf16.msra.mxu0 0
      %301 = vmatprep.subr.bf16.mxu0 0
      %302 = vmatpush1.bf16.msra.mxu0 0
      %303 = vmatprep.subr.bf16.mxu0 0
      %304 = vmatpush1.bf16.msra.mxu0 0
      %305 = vmatprep.subr.bf16.mxu0 0
      %306 = vmatpush1.bf16.msra.mxu0 0
      %307 = vmatprep.subr.bf16.mxu0 0
      %308 = vmatpush1.bf16.msra.mxu0 0
      %309 = vmatprep.subr.bf16.mxu0 0
      %310 = vmatpush1.bf16.msra.mxu0 0
      %311 = vmatprep.subr.bf16.mxu0 0
      %312 = vmatpush1.bf16.msra.mxu0 0
      %313 = vmatprep.subr.bf16.mxu0 0
      %314 = vmatpush1.bf16.msra.mxu0 0
      %315 = vmatprep.mubr.bf16.mxu0 0
      %316 = vmatmul.mubr.bf16.gmra.mrb[0].mxu0 %v224
      %v317 = vpop.f32.mrb[0].mxu0
      %v318 = vadd.f32 0.0, %v317
      %v319 = vpop.f32.mrb[0].mxu0
      %v320 = vpop.f32.mrb[0].mxu0
      %v321 = vadd.f32 0.0, %v320
      %v322 = vpop.f32.mrb[0].mxu0
      %323 = vdwg.mxu0
      %v324 = vld [vmem:[%s3] sm:$0xf]
      %v325 = vld [vmem:[%s3 + $0x4] sm:$0xf]
      %v326 = vld [vmem:[%s3 + $0x8] sm:$0xf]
      %v327 = vld [vmem:[%s3 + $0xc] sm:$0xf]
      %v332 = vunpack.c.l.b16 %v324
      %v333 = vunpack.c.l.b16 %v325
      %v334 = vunpack.c.l.b16 %v326
      %v335 = vunpack.c.l.b16 %v327
      %v336 = vpack.c.b16 %v333, %v332
      %v337 = vpack.c.b16 %v335, %v334
      %340 = vmatprep.subr.bf16.mxu0 0
      %341 = vmatpush1.bf16.msra.mxu0 %v336
      %342 = vmatprep.subr.bf16.mxu0 0
      %343 = vmatpush1.bf16.msra.mxu0 %v337
      %344 = vmatprep.subr.bf16.mxu0 0
      %345 = vmatpush1.bf16.msra.mxu0 0
      %346 = vmatprep.subr.bf16.mxu0 0
      %347 = vmatpush1.bf16.msra.mxu0 0
      %348 = vmatprep.subr.bf16.mxu0 0
      %349 = vmatpush1.bf16.msra.mxu0 0
      %350 = vmatprep.subr.bf16.mxu0 0
      %351 = vmatpush1.bf16.msra.mxu0 0
      %352 = vmatprep.subr.bf16.mxu0 0
      %353 = vmatpush1.bf16.msra.mxu0 0
      %354 = vmatprep.subr.bf16.mxu0 0
      %355 = vmatpush1.bf16.msra.mxu0 0
      %356 = vmatprep.subr.bf16.mxu0 0
      %357 = vmatpush1.bf16.msra.mxu0 0
      %358 = vmatprep.subr.bf16.mxu0 0
      %359 = vmatpush1.bf16.msra.mxu0 0
      %360 = vmatprep.subr.bf16.mxu0 0
      %361 = vmatpush1.bf16.msra.mxu0 0
      %362 = vmatprep.subr.bf16.mxu0 0
      %363 = vmatpush1.bf16.msra.mxu0 0
      %364 = vmatprep.subr.bf16.mxu0 0
      %365 = vmatpush1.bf16.msra.mxu0 0
      %366 = vmatprep.subr.bf16.mxu0 0
      %367 = vmatpush1.bf16.msra.mxu0 0
      %368 = vmatprep.subr.bf16.mxu0 0
      %369 = vmatpush1.bf16.msra.mxu0 0
      %370 = vmatprep.subr.bf16.mxu0 0
      %371 = vmatpush1.bf16.msra.mxu0 0
      %372 = vmatprep.mubr.bf16.mxu0 0
      %373 = vmatmul.mubr.bf16.gmra.mrb[0].mxu0 %v224
      %v374 = vpop.f32.mrb[0].mxu0
      %v375 = vadd.f32 0.0, %v374
      %v376 = vpop.f32.mrb[0].mxu0
      %v377 = vpop.f32.mrb[0].mxu0
      %v378 = vadd.f32 0.0, %v377
      %v379 = vpop.f32.mrb[0].mxu0
      %380 = vdwg.mxu0
      %v381 = vpack.c.bf16 %v264, %v261
      %v382 = vpack.c.bf16 %v321, %v318
      %383 = vmatprep.subr.bf16.mxu0 0
      %384 = vmatpush1.bf16.xpose.msra.mxu0 %v382
      %385 = vmatprep.subr.bf16.mxu0 0
      %386 = vmatpush1.bf16.xpose.msra.mxu0 0
      %387 = vmatprep.subr.bf16.mxu0 0
      %388 = vmatpush1.bf16.xpose.msra.mxu0 0
      %389 = vmatprep.subr.bf16.mxu0 0
      %390 = vmatpush1.bf16.xpose.msra.mxu0 0
      %391 = vmatprep.subr.bf16.mxu0 0
      %392 = vmatpush1.bf16.xpose.msra.mxu0 0
      %393 = vmatprep.subr.bf16.mxu0 0
      %394 = vmatpush1.bf16.xpose.msra.mxu0 0
      %395 = vmatprep.subr.bf16.mxu0 0
      %396 = vmatpush1.bf16.xpose.msra.mxu0 0
      %397 = vmatprep.subr.bf16.mxu0 0
      %398 = vmatpush1.bf16.xpose.msra.mxu0 0
      %399 = vmatprep.subr.bf16.mxu0 0
      %400 = vmatpush1.bf16.xpose.msra.mxu0 0
      %401 = vmatprep.subr.bf16.mxu0 0
      %402 = vmatpush1.bf16.xpose.msra.mxu0 0
      %403 = vmatprep.subr.bf16.mxu0 0
      %404 = vmatpush1.bf16.xpose.msra.mxu0 0
      %405 = vmatprep.subr.bf16.mxu0 0
      %406 = vmatpush1.bf16.xpose.msra.mxu0 0
      %407 = vmatprep.subr.bf16.mxu0 0
      %408 = vmatpush1.bf16.xpose.msra.mxu0 0
      %409 = vmatprep.subr.bf16.mxu0 0
      %410 = vmatpush1.bf16.xpose.msra.mxu0 0
      %411 = vmatprep.subr.bf16.mxu0 0
      %412 = vmatpush1.bf16.xpose.msra.mxu0 0
      %413 = vmatprep.subr.bf16.mxu0 0
      %414 = vmatpush1.bf16.xpose.msra.mxu0 0
      %415 = vmatprep.mubr.bf16.mxu0 0
      %416 = vmatmul.mubr.bf16.gmra.mrb[0].mxu0 %v381
      %v417 = vpop.f32.mrb[0].mxu0
      %v418 = vadd.f32 0.0, %v417
      %v419 = vpop.f32.mrb[0].mxu0
      %v420 = vpop.f32.mrb[0].mxu0
      %v421 = vadd.f32 0.0, %v420
      %v422 = vpop.f32.mrb[0].mxu0
      %423 = vdwg.mxu0
      %vm424 = vcmask 130048
      %v425 = vsel %vm424, %v418, -inf
      %426 = vmax.xlane.f32.xlu0 %v425
      %v427 = vpop.xlane.xlu0 %426
      %v428 = vsel %vm424, %v421, -inf
      %429 = vmax.xlane.f32.xlu0 %v428
      %v430 = vpop.xlane.xlu0 %429
      %v431 = vsub.f32 %v418, %v427
      %v432 = vsub.f32 %v421, %v430
      %v433 = vmul.f32 %v431, 1.442695
      %v434 = vpow.pop %v433
      %v435 = vmul.f32 %v432, 1.442695
      %v436 = vpow.pop %v435
      %v437 = vsel %vm424, %v434, 0.0
      %438 = vadd.xlane.f32.xlu0 %v437
      %v439 = vpop.xlane.xlu0 %438
      %v440 = vsel %vm424, %v436, 0.0
      %441 = vadd.xlane.f32.xlu0 %v440
      %v442 = vpop.xlane.xlu0 %441
      %v443 = vrcp.pop %v439
      %v444 = vrcp.pop %v442
      %v445 = vmul.f32 %v434, %v443
      %v446 = vmul.f32 %v436, %v444
      %v447 = vpack.c.bf16 %v446, %v445
      %v448 = vpack.c.bf16 %v378, %v375
      %v450 = vsel %vm424, %v447, 0
      %452 = vmatprep.subr.bf16.mxu0 0
      %453 = vmatpush1.bf16.msra.mxu0 %v448
      %454 = vmatprep.subr.bf16.mxu0 0
      %455 = vmatpush1.bf16.msra.mxu0 0
      %456 = vmatprep.subr.bf16.mxu0 0
      %457 = vmatpush1.bf16.msra.mxu0 0
      %458 = vmatprep.subr.bf16.mxu0 0
      %459 = vmatpush1.bf16.msra.mxu0 0
      %460 = vmatprep.subr.bf16.mxu0 0
      %461 = vmatpush1.bf16.msra.mxu0 0
      %462 = vmatprep.subr.bf16.mxu0 0
      %463 = vmatpush1.bf16.msra.mxu0 0
      %464 = vmatprep.subr.bf16.mxu0 0
      %465 = vmatpush1.bf16.msra.mxu0 0
      %466 = vmatprep.subr.bf16.mxu0 0
      %467 = vmatpush1.bf16.msra.mxu0 0
      %468 = vmatprep.subr.bf16.mxu0 0
      %469 = vmatpush1.bf16.msra.mxu0 0
      %470 = vmatprep.subr.bf16.mxu0 0
      %471 = vmatpush1.bf16.msra.mxu0 0
      %472 = vmatprep.subr.bf16.mxu0 0
      %473 = vmatpush1.bf16.msra.mxu0 0
      %474 = vmatprep.subr.bf16.mxu0 0
      %475 = vmatpush1.bf16.msra.mxu0 0
      %476 = vmatprep.subr.bf16.mxu0 0
      %477 = vmatpush1.bf16.msra.mxu0 0
      %478 = vmatprep.subr.bf16.mxu0 0
      %479 = vmatpush1.bf16.msra.mxu0 0
      %480 = vmatprep.subr.bf16.mxu0 0
      %481 = vmatpush1.bf16.msra.mxu0 0
      %482 = vmatprep.subr.bf16.mxu0 0
      %483 = vmatpush1.bf16.msra.mxu0 0
      %484 = vmatprep.mubr.bf16.mxu0 0
      %485 = vmatmul.mubr.bf16.gmra.mrb[0].mxu0 %v450
      %v486 = vpop.f32.mrb[0].mxu0
      %v487 = vadd.f32 0.0, %v486
      %v488 = vpop.f32.mrb[0].mxu0
      %v489 = vpop.f32.mrb[0].mxu0
      %v490 = vadd.f32 0.0, %v489
      %v491 = vpop.f32.mrb[0].mxu0
      %492 = vdwg.mxu0
      %v493 = vmul.f32 %v487, 0.5
      %v494 = vmul.f32 %v490, 0.5
      %v495 = vunpack.c.l.bf16 %v199
      %v496 = vunpack.c.l.bf16 %v200
      %v497 = vadd.f32 %v493, %v495
      %v498 = vadd.f32 %v494, %v496
      %499 = vst.msk [vmem:[%s197] sm:$0xff] %vm222, %v497
      %500 = vst.msk [vmem:[%s197 + $0x8] sm:$0xff] %vm222, %v498
      %p501 = scmp.lt.s32.totalorder %s15, 1
      %s502 = scalar_select %p501, %s15, 1
      %s503 = smul.addr %s502, 2
      %s504 = smul.addr %s503, 8
      %s505 = scalar_lea.vmem %s4, %s504
      // Predicated region
      $region37: #{forward.41} parent=35 // pred_check
        %p506 = pneg %p122
      $region38: #{forward.41} parent=35 // pred_check_branch
        %508 = sbr.rel (%p506) target = $region40
      $region39: #{forward.41} parent=35 // pred_region
        _
      $region40: #{forward.41} parent=35 // pred_fallthru
        _
    $region36: #{forward.41} parent=5 // pred_fallthru
      _
    %p509 = scmp.le.s32.totalorder 2, %s10
    // Predicated region
    $region41: #{forward.41} parent=5 // pred_check
      %p510 = pneg %p509
    $region42: #{forward.41} parent=5 // pred_check_branch
      %512 = sbr.rel (%p510) target = $region44
    $region43: #{forward.41} parent=5 // pred_region
      %s513 = ssub.s32 %s10, 2
      // Predicated region
      $region45: #{forward.41} parent=43 // pred_check
        %p514 = pneg %p128
      $region46: #{forward.41} parent=43 // pred_check_branch
        %516 = sbr.rel (%p514) target = $region48
      $region47: #{forward.41} parent=43 // pred_region
        %p517 = scmp.lt.s32.totalorder %s16, 1
        %s518 = scalar_select %p517, %s16, 1
        %s519 = smul.addr %s518, 2
        %s520 = smul.addr %s519, 8
        %s521 = scalar_lea.vmem %s4, %s520
      $region48: #{forward.41} parent=43 // pred_fallthru
        _
    $region44: #{forward.41} parent=5 // pred_fallthru
      _
  $region6: #{forward.41} parent=0 // loop_footer
    %s14 = sadd.s32 1, %s10
  $region7: #{forward.41} parent=0 // loop_footer_branch
    %9 = sbr.rel target = $region3
  $region8: #{forward.41} parent=0 // loop_exit
    _

// kernel: forward.43
$region0: #{forward.43}
  #allocation0 [shape = 'u32[]', space=smem, size = 0x4, offset = 0x4, fixed_abs, tag = 'smem constant byte address 0x4 - core index']
  #allocation1 [shape = 'u32[144,128]{1,0:T(1,128)}', space=vmem, size = 0x12000, scoped, tag = 'internal scratch']
  %s0 = inlined_call_operand.vmem [shape: bf16[50,256], index: 0, kind: input, shape index: {}]
  %s1 = inlined_call_operand.vmem [shape: bf16[256,128], index: 1, kind: input, shape index: {}]
  %s2 = inlined_call_operand.vmem [shape: f32[1,128], index: 2, kind: input, shape index: {}]
  %s3 = inlined_call_operand.vmem [shape: bf16[50,128], index: 3, kind: output, shape index: {}]
  %s4 = sld [smem:[#allocation0]]
  $region22: #{forward.43} parent=0
    _
  %s6 = ssub.s32 1, %s4
  %s7 = scalar_select 0, %s6, %s4
  // Predicated region
  $region2: #{forward.43} parent=0 // pred_check
    _
  $region3: #{forward.43} parent=0 // pred_check_branch
    %9 = sbr.rel (0) target = $region5
  $region4: #{forward.43} parent=0 // pred_region
    _
  $region5: #{forward.43} parent=0 // pred_fallthru
    _
  // Predicated region
  $region6: #{forward.43} parent=0 // pred_check
    _
  $region7: #{forward.43} parent=0 // pred_check_branch
    %11 = sbr.rel (0) target = $region9
  $region8: #{forward.43} parent=0 // pred_region
    _
  $region9: #{forward.43} parent=0 // pred_fallthru
    _
  // Predicated region
  $region10: #{forward.43} parent=0 // pred_check
    _
  $region11: #{forward.43} parent=0 // pred_check_branch
    %13 = sbr.rel (0) target = $region13
  $region12: #{forward.43} parent=0 // pred_region
    _
  $region13: #{forward.43} parent=0 // pred_fallthru
    _
  %v15 = vld [vmem:[%s0] sm:$0xff]
  %v16 = vld [vmem:[%s0 + $0x8] sm:$0xff]
  %v17 = vld [vmem:[%s0 + $0x10] sm:$0xff]
  %v18 = vld [vmem:[%s0 + $0x18] sm:$0xff]
  %v19 = vld [vmem:[%s0 + $0x20] sm:$0xff]
  %v20 = vld [vmem:[%s0 + $0x28] sm:$0xff]
  %v21 = vld [vmem:[%s0 + $0x30] sm:$0x11]
  %v22 = vld [vmem:[%s1] sm:$0xf]
  %v23 = vld [vmem:[%s1 + $0x4] sm:$0xf]
  %v24 = vld [vmem:[%s1 + $0x8] sm:$0xf]
  %v25 = vld [vmem:[%s1 + $0xc] sm:$0xf]
  %v26 = vld [vmem:[%s1 + $0x10] sm:$0xf]
  %v27 = vld [vmem:[%s1 + $0x14] sm:$0xf]
  %v28 = vld [vmem:[%s1 + $0x18] sm:$0xf]
  %v29 = vld [vmem:[%s1 + $0x1c] sm:$0xf]
  %v30 = vld [vmem:[%s1 + $0x20] sm:$0xf]
  %v31 = vld [vmem:[%s1 + $0x24] sm:$0xf]
  %v32 = vld [vmem:[%s1 + $0x28] sm:$0xf]
  %v33 = vld [vmem:[%s1 + $0x2c] sm:$0xf]
  %v34 = vld [vmem:[%s1 + $0x30] sm:$0xf]
  %v35 = vld [vmem:[%s1 + $0x34] sm:$0xf]
  %v36 = vld [vmem:[%s1 + $0x38] sm:$0xf]
  %v37 = vld [vmem:[%s1 + $0x3c] sm:$0xf]
  %v38 = vld [vmem:[%s1 + $0x40] sm:$0xf]
  %v39 = vld [vmem:[%s1 + $0x44] sm:$0xf]
  %v40 = vld [vmem:[%s1 + $0x48] sm:$0xf]
  %v41 = vld [vmem:[%s1 + $0x4c] sm:$0xf]
  %v42 = vld [vmem:[%s1 + $0x50] sm:$0xf]
  %v43 = vld [vmem:[%s1 + $0x54] sm:$0xf]
  %v44 = vld [vmem:[%s1 + $0x58] sm:$0xf]
  %v45 = vld [vmem:[%s1 + $0x5c] sm:$0xf]
  %v46 = vld [vmem:[%s1 + $0x60] sm:$0xf]
  %v47 = vld [vmem:[%s1 + $0x64] sm:$0xf]
  %v48 = vld [vmem:[%s1 + $0x68] sm:$0xf]
  %v49 = vld [vmem:[%s1 + $0x6c] sm:$0xf]
  %v50 = vld [vmem:[%s1 + $0x70] sm:$0xf]
  %v51 = vld [vmem:[%s1 + $0x74] sm:$0xf]
  %v52 = vld [vmem:[%s1 + $0x78] sm:$0xf]
  %v53 = vld [vmem:[%s1 + $0x7c] sm:$0xf]
  %v54 = vld [vmem:[%s2] sm:$0x1]
  %v56 = vlaneseq
  %v57 = vshrl.u32 %v56, 7
  %v58 = vsub.s32 0, %v57
  %v59 = vrot.slane %v54, %v58
  %v68 = vunpack.c.l.b16 %v15
  %v69 = vunpack.c.h.b16 %v15
  %v70 = vunpack.c.l.b16 %v16
  %v71 = vunpack.c.h.b16 %v16
  %v72 = vunpack.c.l.b16 %v17
  %v73 = vunpack.c.h.b16 %v17
  %v74 = vunpack.c.l.b16 %v18
  %v75 = vunpack.c.h.b16 %v18
  %v76 = vunpack.c.l.b16 %v19
  %v77 = vunpack.c.h.b16 %v19
  %v78 = vunpack.c.l.b16 %v20
  %v79 = vunpack.c.h.b16 %v20
  %v80 = vunpack.c.l.b16 %v21
  %v81 = vunpack.c.h.b16 %v21
  %v82 = vpack.c.b16 %v70, %v68
  %v83 = vpack.c.b16 %v71, %v69
  %v84 = vpack.c.b16 %v74, %v72
  %v85 = vpack.c.b16 %v75, %v73
  %v86 = vpack.c.b16 %v78, %v76
  %v87 = vpack.c.b16 %v79, %v77
  %v88 = vpack.c.b16 %v80, %v80
  %v89 = vpack.c.b16 %v81, %v81
  %v130 = vunpack.c.l.b16 %v22
  %v131 = vunpack.c.l.b16 %v23
  %v132 = vunpack.c.l.b16 %v24
  %v133 = vunpack.c.l.b16 %v25
  %v134 = vunpack.c.l.b16 %v26
  %v135 = vunpack.c.l.b16 %v27
  %v136 = vunpack.c.l.b16 %v28
  %v137 = vunpack.c.l.b16 %v29
  %v138 = vunpack.c.l.b16 %v30
  %v139 = vunpack.c.l.b16 %v31
  %v140 = vunpack.c.l.b16 %v32
  %v141 = vunpack.c.l.b16 %v33
  %v142 = vunpack.c.l.b16 %v34
  %v143 = vunpack.c.l.b16 %v35
  %v144 = vunpack.c.l.b16 %v36
  %v145 = vunpack.c.l.b16 %v37
  %v146 = vunpack.c.l.b16 %v38
  %v147 = vunpack.c.l.b16 %v39
  %v148 = vunpack.c.l.b16 %v40
  %v149 = vunpack.c.l.b16 %v41
  %v150 = vunpack.c.l.b16 %v42
  %v151 = vunpack.c.l.b16 %v43
  %v152 = vunpack.c.l.b16 %v44
  %v153 = vunpack.c.l.b16 %v45
  %v154 = vunpack.c.l.b16 %v46
  %v155 = vunpack.c.l.b16 %v47
  %v156 = vunpack.c.l.b16 %v48
  %v157 = vunpack.c.l.b16 %v49
  %v158 = vunpack.c.l.b16 %v50
  %v159 = vunpack.c.l.b16 %v51
  %v160 = vunpack.c.l.b16 %v52
  %v161 = vunpack.c.l.b16 %v53
  %v162 = vpack.c.b16 %v131, %v130
  %v163 = vpack.c.b16 %v133, %v132
  %v164 = vpack.c.b16 %v135, %v134
  %v165 = vpack.c.b16 %v137, %v136
  %v166 = vpack.c.b16 %v139, %v138
  %v167 = vpack.c.b16 %v141, %v140
  %v168 = vpack.c.b16 %v143, %v142
  %v169 = vpack.c.b16 %v145, %v144
  %v170 = vpack.c.b16 %v147, %v146
  %v171 = vpack.c.b16 %v149, %v148
  %v172 = vpack.c.b16 %v151, %v150
  %v173 = vpack.c.b16 %v153, %v152
  %v174 = vpack.c.b16 %v155, %v154
  %v175 = vpack.c.b16 %v157, %v156
  %v176 = vpack.c.b16 %v159, %v158
  %v177 = vpack.c.b16 %v161, %v160
  %194 = vmatprep.subr.bf16.mxu0 0
  %195 = vmatpush1.bf16.msra.mxu0 %v162
  %196 = vmatprep.subr.bf16.mxu0 0
  %197 = vmatpush1.bf16.msra.mxu0 %v163
  %198 = vmatprep.subr.bf16.mxu0 0
  %199 = vmatpush1.bf16.msra.mxu0 %v164
  %200 = vmatprep.subr.bf16.mxu0 0
  %201 = vmatpush1.bf16.msra.mxu0 %v165
  %202 = vmatprep.subr.bf16.mxu0 0
  %203 = vmatpush1.bf16.msra.mxu0 %v166
  %204 = vmatprep.subr.bf16.mxu0 0
  %205 = vmatpush1.bf16.msra.mxu0 %v167
  %206 = vmatprep.subr.bf16.mxu0 0
  %207 = vmatpush1.bf16.msra.mxu0 %v168
  %208 = vmatprep.subr.bf16.mxu0 0
  %209 = vmatpush1.bf16.msra.mxu0 %v169
  %210 = vmatprep.subr.bf16.mxu0 0
  %211 = vmatpush1.bf16.msra.mxu0 %v170
  %212 = vmatprep.subr.bf16.mxu0 0
  %213 = vmatpush1.bf16.msra.mxu0 %v171
  %214 = vmatprep.subr.bf16.mxu0 0
  %215 = vmatpush1.bf16.msra.mxu0 %v172
  %216 = vmatprep.subr.bf16.mxu0 0
  %217 = vmatpush1.bf16.msra.mxu0 %v173
  %218 = vmatprep.subr.bf16.mxu0 0
  %219 = vmatpush1.bf16.msra.mxu0 %v174
  %220 = vmatprep.subr.bf16.mxu0 0
  %221 = vmatpush1.bf16.msra.mxu0 %v175
  %222 = vmatprep.subr.bf16.mxu0 0
  %223 = vmatpush1.bf16.msra.mxu0 %v176
  %224 = vmatprep.subr.bf16.mxu0 0
  %225 = vmatpush1.bf16.msra.mxu0 %v177
  %226 = vmatprep.mubr.bf16.mxu0 %v83
  %227 = vmatmul.mubr.bf16.gmra.mrb[0].mxu0 %v82
  %v228 = vpop.f32.mrb[0].mxu0
  %v229 = vadd.f32 %v59, %v228
  %v230 = vpop.f32.mrb[0].mxu0
  %v231 = vpop.f32.mrb[0].mxu0
  %v232 = vadd.f32 %v59, %v231
  %v233 = vpop.f32.mrb[0].mxu0
  %234 = vmatprep.mubr.bf16.mxu0 %v85
  %235 = vmatmul.mubr.bf16.gmra.mrb[0].mxu0 %v84
  %v236 = vpop.f32.mrb[0].mxu0
  %v237 = vadd.f32 %v59, %v236
  %v238 = vpop.f32.mrb[0].mxu0
  %v239 = vpop.f32.mrb[0].mxu0
  %v240 = vadd.f32 %v59, %v239
  %v241 = vpop.f32.mrb[0].mxu0
  %242 = vmatprep.mubr.bf16.mxu0 %v87
  %243 = vmatmul.mubr.bf16.gmra.mrb[0].mxu0 %v86
  %v244 = vpop.f32.mrb[0].mxu0
  %v245 = vadd.f32 %v59, %v244
  %v246 = vpop.f32.mrb[0].mxu0
  %v247 = vpop.f32.mrb[0].mxu0
  %v248 = vadd.f32 %v59, %v247
  %v249 = vpop.f32.mrb[0].mxu0
  %250 = vmatprep.mubr.bf16.mxu0 %v89
  %251 = vmatmul.mubr.bf16.gmra.mrb[0].mxu0 %v88
  %v252 = vpop.f32.mrb[0].mxu0
  %v253 = vadd.f32 %v59, %v252
  %v254 = vpop.f32.mrb[0].mxu0
  %v255 = vpop.f32.mrb[0].mxu0
  %v256 = vpop.f32.mrb[0].mxu0
  %257 = vdwg.mxu0
  %v258 = vpack.c.bf16 %v232, %v229
  %v259 = vpack.c.bf16 %v240, %v237
  %v260 = vpack.c.bf16 %v248, %v245
  %v261 = vpack.c.bf16 %v253, %v253
  %v266 = vunpack.c.l.b16 %v258
  %v267 = vunpack.c.h.b16 %v258
  %v268 = vunpack.c.l.b16 %v259
  %v269 = vunpack.c.h.b16 %v259
  %v270 = vunpack.c.l.b16 %v260
  %v271 = vunpack.c.h.b16 %v260
  %v272 = vunpack.c.l.b16 %v261
  %v273 = vpack.c.b16 %v266, %v266
  %v274 = vpack.c.b16 %v267, %v267
  %v275 = vpack.c.b16 %v268, %v268
  %v276 = vpack.c.b16 %v269, %v269
  %v277 = vpack.c.b16 %v270, %v270
  %v278 = vpack.c.b16 %v271, %v271
  %v279 = vpack.c.b16 %v272, %v272
  %287 = vst [vmem:[%s3] sm:$0xf] %v273
  %288 = vst [vmem:[%s3 + $0x4] sm:$0xf] %v274
  %289 = vst [vmem:[%s3 + $0x8] sm:$0xf] %v275
  %290 = vst [vmem:[%s3 + $0xc] sm:$0xf] %v276
  %291 = vst [vmem:[%s3 + $0x10] sm:$0xf] %v277
  %292 = vst [vmem:[%s3 + $0x14] sm:$0xf] %v278
  %293 = vst [vmem:[%s3 + $0x18] sm:$0x1] %v279
  // Predicated region
  $region14: #{forward.43} parent=0 // pred_check
    _
  $region15: #{forward.43} parent=0 // pred_check_branch
    %295 = sbr.rel (0) target = $region17
  $region16: #{forward.43} parent=0 // pred_region
    _
  $region17: #{forward.43} parent=0 // pred_fallthru
    _
  // Predicated region
  $region18: #{forward.43} parent=0 // pred_check
    _
  $region19: #{forward.43} parent=0 // pred_check_branch
    %297 = sbr.rel (0) target = $region21
  $region20: #{forward.43} parent=0 // pred_region
    _
  $region21: #{forward.43} parent=0 // pred_fallthru
    _

// kernel: forward.44
$region0: #{forward.44}
  #allocation0 [shape = 'u32[]', space=smem, size = 0x4, offset = 0x4, fixed_abs, tag = 'smem constant byte address 0x4 - core index']
  #allocation1 [shape = 'u32[144,128]{1,0:T(1,128)}', space=vmem, size = 0x12000, scoped, tag = 'internal scratch']
  %s0 = inlined_call_operand.vmem [shape: bf16[2,64,32], index: 0, kind: input, shape index: {}]
  %s1 = inlined_call_operand.vmem [shape: f32[1,32], index: 1, kind: input, shape index: {}]
  %s2 = inlined_call_operand.vmem [shape: f32[1,32], index: 2, kind: input, shape index: {}]
  %s3 = inlined_call_operand.vmem [shape: f32[32,32], index: 3, kind: input, shape index: {}]
  %s4 = inlined_call_operand.vmem [shape: bf16[2,64,32], index: 4, kind: output, shape index: {}]
  %s5 = sld [smem:[#allocation0]]
  $region49: #{forward.44} parent=0
    _
  %s7 = ssub.s32 1, %s5
  %s8 = scalar_select 0, %s7, %s5
  loop: start=0, step=1, limit=4
  $region2: #{forward.44} parent=0 // loop_pre_header
    _
  $region3: #{forward.44} parent=0 // loop_header
    %s10 = sphi 0, %s14
    %p11 = scmp.ge.s32.totalorder %s10, 4
    %s20 = sphi 0, %s22
    %s23 = sphi 0, %s20
    %s24 = sphi 0, %s23
    %s40 = sphi 0, %s24
    %s44 = sphi 0, %s44
    %s46 = sphi 0, %s44
    %s47 = sphi 0, %s46
    %s61 = sphi 0, %s47
    %s65 = sphi 0, %s65
    %s67 = sphi 0, %s65
    %s68 = sphi 0, %s67
    %s82 = sphi 0, %s68
    %s86 = sphi 0, %s86
    %s88 = sphi 0, %s86
    %s89 = sphi 0, %s88
    %s103 = sphi 0, %s89
    %s109 = sphi 0, %s111
    %s112 = sphi 0, %s109
    %s113 = sphi 0, %s112
    %s129 = sphi 0, %s113
  $region4: #{forward.44} parent=0 // loop_header_branch
    %13 = sbr.rel (%p11) target = $region8
  $region5: #{forward.44} parent=0 // loop_body
    %s15 = ssub.s32 %s10, 1
    %s16 = ssub.s32 %s10, 2
    %s17 = sadd.s32 %s10, 1
    %s18 = ssub.s32 %s10, %s17
    %p19 = scmp.eq.s32.totalorder %s18, 0
    %s21 = sadd.s32 %s20, 1
    %s22 = scalar_select %p19, %s20, %s21
    %p25 = pneg %p19
    %p26 = scmp.eq.s32.totalorder %s10, 1
    %p27 = por %p25, %p26
    %p28 = scmp.ne.s32.totalorder %s20, %s23
    %p29 = scmp.eq.s32.totalorder %s10, 0
    %p30 = por %p28, %p29
    %p31 = scmp.ne.s32.totalorder %s20, %s23
    %p32 = scmp.eq.s32.totalorder %s15, 1
    %p33 = por %p31, %p32
    %p34 = scmp.ne.s32.totalorder %s23, %s24
    %p35 = scmp.eq.s32.totalorder %s15, 0
    %p36 = por %p34, %p35
    %p37 = scmp.ne.s32.totalorder %s23, %s24
    %p38 = scmp.eq.s32.totalorder %s16, 1
    %p39 = por %p37, %p38
    %p41 = scmp.ne.s32.totalorder %s24, %s40
    %p42 = scmp.eq.s32.totalorder %s16, 0
    %p43 = por %p41, %p42
    %s45 = sadd.s32 %s44, 1
    %p48 = scmp.eq.s32.totalorder %s10, 1
    %p49 = scmp.ne.s32.totalorder %s44, %s46
    %p50 = scmp.eq.s32.totalorder %s10, 0
    %p51 = por %p49, %p50
    %p52 = scmp.ne.s32.totalorder %s44, %s46
    %p53 = scmp.eq.s32.totalorder %s15, 1
    %p54 = por %p52, %p53
    %p55 = scmp.ne.s32.totalorder %s46, %s47
    %p56 = scmp.eq.s32.totalorder %s15, 0
    %p57 = por %p55, %p56
    %p58 = scmp.ne.s32.totalorder %s46, %s47
    %p59 = scmp.eq.s32.totalorder %s16, 1
    %p60 = por %p58, %p59
    %p62 = scmp.ne.s32.totalorder %s47, %s61
    %p63 = scmp.eq.s32.totalorder %s16, 0
    %p64 = por %p62, %p63
    %s66 = sadd.s32 %s65, 1
    %p69 = scmp.eq.s32.totalorder %s10, 1
    %p70 = scmp.ne.s32.totalorder %s65, %s67
    %p71 = scmp.eq.s32.totalorder %s10, 0
    %p72 = por %p70, %p71
    %p73 = scmp.ne.s32.totalorder %s65, %s67
    %p74 = scmp.eq.s32.totalorder %s15, 1
    %p75 = por %p73, %p74
    %p76 = scmp.ne.s32.totalorder %s67, %s68
    %p77 = scmp.eq.s32.totalorder %s15, 0
    %p78 = por %p76, %p77
    %p79 = scmp.ne.s32.totalorder %s67, %s68
    %p80 = scmp.eq.s32.totalorder %s16, 1
    %p81 = por %p79, %p80
    %p83 = scmp.ne.s32.totalorder %s68, %s82
    %p84 = scmp.eq.s32.totalorder %s16, 0
    %p85 = por %p83, %p84
    %s87 = sadd.s32 %s86, 1
    %p90 = scmp.eq.s32.totalorder %s10, 1
    %p91 = scmp.ne.s32.totalorder %s86, %s88
    %p92 = scmp.eq.s32.totalorder %s10, 0
    %p93 = por %p91, %p92
    %p94 = scmp.ne.s32.totalorder %s86, %s88
    %p95 = scmp.eq.s32.totalorder %s15, 1
    %p96 = por %p94, %p95
    %p97 = scmp.ne.s32.totalorder %s88, %s89
    %p98 = scmp.eq.s32.totalorder %s15, 0
    %p99 = por %p97, %p98
    %p100 = scmp.ne.s32.totalorder %s88, %s89
    %p101 = scmp.eq.s32.totalorder %s16, 1
    %p102 = por %p100, %p101
    %p104 = scmp.ne.s32.totalorder %s89, %s103
    %p105 = scmp.eq.s32.totalorder %s16, 0
    %p106 = por %p104, %p105
    %s107 = ssub.s32 %s10, %s17
    %p108 = scmp.eq.s32.totalorder %s107, 0
    %s110 = sadd.s32 %s109, 1
    %s111 = scalar_select %p108, %s109, %s110
    %p114 = pneg %p108
    %p115 = scmp.eq.s32.totalorder %s10, 1
    %p116 = por %p114, %p115
    %p117 = scmp.ne.s32.totalorder %s109, %s112
    %p118 = scmp.eq.s32.totalorder %s10, 0
    %p119 = por %p117, %p118
    %p120 = scmp.ne.s32.totalorder %s109, %s112
    %p121 = scmp.eq.s32.totalorder %s15, 1
    %p122 = por %p120, %p121
    %p123 = scmp.ne.s32.totalorder %s112, %s113
    %p124 = scmp.eq.s32.totalorder %s15, 0
    %p125 = por %p123, %p124
    %p126 = scmp.ne.s32.totalorder %s112, %s113
    %p127 = scmp.eq.s32.totalorder %s16, 1
    %p128 = por %p126, %p127
    %p130 = scmp.ne.s32.totalorder %s113, %s129
    %p131 = scmp.eq.s32.totalorder %s16, 0
    %p132 = por %p130, %p131
    %p133 = scmp.le.s32.totalorder 1, %s10
    %p134 = scmp.lt.s32.totalorder %s10, 3
    %p135 = pnand %p133, %p134
    %p136 = pneg %p135
    // Predicated region
    $region9: #{forward.44} parent=5 // pred_check
      _
    $region10: #{forward.44} parent=5 // pred_check_branch
      %138 = sbr.rel (%p135) target = $region12
    $region11: #{forward.44} parent=5 // pred_region
      %s139 = ssub.s32 %s10, 1
      // Predicated region
      $region13: #{forward.44} parent=11 // pred_check
        %p140 = pneg %p57
      $region14: #{forward.44} parent=11 // pred_check_branch
        %142 = sbr.rel (%p140) target = $region16
      $region15: #{forward.44} parent=11 // pred_region
        _
      $region16: #{forward.44} parent=11 // pred_fallthru
        _
      // Predicated region
      $region17: #{forward.44} parent=11 // pred_check
        %p143 = pneg %p78
      $region18: #{forward.44} parent=11 // pred_check_branch
        %145 = sbr.rel (%p143) target = $region20
      $region19: #{forward.44} parent=11 // pred_region
        _
      $region20: #{forward.44} parent=11 // pred_fallthru
        _
      // Predicated region
      $region21: #{forward.44} parent=11 // pred_check
        %p146 = pneg %p99
      $region22: #{forward.44} parent=11 // pred_check_branch
        %148 = sbr.rel (%p146) target = $region24
      $region23: #{forward.44} parent=11 // pred_region
        _
      $region24: #{forward.44} parent=11 // pred_fallthru
        _
    $region12: #{forward.44} parent=5 // pred_fallthru
      _
    %p149 = scmp.lt.s32.totalorder %s10, 2
    // Predicated region
    $region25: #{forward.44} parent=5 // pred_check
      %p150 = pneg %p149
    $region26: #{forward.44} parent=5 // pred_check_branch
      %152 = sbr.rel (%p150) target = $region28
    $region27: #{forward.44} parent=5 // pred_region
      // Predicated region
      $region29: #{forward.44} parent=27 // pred_check
        %p153 = pneg %p30
      $region30: #{forward.44} parent=27 // pred_check_branch
        %155 = sbr.rel (%p153) target = $region32
      $region31: #{forward.44} parent=27 // pred_region
        %p156 = scmp.lt.s32.totalorder %s10, 1
        %s157 = scalar_select %p156, %s10, 1
        %s158 = smul.addr %s157, 8
        %s159 = smul.addr %s158, 4
        %s160 = scalar_lea.vmem %s0, %s159
      $region32: #{forward.44} parent=27 // pred_fallthru
        _
    $region28: #{forward.44} parent=5 // pred_fallthru
      _
    %p161 = scmp.le.s32.totalorder 1, %s10
    %p162 = scmp.lt.s32.totalorder %s10, 3
    %p163 = pnand %p161, %p162
    %p164 = pneg %p163
    // Predicated region
    $region33: #{forward.44} parent=5 // pred_check
      _
    $region34: #{forward.44} parent=5 // pred_check_branch
      %166 = sbr.rel (%p163) target = $region36
    $region35: #{forward.44} parent=5 // pred_region
      %s167 = ssub.s32 %s10, 1
      %p168 = scmp.lt.s32.totalorder %s15, 1
      %s169 = scalar_select %p168, %s15, 1
      %s170 = smul.addr %s169, 8
      %s171 = smul.addr %s170, 4
      %s172 = scalar_lea.vmem %s0, %s171
      %p173 = pneg %p36
      %p174 = pneg %p33
      %p175 = pneg %p57
      %p176 = pneg %p54
      %p177 = pneg %p78
      %p178 = pneg %p75
      %p179 = pneg %p99
      %p180 = pneg %p96
      %p181 = pneg %p125
      %p182 = pneg %p122
      %p183 = scmp.lt.s32.totalorder %s15, 1
      %s184 = scalar_select %p183, %s15, 1
      %s185 = smul.addr %s184, 8
      %s186 = smul.addr %s185, 4
      %s187 = scalar_lea.vmem %s4, %s186
      %p188 = scmp.lt.s32.totalorder %s15, 1
      %s189 = scalar_select %p188, %s15, 1
      %s190 = smul.addr %s189, 8
      %s191 = smul.addr %s190, 4
      %s192 = scalar_lea.vmem %s0, %s191
      %p193 = scmp.lt.s32.totalorder %s15, 1
      %s194 = scalar_select %p193, %s15, 1
      %s195 = smul.addr %s194, 8
      %s196 = smul.addr %s195, 4
      %s197 = scalar_lea.vmem %s4, %s196
      %v198 = vld [vmem:[%s192] sm:$0xf]
      %v199 = vld [vmem:[%s192 + $0x4] sm:$0xf]
      %v200 = vld [vmem:[%s192 + $0x8] sm:$0xf]
      %v201 = vld [vmem:[%s192 + $0xc] sm:$0xf]
      %v202 = vld [vmem:[%s192 + $0x10] sm:$0xf]
      %v203 = vld [vmem:[%s192 + $0x14] sm:$0xf]
      %v204 = vld [vmem:[%s192 + $0x18] sm:$0xf]
      %v205 = vld [vmem:[%s192 + $0x1c] sm:$0xf]
      %v206 = vunpack.c.l.bf16 %v198
      %v207 = vunpack.c.l.bf16 %v199
      %v208 = vunpack.c.l.bf16 %v200
      %v209 = vunpack.c.l.bf16 %v201
      %v210 = vunpack.c.l.bf16 %v202
      %v211 = vunpack.c.l.bf16 %v203
      %v212 = vunpack.c.l.bf16 %v204
      %v213 = vunpack.c.l.bf16 %v205
      %vm214 = vcmask 261120
      %v215 = vsel %vm214, %v206, 0.0
      %v216 = vsel %vm214, %v207, 0.0
      %v217 = vadd.f32 %v215, %v216
      %v218 = vsel %vm214, %v208, 0.0
      %v219 = vadd.f32 %v217, %v218
      %v220 = vsel %vm214, %v209, 0.0
      %v221 = vadd.f32 %v219, %v220
      %v222 = vsel %vm214, %v210, 0.0
      %v223 = vadd.f32 %v221, %v222
      %v224 = vsel %vm214, %v211, 0.0
      %v225 = vadd.f32 %v223, %v224
      %v226 = vsel %vm214, %v212, 0.0
      %v227 = vadd.f32 %v225, %v226
      %v228 = vsel %vm214, %v213, 0.0
      %v229 = vadd.f32 %v227, %v228
      %v230 = vrot.slane %v229, 4
      %v231 = vadd.f32 %v229, %v230
      %v232 = vrot.slane %v231, 2
      %v233 = vadd.f32 %v231, %v232
      %v234 = vrot.slane %v233, 1
      %v235 = vadd.f32 %v233, %v234
      %v236 = vrcp.pop 64.0
      %v237 = vmul.f32 %v235, %v236
      %v238 = vmul.f32 %v206, %v206
      %v239 = vmul.f32 %v207, %v207
      %v240 = vmul.f32 %v208, %v208
      %v241 = vmul.f32 %v209, %v209
      %v242 = vmul.f32 %v210, %v210
      %v243 = vmul.f32 %v211, %v211
      %v244 = vmul.f32 %v212, %v212
      %v245 = vmul.f32 %v213, %v213
      %v246 = vsel %vm214, %v238, 0.0
      %v247 = vsel %vm214, %v239, 0.0
      %v248 = vadd.f32 %v246, %v247
      %v249 = vsel %vm214, %v240, 0.0
      %v250 = vadd.f32 %v248, %v249
      %v251 = vsel %vm214, %v241, 0.0
      %v252 = vadd.f32 %v250, %v251
      %v253 = vsel %vm214, %v242, 0.0
      %v254 = vadd.f32 %v252, %v253
      %v255 = vsel %vm214, %v243, 0.0
      %v256 = vadd.f32 %v254, %v255
      %v257 = vsel %vm214, %v244, 0.0
      %v258 = vadd.f32 %v256, %v257
      %v259 = vsel %vm214, %v245, 0.0
      %v260 = vadd.f32 %v258, %v259
      %v261 = vrot.slane %v260, 4
      %v262 = vadd.f32 %v260, %v261
      %v263 = vrot.slane %v262, 2
      %v264 = vadd.f32 %v262, %v263
      %v265 = vrot.slane %v264, 1
      %v266 = vadd.f32 %v264, %v265
      %v267 = vmul.f32 %v266, %v236
      %v268 = vld [vmem:[%s3] sm:$0xff]
      %v269 = vld [vmem:[%s3 + $0x8] sm:$0xff]
      %v270 = vld [vmem:[%s3 + $0x10] sm:$0xff]
      %v271 = vld [vmem:[%s3 + $0x18] sm:$0xff]
      %v273 = vsel %vm214, %v237, 0
      %275 = vmatprep.subr.mxu0 0.0
      %276 = vmatpush1.msra.mxu0 %v268
      %277 = vmatprep.subr.mxu0 0.0
      %278 = vmatpush1.msra.mxu0 %v269
      %279 = vmatprep.subr.mxu0 0.0
      %280 = vmatpush1.msra.mxu0 %v270
      %281 = vmatprep.subr.mxu0 0.0
      %282 = vmatpush1.msra.mxu0 %v271
      %283 = vmatprep.subr.mxu0 0.0
      %284 = vmatpush1.msra.mxu0 0.0
      %285 = vmatprep.subr.mxu0 0.0
      %286 = vmatpush1.msra.mxu0 0.0
      %287 = vmatprep.subr.mxu0 0.0
      %288 = vmatpush1.msra.mxu0 0.0
      %289 = vmatprep.subr.mxu0 0.0
      %290 = vmatpush1.msra.mxu0 0.0
      %291 = vmatprep.subr.mxu0 0.0
      %292 = vmatpush1.msra.mxu0 0.0
      %293 = vmatprep.subr.mxu0 0.0
      %294 = vmatpush1.msra.mxu0 0.0
      %295 = vmatprep.subr.mxu0 0.0
      %296 = vmatpush1.msra.mxu0 0.0
      %297 = vmatprep.subr.mxu0 0.0
      %298 = vmatpush1.msra.mxu0 0.0
      %299 = vmatprep.subr.mxu0 0.0
      %300 = vmatpush1.msra.mxu0 0.0
      %301 = vmatprep.subr.mxu0 0.0
      %302 = vmatpush1.msra.mxu0 0.0
      %303 = vmatprep.subr.mxu0 0.0
      %304 = vmatpush1.msra.mxu0 0.0
      %305 = vmatprep.subr.mxu0 0.0
      %306 = vmatpush1.msra.mxu0 0.0
      %307 = vmatprep.subr.mxu0 0.0
      %308 = vmatpush1.msra.mxu0 0.0
      %309 = vmatprep.subr.mxu0 0.0
      %310 = vmatpush1.msra.mxu0 0.0
      %311 = vmatprep.subr.mxu0 0.0
      %312 = vmatpush1.msra.mxu0 0.0
      %313 = vmatprep.subr.mxu0 0.0
      %314 = vmatpush1.msra.mxu0 0.0
      %315 = vmatprep.subr.mxu0 0.0
      %316 = vmatpush1.msra.mxu0 0.0
      %317 = vmatprep.subr.mxu0 0.0
      %318 = vmatpush1.msra.mxu0 0.0
      %319 = vmatprep.subr.mxu0 0.0
      %320 = vmatpush1.msra.mxu0 0.0
      %321 = vmatprep.subr.mxu0 0.0
      %322 = vmatpush1.msra.mxu0 0.0
      %323 = vmatprep.subr.mxu0 0.0
      %324 = vmatpush1.msra.mxu0 0.0
      %325 = vmatprep.subr.mxu0 0.0
      %326 = vmatpush1.msra.mxu0 0.0
      %327 = vmatprep.subr.mxu0 0.0
      %328 = vmatpush1.msra.mxu0 0.0
      %329 = vmatprep.subr.mxu0 0.0
      %330 = vmatpush1.msra.mxu0 0.0
      %331 = vmatprep.subr.mxu0 0.0
      %332 = vmatpush1.msra.mxu0 0.0
      %333 = vmatprep.subr.mxu0 0.0
      %334 = vmatpush1.msra.mxu0 0.0
      %335 = vmatprep.subr.mxu0 0.0
      %336 = vmatpush1.msra.mxu0 0.0
      %337 = vmatprep.subr.mxu0 0.0
      %338 = vmatpush1.msra.mxu0 0.0
      %339 = vmatprep.mubr.f32.mxu0 0.0
      %340 = vmatmul.mubr.f32.gmra.mrb[0].mxu0 %v273
      %v341 = vpop.f32.mrb[0].mxu0
      %v342 = vadd.f32 0.0, %v341
      %v343 = vpop.f32.mrb[0].mxu0
      %344 = vdwg.mxu0
      %v346 = vsel %vm214, %v267, 0
      %348 = vmatprep.subr.mxu0 0.0
      %349 = vmatpush1.msra.mxu0 %v268
      %350 = vmatprep.subr.mxu0 0.0
      %351 = vmatpush1.msra.mxu0 %v269
      %352 = vmatprep.subr.mxu0 0.0
      %353 = vmatpush1.msra.mxu0 %v270
      %354 = vmatprep.subr.mxu0 0.0
      %355 = vmatpush1.msra.mxu0 %v271
      %356 = vmatprep.subr.mxu0 0.0
      %357 = vmatpush1.msra.mxu0 0.0
      %358 = vmatprep.subr.mxu0 0.0
      %359 = vmatpush1.msra.mxu0 0.0
      %360 = vmatprep.subr.mxu0 0.0
      %361 = vmatpush1.msra.mxu0 0.0
      %362 = vmatprep.subr.mxu0 0.0
      %363 = vmatpush1.msra.mxu0 0.0
      %364 = vmatprep.subr.mxu0 0.0
      %365 = vmatpush1.msra.mxu0 0.0
      %366 = vmatprep.subr.mxu0 0.0
      %367 = vmatpush1.msra.mxu0 0.0
      %368 = vmatprep.subr.mxu0 0.0
      %369 = vmatpush1.msra.mxu0 0.0
      %370 = vmatprep.subr.mxu0 0.0
      %371 = vmatpush1.msra.mxu0 0.0
      %372 = vmatprep.subr.mxu0 0.0
      %373 = vmatpush1.msra.mxu0 0.0
      %374 = vmatprep.subr.mxu0 0.0
      %375 = vmatpush1.msra.mxu0 0.0
      %376 = vmatprep.subr.mxu0 0.0
      %377 = vmatpush1.msra.mxu0 0.0
      %378 = vmatprep.subr.mxu0 0.0
      %379 = vmatpush1.msra.mxu0 0.0
      %380 = vmatprep.subr.mxu0 0.0
      %381 = vmatpush1.msra.mxu0 0.0
      %382 = vmatprep.subr.mxu0 0.0
      %383 = vmatpush1.msra.mxu0 0.0
      %384 = vmatprep.subr.mxu0 0.0
      %385 = vmatpush1.msra.mxu0 0.0
      %386 = vmatprep.subr.mxu0 0.0
      %387 = vmatpush1.msra.mxu0 0.0
      %388 = vmatprep.subr.mxu0 0.0
      %389 = vmatpush1.msra.mxu0 0.0
      %390 = vmatprep.subr.mxu0 0.0
      %391 = vmatpush1.msra.mxu0 0.0
      %392 = vmatprep.subr.mxu0 0.0
      %393 = vmatpush1.msra.mxu0 0.0
      %394 = vmatprep.subr.mxu0 0.0
      %395 = vmatpush1.msra.mxu0 0.0
      %396 = vmatprep.subr.mxu0 0.0
      %397 = vmatpush1.msra.mxu0 0.0
      %398 = vmatprep.subr.mxu0 0.0
      %399 = vmatpush1.msra.mxu0 0.0
      %400 = vmatprep.subr.mxu0 0.0
      %401 = vmatpush1.msra.mxu0 0.0
      %402 = vmatprep.subr.mxu0 0.0
      %403 = vmatpush1.msra.mxu0 0.0
      %404 = vmatprep.subr.mxu0 0.0
      %405 = vmatpush1.msra.mxu0 0.0
      %406 = vmatprep.subr.mxu0 0.0
      %407 = vmatpush1.msra.mxu0 0.0
      %408 = vmatprep.subr.mxu0 0.0
      %409 = vmatpush1.msra.mxu0 0.0
      %410 = vmatprep.subr.mxu0 0.0
      %411 = vmatpush1.msra.mxu0 0.0
      %412 = vmatprep.mubr.f32.mxu0 0.0
      %413 = vmatmul.mubr.f32.gmra.mrb[0].mxu0 %v346
      %v414 = vpop.f32.mrb[0].mxu0
      %v415 = vadd.f32 0.0, %v414
      %v416 = vpop.f32.mrb[0].mxu0
      %417 = vdwg.mxu0
      %v418 = vmul.f32 %v342, %v342
      %v419 = vsub.f32 %v415, %v418
      %v420 = vadd.f32 %v419, 1e-05
      %v421 = vrsqrt.pop %v420
      %v422 = vlaneseq
      %v423 = vshrl.u32 %v422, 7
      %v424 = vsub.s32 0, %v423
      %v425 = vrot.slane %v342, %v424
      %v426 = vsub.f32 %v206, %v425
      %v427 = vsub.f32 %v207, %v425
      %v428 = vsub.f32 %v208, %v425
      %v429 = vsub.f32 %v209, %v425
      %v430 = vsub.f32 %v210, %v425
      %v431 = vsub.f32 %v211, %v425
      %v432 = vsub.f32 %v212, %v425
      %v433 = vsub.f32 %v213, %v425
      %v434 = vlaneseq
      %v435 = vshrl.u32 %v434, 7
      %v436 = vsub.s32 0, %v435
      %v437 = vrot.slane %v421, %v436
      %v438 = vmul.f32 %v426, %v437
      %v439 = vmul.f32 %v427, %v437
      %v440 = vmul.f32 %v428, %v437
      %v441 = vmul.f32 %v429, %v437
      %v442 = vmul.f32 %v430, %v437
      %v443 = vmul.f32 %v431, %v437
      %v444 = vmul.f32 %v432, %v437
      %v445 = vmul.f32 %v433, %v437
      %v446 = vld [vmem:[%s1] sm:$0x1]
      %v448 = vlaneseq
      %v449 = vshrl.u32 %v448, 7
      %v450 = vsub.s32 0, %v449
      %v451 = vrot.slane %v446, %v450
      %v453 = vmul.f32 %v438, %v451
      %v454 = vmul.f32 %v439, %v451
      %v455 = vmul.f32 %v440, %v451
      %v456 = vmul.f32 %v441, %v451
      %v457 = vmul.f32 %v442, %v451
      %v458 = vmul.f32 %v443, %v451
      %v459 = vmul.f32 %v444, %v451
      %v460 = vmul.f32 %v445, %v451
      %v461 = vld [vmem:[%s2] sm:$0x1]
      %v463 = vlaneseq
      %v464 = vshrl.u32 %v463, 7
      %v465 = vsub.s32 0, %v464
      %v466 = vrot.slane %v461, %v465
      %v468 = vadd.f32 %v453, %v466
      %v469 = vadd.f32 %v454, %v466
      %v470 = vadd.f32 %v455, %v466
      %v471 = vadd.f32 %v456, %v466
      %v472 = vadd.f32 %v457, %v466
      %v473 = vadd.f32 %v458, %v466
      %v474 = vadd.f32 %v459, %v466
      %v475 = vadd.f32 %v460, %v466
      %v476 = vmax.f32 %v468, 0.0
      %v477 = vmax.f32 %v469, 0.0
      %v478 = vmax.f32 %v470, 0.0
      %v479 = vmax.f32 %v471, 0.0
      %v480 = vmax.f32 %v472, 0.0
      %v481 = vmax.f32 %v473, 0.0
      %v482 = vmax.f32 %v474, 0.0
      %v483 = vmax.f32 %v475, 0.0
      %v484 = vpack.c.bf16 %v477, %v476
      %v485 = vpack.c.bf16 %v479, %v478
      %v486 = vpack.c.bf16 %v481, %v480
      %v487 = vpack.c.bf16 %v483, %v482
      %v492 = vunpack.c.l.b16 %v484
      %v493 = vunpack.c.h.b16 %v484
      %v494 = vunpack.c.l.b16 %v485
      %v495 = vunpack.c.h.b16 %v485
      %v496 = vunpack.c.l.b16 %v486
      %v497 = vunpack.c.h.b16 %v486
      %v498 = vunpack.c.l.b16 %v487
      %v499 = vunpack.c.h.b16 %v487
      %v500 = vpack.c.b16 %v492, %v492
      %v501 = vpack.c.b16 %v493, %v493
      %v502 = vpack.c.b16 %v494, %v494
      %v503 = vpack.c.b16 %v495, %v495
      %v504 = vpack.c.b16 %v496, %v496
      %v505 = vpack.c.b16 %v497, %v497
      %v506 = vpack.c.b16 %v498, %v498
      %v507 = vpack.c.b16 %v499, %v499
      %vm516 = vcmask 257024
      %517 = vst.msk [vmem:[%s197] sm:$0xf] %vm516, %v500
      %518 = vst.msk [vmem:[%s197 + $0x4] sm:$0xf] %vm516, %v501
      %519 = vst.msk [vmem:[%s197 + $0x8] sm:$0xf] %vm516, %v502
      %520 = vst.msk [vmem:[%s197 + $0xc] sm:$0xf] %vm516, %v503
      %521 = vst.msk [vmem:[%s197 + $0x10] sm:$0xf] %vm516, %v504
      %522 = vst.msk [vmem:[%s197 + $0x14] sm:$0xf] %vm516, %v505
      %523 = vst.msk [vmem:[%s197 + $0x18] sm:$0xf] %vm516, %v506
      %524 = vst.msk [vmem:[%s197 + $0x1c] sm:$0xf] %vm516, %v507
      %p525 = scmp.lt.s32.totalorder %s15, 1
      %s526 = scalar_select %p525, %s15, 1
      %s527 = smul.addr %s526, 8
      %s528 = smul.addr %s527, 4
      %s529 = scalar_lea.vmem %s4, %s528
      // Predicated region
      $region37: #{forward.44} parent=35 // pred_check
        %p530 = pneg %p122
      $region38: #{forward.44} parent=35 // pred_check_branch
        %532 = sbr.rel (%p530) target = $region40
      $region39: #{forward.44} parent=35 // pred_region
        _
      $region40: #{forward.44} parent=35 // pred_fallthru
        _
    $region36: #{forward.44} parent=5 // pred_fallthru
      _
    %p533 = scmp.le.s32.totalorder 2, %s10
    // Predicated region
    $region41: #{forward.44} parent=5 // pred_check
      %p534 = pneg %p533
    $region42: #{forward.44} parent=5 // pred_check_branch
      %536 = sbr.rel (%p534) target = $region44
    $region43: #{forward.44} parent=5 // pred_region
      %s537 = ssub.s32 %s10, 2
      // Predicated region
      $region45: #{forward.44} parent=43 // pred_check
        %p538 = pneg %p128
      $region46: #{forward.44} parent=43 // pred_check_branch
        %540 = sbr.rel (%p538) target = $region48
      $region47: #{forward.44} parent=43 // pred_region
        %p541 = scmp.lt.s32.totalorder %s16, 1
        %s542 = scalar_select %p541, %s16, 1
        %s543 = smul.addr %s542, 8
        %s544 = smul.addr %s543, 4
        %s545 = scalar_lea.vmem %s4, %s544
      $region48: #{forward.44} parent=43 // pred_fallthru
        _
    $region44: #{forward.44} parent=5 // pred_fallthru
      _
  $region6: #{forward.44} parent=0 // loop_footer
    %s14 = sadd.s32 1, %s10
  $region7: #{forward.44} parent=0 // loop_footer_branch
    %9 = sbr.rel target = $region3
  $region8: #{forward.44} parent=0 // loop_exit
    _

// kernel: forward.45
$region0: #{forward.45}
  #allocation0 [shape = 'u32[]', space=smem, size = 0x4, offset = 0x4, fixed_abs, tag = 'smem constant byte address 0x4 - core index']
  #allocation1 [shape = 'u32[144,128]{1,0:T(1,128)}', space=vmem, size = 0x12000, scoped, tag = 'internal scratch']
  %s0 = inlined_call_operand.vmem [shape: bf16[162,128], index: 0, kind: input, shape index: {}]
  %s1 = inlined_call_operand.vmem [shape: bf16[128,128], index: 1, kind: input, shape index: {}]
  %s2 = inlined_call_operand.vmem [shape: f32[1,128], index: 2, kind: input, shape index: {}]
  %s3 = inlined_call_operand.vmem [shape: bf16[162,128], index: 3, kind: output, shape index: {}]
  %s4 = sld [smem:[#allocation0]]
  $region22: #{forward.45} parent=0
    _
  %s6 = ssub.s32 1, %s4
  %s7 = scalar_select 0, %s6, %s4
  // Predicated region
  $region2: #{forward.45} parent=0 // pred_check
    _
  $region3: #{forward.45} parent=0 // pred_check_branch
    %9 = sbr.rel (0) target = $region5
  $region4: #{forward.45} parent=0 // pred_region
    _
  $region5: #{forward.45} parent=0 // pred_fallthru
    _
  // Predicated region
  $region6: #{forward.45} parent=0 // pred_check
    _
  $region7: #{forward.45} parent=0 // pred_check_branch
    %11 = sbr.rel (0) target = $region9
  $region8: #{forward.45} parent=0 // pred_region
    _
  $region9: #{forward.45} parent=0 // pred_fallthru
    _
  // Predicated region
  $region10: #{forward.45} parent=0 // pred_check
    _
  $region11: #{forward.45} parent=0 // pred_check_branch
    %13 = sbr.rel (0) target = $region13
  $region12: #{forward.45} parent=0 // pred_region
    _
  $region13: #{forward.45} parent=0 // pred_fallthru
    _
  %v15 = vld [vmem:[%s0] sm:$0xf]
  %v16 = vld [vmem:[%s0 + $0x4] sm:$0xf]
  %v17 = vld [vmem:[%s0 + $0x8] sm:$0xf]
  %v18 = vld [vmem:[%s0 + $0xc] sm:$0xf]
  %v19 = vld [vmem:[%s0 + $0x10] sm:$0xf]
  %v20 = vld [vmem:[%s0 + $0x14] sm:$0xf]
  %v21 = vld [vmem:[%s0 + $0x18] sm:$0xf]
  %v22 = vld [vmem:[%s0 + $0x1c] sm:$0xf]
  %v23 = vld [vmem:[%s0 + $0x20] sm:$0xf]
  %v24 = vld [vmem:[%s0 + $0x24] sm:$0xf]
  %v25 = vld [vmem:[%s0 + $0x28] sm:$0xf]
  %v26 = vld [vmem:[%s0 + $0x2c] sm:$0xf]
  %v27 = vld [vmem:[%s0 + $0x30] sm:$0xf]
  %v28 = vld [vmem:[%s0 + $0x34] sm:$0xf]
  %v29 = vld [vmem:[%s0 + $0x38] sm:$0xf]
  %v30 = vld [vmem:[%s0 + $0x3c] sm:$0xf]
  %v31 = vld [vmem:[%s0 + $0x40] sm:$0xf]
  %v32 = vld [vmem:[%s0 + $0x44] sm:$0xf]
  %v33 = vld [vmem:[%s0 + $0x48] sm:$0xf]
  %v34 = vld [vmem:[%s0 + $0x4c] sm:$0xf]
  %v35 = vld [vmem:[%s0 + $0x50] sm:$0x1]
  %v36 = vld [vmem:[%s1] sm:$0xf]
  %v37 = vld [vmem:[%s1 + $0x4] sm:$0xf]
  %v38 = vld [vmem:[%s1 + $0x8] sm:$0xf]
  %v39 = vld [vmem:[%s1 + $0xc] sm:$0xf]
  %v40 = vld [vmem:[%s1 + $0x10] sm:$0xf]
  %v41 = vld [vmem:[%s1 + $0x14] sm:$0xf]
  %v42 = vld [vmem:[%s1 + $0x18] sm:$0xf]
  %v43 = vld [vmem:[%s1 + $0x1c] sm:$0xf]
  %v44 = vld [vmem:[%s1 + $0x20] sm:$0xf]
  %v45 = vld [vmem:[%s1 + $0x24] sm:$0xf]
  %v46 = vld [vmem:[%s1 + $0x28] sm:$0xf]
  %v47 = vld [vmem:[%s1 + $0x2c] sm:$0xf]
  %v48 = vld [vmem:[%s1 + $0x30] sm:$0xf]
  %v49 = vld [vmem:[%s1 + $0x34] sm:$0xf]
  %v50 = vld [vmem:[%s1 + $0x38] sm:$0xf]
  %v51 = vld [vmem:[%s1 + $0x3c] sm:$0xf]
  %v52 = vld [vmem:[%s2] sm:$0x1]
  %v54 = vlaneseq
  %v55 = vshrl.u32 %v54, 7
  %v56 = vsub.s32 0, %v55
  %v57 = vrot.slane %v52, %v56
  %v80 = vunpack.c.l.b16 %v15
  %v81 = vunpack.c.l.b16 %v16
  %v82 = vunpack.c.l.b16 %v17
  %v83 = vunpack.c.l.b16 %v18
  %v84 = vunpack.c.l.b16 %v19
  %v85 = vunpack.c.l.b16 %v20
  %v86 = vunpack.c.l.b16 %v21
  %v87 = vunpack.c.l.b16 %v22
  %v88 = vunpack.c.l.b16 %v23
  %v89 = vunpack.c.l.b16 %v24
  %v90 = vunpack.c.l.b16 %v25
  %v91 = vunpack.c.l.b16 %v26
  %v92 = vunpack.c.l.b16 %v27
  %v93 = vunpack.c.l.b16 %v28
  %v94 = vunpack.c.l.b16 %v29
  %v95 = vunpack.c.l.b16 %v30
  %v96 = vunpack.c.l.b16 %v31
  %v97 = vunpack.c.l.b16 %v32
  %v98 = vunpack.c.l.b16 %v33
  %v99 = vunpack.c.l.b16 %v34
  %v100 = vunpack.c.l.b16 %v35
  %v101 = vpack.c.b16 %v81, %v80
  %v102 = vpack.c.b16 %v83, %v82
  %v103 = vpack.c.b16 %v85, %v84
  %v104 = vpack.c.b16 %v87, %v86
  %v105 = vpack.c.b16 %v89, %v88
  %v106 = vpack.c.b16 %v91, %v90
  %v107 = vpack.c.b16 %v93, %v92
  %v108 = vpack.c.b16 %v95, %v94
  %v109 = vpack.c.b16 %v97, %v96
  %v110 = vpack.c.b16 %v99, %v98
  %v111 = vpack.c.b16 %v100, %v100
  %v139 = vunpack.c.l.b16 %v36
  %v140 = vunpack.c.l.b16 %v37
  %v141 = vunpack.c.l.b16 %v38
  %v142 = vunpack.c.l.b16 %v39
  %v143 = vunpack.c.l.b16 %v40
  %v144 = vunpack.c.l.b16 %v41
  %v145 = vunpack.c.l.b16 %v42
  %v146 = vunpack.c.l.b16 %v43
  %v147 = vunpack.c.l.b16 %v44
  %v148 = vunpack.c.l.b16 %v45
  %v149 = vunpack.c.l.b16 %v46
  %v150 = vunpack.c.l.b16 %v47
  %v151 = vunpack.c.l.b16 %v48
  %v152 = vunpack.c.l.b16 %v49
  %v153 = vunpack.c.l.b16 %v50
  %v154 = vunpack.c.l.b16 %v51
  %v155 = vpack.c.b16 %v140, %v139
  %v156 = vpack.c.b16 %v142, %v141
  %v157 = vpack.c.b16 %v144, %v143
  %v158 = vpack.c.b16 %v146, %v145
  %v159 = vpack.c.b16 %v148, %v147
  %v160 = vpack.c.b16 %v150, %v149
  %v161 = vpack.c.b16 %v152, %v151
  %v162 = vpack.c.b16 %v154, %v153
  %171 = vmatprep.subr.bf16.mxu0 0
  %172 = vmatpush1.bf16.msra.mxu0 %v155
  %173 = vmatprep.subr.bf16.mxu0 0
  %174 = vmatpush1.bf16.msra.mxu0 %v156
  %175 = vmatprep.subr.bf16.mxu0 0
  %176 = vmatpush1.bf16.msra.mxu0 %v157
  %177 = vmatprep.subr.bf16.mxu0 0
  %178 = vmatpush1.bf16.msra.mxu0 %v158
  %179 = vmatprep.subr.bf16.mxu0 0
  %180 = vmatpush1.bf16.msra.mxu0 %v159
  %181 = vmatprep.subr.bf16.mxu0 0
  %182 = vmatpush1.bf16.msra.mxu0 %v160
  %183 = vmatprep.subr.bf16.mxu0 0
  %184 = vmatpush1.bf16.msra.mxu0 %v161
  %185 = vmatprep.subr.bf16.mxu0 0
  %186 = vmatpush1.bf16.msra.mxu0 %v162
  %187 = vmatprep.subr.bf16.mxu0 0
  %188 = vmatpush1.bf16.msra.mxu0 0
  %189 = vmatprep.subr.bf16.mxu0 0
  %190 = vmatpush1.bf16.msra.mxu0 0
  %191 = vmatprep.subr.bf16.mxu0 0
  %192 = vmatpush1.bf16.msra.mxu0 0
  %193 = vmatprep.subr.bf16.mxu0 0
  %194 = vmatpush1.bf16.msra.mxu0 0
  %195 = vmatprep.subr.bf16.mxu0 0
  %196 = vmatpush1.bf16.msra.mxu0 0
  %197 = vmatprep.subr.bf16.mxu0 0
  %198 = vmatpush1.bf16.msra.mxu0 0
  %199 = vmatprep.subr.bf16.mxu0 0
  %200 = vmatpush1.bf16.msra.mxu0 0
  %201 = vmatprep.subr.bf16.mxu0 0
  %202 = vmatpush1.bf16.msra.mxu0 0
  %203 = vmatprep.mubr.bf16.mxu0 0
  %204 = vmatmul.mubr.bf16.gmra.mrb[0].mxu0 %v101
  %v205 = vpop.f32.mrb[0].mxu0
  %v206 = vadd.f32 %v57, %v205
  %v207 = vpop.f32.mrb[0].mxu0
  %v208 = vpop.f32.mrb[0].mxu0
  %v209 = vadd.f32 %v57, %v208
  %v210 = vpop.f32.mrb[0].mxu0
  %211 = vmatprep.mubr.bf16.mxu0 0
  %212 = vmatmul.mubr.bf16.gmra.mrb[0].mxu0 %v102
  %v213 = vpop.f32.mrb[0].mxu0
  %v214 = vadd.f32 %v57, %v213
  %v215 = vpop.f32.mrb[0].mxu0
  %v216 = vpop.f32.mrb[0].mxu0
  %v217 = vadd.f32 %v57, %v216
  %v218 = vpop.f32.mrb[0].mxu0
  %219 = vmatprep.mubr.bf16.mxu0 0
  %220 = vmatmul.mubr.bf16.gmra.mrb[0].mxu0 %v103
  %v221 = vpop.f32.mrb[0].mxu0
  %v222 = vadd.f32 %v57, %v221
  %v223 = vpop.f32.mrb[0].mxu0
  %v224 = vpop.f32.mrb[0].mxu0
  %v225 = vadd.f32 %v57, %v224
  %v226 = vpop.f32.mrb[0].mxu0
  %227 = vmatprep.mubr.bf16.mxu0 0
  %228 = vmatmul.mubr.bf16.gmra.mrb[0].mxu0 %v104
  %v229 = vpop.f32.mrb[0].mxu0
  %v230 = vadd.f32 %v57, %v229
  %v231 = vpop.f32.mrb[0].mxu0
  %v232 = vpop.f32.mrb[0].mxu0
  %v233 = vadd.f32 %v57, %v232
  %v234 = vpop.f32.mrb[0].mxu0
  %235 = vmatprep.mubr.bf16.mxu0 0
  %236 = vmatmul.mubr.bf16.gmra.mrb[0].mxu0 %v105
  %v237 = vpop.f32.mrb[0].mxu0
  %v238 = vadd.f32 %v57, %v237
  %v239 = vpop.f32.mrb[0].mxu0
  %v240 = vpop.f32.mrb[0].mxu0
  %v241 = vadd.f32 %v57, %v240
  %v242 = vpop.f32.mrb[0].mxu0
  %243 = vmatprep.mubr.bf16.mxu0 0
  %244 = vmatmul.mubr.bf16.gmra.mrb[0].mxu0 %v106
  %v245 = vpop.f32.mrb[0].mxu0
  %v246 = vadd.f32 %v57, %v245
  %v247 = vpop.f32.mrb[0].mxu0
  %v248 = vpop.f32.mrb[0].mxu0
  %v249 = vadd.f32 %v57, %v248
  %v250 = vpop.f32.mrb[0].mxu0
  %251 = vmatprep.mubr.bf16.mxu0 0
  %252 = vmatmul.mubr.bf16.gmra.mrb[0].mxu0 %v107
  %v253 = vpop.f32.mrb[0].mxu0
  %v254 = vadd.f32 %v57, %v253
  %v255 = vpop.f32.mrb[0].mxu0
  %v256 = vpop.f32.mrb[0].mxu0
  %v257 = vadd.f32 %v57, %v256
  %v258 = vpop.f32.mrb[0].mxu0
  %259 = vmatprep.mubr.bf16.mxu0 0
  %260 = vmatmul.mubr.bf16.gmra.mrb[0].mxu0 %v108
  %v261 = vpop.f32.mrb[0].mxu0
  %v262 = vadd.f32 %v57, %v261
  %v263 = vpop.f32.mrb[0].mxu0
  %v264 = vpop.f32.mrb[0].mxu0
  %v265 = vadd.f32 %v57, %v264
  %v266 = vpop.f32.mrb[0].mxu0
  %267 = vmatprep.mubr.bf16.mxu0 0
  %268 = vmatmul.mubr.bf16.gmra.mrb[0].mxu0 %v109
  %v269 = vpop.f32.mrb[0].mxu0
  %v270 = vadd.f32 %v57, %v269
  %v271 = vpop.f32.mrb[0].mxu0
  %v272 = vpop.f32.mrb[0].mxu0
  %v273 = vadd.f32 %v57, %v272
  %v274 = vpop.f32.mrb[0].mxu0
  %275 = vmatprep.mubr.bf16.mxu0 0
  %276 = vmatmul.mubr.bf16.gmra.mrb[0].mxu0 %v110
  %v277 = vpop.f32.mrb[0].mxu0
  %v278 = vadd.f32 %v57, %v277
  %v279 = vpop.f32.mrb[0].mxu0
  %v280 = vpop.f32.mrb[0].mxu0
  %v281 = vadd.f32 %v57, %v280
  %v282 = vpop.f32.mrb[0].mxu0
  %283 = vmatprep.mubr.bf16.mxu0 0
  %284 = vmatmul.mubr.bf16.gmra.mrb[0].mxu0 %v111
  %v285 = vpop.f32.mrb[0].mxu0
  %v286 = vadd.f32 %v57, %v285
  %v287 = vpop.f32.mrb[0].mxu0
  %v288 = vpop.f32.mrb[0].mxu0
  %v289 = vpop.f32.mrb[0].mxu0
  %290 = vdwg.mxu0
  %v291 = vpack.c.bf16 %v209, %v206
  %v292 = vpack.c.bf16 %v217, %v214
  %v293 = vpack.c.bf16 %v225, %v222
  %v294 = vpack.c.bf16 %v233, %v230
  %v295 = vpack.c.bf16 %v241, %v238
  %v296 = vpack.c.bf16 %v249, %v246
  %v297 = vpack.c.bf16 %v257, %v254
  %v298 = vpack.c.bf16 %v265, %v262
  %v299 = vpack.c.bf16 %v273, %v270
  %v300 = vpack.c.bf16 %v281, %v278
  %v301 = vpack.c.bf16 %v286, %v286
  %v313 = vunpack.c.l.b16 %v291
  %v314 = vunpack.c.h.b16 %v291
  %v315 = vunpack.c.l.b16 %v292
  %v316 = vunpack.c.h.b16 %v292
  %v317 = vunpack.c.l.b16 %v293
  %v318 = vunpack.c.h.b16 %v293
  %v319 = vunpack.c.l.b16 %v294
  %v320 = vunpack.c.h.b16 %v294
  %v321 = vunpack.c.l.b16 %v295
  %v322 = vunpack.c.h.b16 %v295
  %v323 = vunpack.c.l.b16 %v296
  %v324 = vunpack.c.h.b16 %v296
  %v325 = vunpack.c.l.b16 %v297
  %v326 = vunpack.c.h.b16 %v297
  %v327 = vunpack.c.l.b16 %v298
  %v328 = vunpack.c.h.b16 %v298
  %v329 = vunpack.c.l.b16 %v299
  %v330 = vunpack.c.h.b16 %v299
  %v331 = vunpack.c.l.b16 %v300
  %v332 = vunpack.c.h.b16 %v300
  %v333 = vunpack.c.l.b16 %v301
  %v334 = vpack.c.b16 %v313, %v313
  %v335 = vpack.c.b16 %v314, %v314
  %v336 = vpack.c.b16 %v315, %v315
  %v337 = vpack.c.b16 %v316, %v316
  %v338 = vpack.c.b16 %v317, %v317
  %v339 = vpack.c.b16 %v318, %v318
  %v340 = vpack.c.b16 %v319, %v319
  %v341 = vpack.c.b16 %v320, %v320
  %v342 = vpack.c.b16 %v321, %v321
  %v343 = vpack.c.b16 %v322, %v322
  %v344 = vpack.c.b16 %v323, %v323
  %v345 = vpack.c.b16 %v324, %v324
  %v346 = vpack.c.b16 %v325, %v325
  %v347 = vpack.c.b16 %v326, %v326
  %v348 = vpack.c.b16 %v327, %v327
  %v349 = vpack.c.b16 %v328, %v328
  %v350 = vpack.c.b16 %v329, %v329
  %v351 = vpack.c.b16 %v330, %v330
  %v352 = vpack.c.b16 %v331, %v331
  %v353 = vpack.c.b16 %v332, %v332
  %v354 = vpack.c.b16 %v333, %v333
  %376 = vst [vmem:[%s3] sm:$0xf] %v334
  %377 = vst [vmem:[%s3 + $0x4] sm:$0xf] %v335
  %378 = vst [vmem:[%s3 + $0x8] sm:$0xf] %v336
  %379 = vst [vmem:[%s3 + $0xc] sm:$0xf] %v337
  %380 = vst [vmem:[%s3 + $0x10] sm:$0xf] %v338
  %381 = vst [vmem:[%s3 + $0x14] sm:$0xf] %v339
  %382 = vst [vmem:[%s3 + $0x18] sm:$0xf] %v340
  %383 = vst [vmem:[%s3 + $0x1c] sm:$0xf] %v341
  %384 = vst [vmem:[%s3 + $0x20] sm:$0xf] %v342
  %385 = vst [vmem:[%s3 + $0x24] sm:$0xf] %v343
  %386 = vst [vmem:[%s3 + $0x28] sm:$0xf] %v344
  %387 = vst [vmem:[%s3 + $0x2c] sm:$0xf] %v345
  %388 = vst [vmem:[%s3 + $0x30] sm:$0xf] %v346
  %389 = vst [vmem:[%s3 + $0x34] sm:$0xf] %v347
  %390 = vst [vmem:[%s3 + $0x38] sm:$0xf] %v348
  %391 = vst [vmem:[%s3 + $0x3c] sm:$0xf] %v349
  %392 = vst [vmem:[%s3 + $0x40] sm:$0xf] %v350
  %393 = vst [vmem:[%s3 + $0x44] sm:$0xf] %v351
  %394 = vst [vmem:[%s3 + $0x48] sm:$0xf] %v352
  %395 = vst [vmem:[%s3 + $0x4c] sm:$0xf] %v353
  %396 = vst [vmem:[%s3 + $0x50] sm:$0x1] %v354
  // Predicated region
  $region14: #{forward.45} parent=0 // pred_check
    _
  $region15: #{forward.45} parent=0 // pred_check_branch
    %398 = sbr.rel (0) target = $region17
  $region16: #{forward.45} parent=0 // pred_region
    _
  $region17: #{forward.45} parent=0 // pred_fallthru
    _
  // Predicated region
  $region18: #{forward.45} parent=0 // pred_check
    _
  $region19: #{forward.45} parent=0 // pred_check_branch
    %400 = sbr.rel (0) target = $region21
  $region20: #{forward.45} parent=0 // pred_region
    _
  $region21: #{forward.45} parent=0 // pred_fallthru
    _

// kernel: forward.46
$region0: #{forward.46}
  #allocation0 [shape = 'u32[]', space=smem, size = 0x4, offset = 0x4, fixed_abs, tag = 'smem constant byte address 0x4 - core index']
  #allocation1 [shape = 'u32[144,128]{1,0:T(1,128)}', space=vmem, size = 0x12000, scoped, tag = 'internal scratch']
  %s0 = inlined_call_operand.vmem [shape: bf16[2,256,16], index: 0, kind: input, shape index: {}]
  %s1 = inlined_call_operand.vmem [shape: f32[1,16], index: 1, kind: input, shape index: {}]
  %s2 = inlined_call_operand.vmem [shape: f32[1,16], index: 2, kind: input, shape index: {}]
  %s3 = inlined_call_operand.vmem [shape: f32[16,16], index: 3, kind: input, shape index: {}]
  %s4 = inlined_call_operand.vmem [shape: bf16[2,256,16], index: 4, kind: output, shape index: {}]
  %s5 = sld [smem:[#allocation0]]
  $region49: #{forward.46} parent=0
    _
  %s7 = ssub.s32 1, %s5
  %s8 = scalar_select 0, %s7, %s5
  loop: start=0, step=1, limit=4
  $region2: #{forward.46} parent=0 // loop_pre_header
    _
  $region3: #{forward.46} parent=0 // loop_header
    %s10 = sphi 0, %s14
    %p11 = scmp.ge.s32.totalorder %s10, 4
    %s20 = sphi 0, %s22
    %s23 = sphi 0, %s20
    %s24 = sphi 0, %s23
    %s40 = sphi 0, %s24
    %s44 = sphi 0, %s44
    %s46 = sphi 0, %s44
    %s47 = sphi 0, %s46
    %s61 = sphi 0, %s47
    %s65 = sphi 0, %s65
    %s67 = sphi 0, %s65
    %s68 = sphi 0, %s67
    %s82 = sphi 0, %s68
    %s86 = sphi 0, %s86
    %s88 = sphi 0, %s86
    %s89 = sphi 0, %s88
    %s103 = sphi 0, %s89
    %s109 = sphi 0, %s111
    %s112 = sphi 0, %s109
    %s113 = sphi 0, %s112
    %s129 = sphi 0, %s113
  $region4: #{forward.46} parent=0 // loop_header_branch
    %13 = sbr.rel (%p11) target = $region8
  $region5: #{forward.46} parent=0 // loop_body
    %s15 = ssub.s32 %s10, 1
    %s16 = ssub.s32 %s10, 2
    %s17 = sadd.s32 %s10, 1
    %s18 = ssub.s32 %s10, %s17
    %p19 = scmp.eq.s32.totalorder %s18, 0
    %s21 = sadd.s32 %s20, 1
    %s22 = scalar_select %p19, %s20, %s21
    %p25 = pneg %p19
    %p26 = scmp.eq.s32.totalorder %s10, 1
    %p27 = por %p25, %p26
    %p28 = scmp.ne.s32.totalorder %s20, %s23
    %p29 = scmp.eq.s32.totalorder %s10, 0
    %p30 = por %p28, %p29
    %p31 = scmp.ne.s32.totalorder %s20, %s23
    %p32 = scmp.eq.s32.totalorder %s15, 1
    %p33 = por %p31, %p32
    %p34 = scmp.ne.s32.totalorder %s23, %s24
    %p35 = scmp.eq.s32.totalorder %s15, 0
    %p36 = por %p34, %p35
    %p37 = scmp.ne.s32.totalorder %s23, %s24
    %p38 = scmp.eq.s32.totalorder %s16, 1
    %p39 = por %p37, %p38
    %p41 = scmp.ne.s32.totalorder %s24, %s40
    %p42 = scmp.eq.s32.totalorder %s16, 0
    %p43 = por %p41, %p42
    %s45 = sadd.s32 %s44, 1
    %p48 = scmp.eq.s32.totalorder %s10, 1
    %p49 = scmp.ne.s32.totalorder %s44, %s46
    %p50 = scmp.eq.s32.totalorder %s10, 0
    %p51 = por %p49, %p50
    %p52 = scmp.ne.s32.totalorder %s44, %s46
    %p53 = scmp.eq.s32.totalorder %s15, 1
    %p54 = por %p52, %p53
    %p55 = scmp.ne.s32.totalorder %s46, %s47
    %p56 = scmp.eq.s32.totalorder %s15, 0
    %p57 = por %p55, %p56
    %p58 = scmp.ne.s32.totalorder %s46, %s47
    %p59 = scmp.eq.s32.totalorder %s16, 1
    %p60 = por %p58, %p59
    %p62 = scmp.ne.s32.totalorder %s47, %s61
    %p63 = scmp.eq.s32.totalorder %s16, 0
    %p64 = por %p62, %p63
    %s66 = sadd.s32 %s65, 1
    %p69 = scmp.eq.s32.totalorder %s10, 1
    %p70 = scmp.ne.s32.totalorder %s65, %s67
    %p71 = scmp.eq.s32.totalorder %s10, 0
    %p72 = por %p70, %p71
    %p73 = scmp.ne.s32.totalorder %s65, %s67
    %p74 = scmp.eq.s32.totalorder %s15, 1
    %p75 = por %p73, %p74
    %p76 = scmp.ne.s32.totalorder %s67, %s68
    %p77 = scmp.eq.s32.totalorder %s15, 0
    %p78 = por %p76, %p77
    %p79 = scmp.ne.s32.totalorder %s67, %s68
    %p80 = scmp.eq.s32.totalorder %s16, 1
    %p81 = por %p79, %p80
    %p83 = scmp.ne.s32.totalorder %s68, %s82
    %p84 = scmp.eq.s32.totalorder %s16, 0
    %p85 = por %p83, %p84
    %s87 = sadd.s32 %s86, 1
    %p90 = scmp.eq.s32.totalorder %s10, 1
    %p91 = scmp.ne.s32.totalorder %s86, %s88
    %p92 = scmp.eq.s32.totalorder %s10, 0
    %p93 = por %p91, %p92
    %p94 = scmp.ne.s32.totalorder %s86, %s88
    %p95 = scmp.eq.s32.totalorder %s15, 1
    %p96 = por %p94, %p95
    %p97 = scmp.ne.s32.totalorder %s88, %s89
    %p98 = scmp.eq.s32.totalorder %s15, 0
    %p99 = por %p97, %p98
    %p100 = scmp.ne.s32.totalorder %s88, %s89
    %p101 = scmp.eq.s32.totalorder %s16, 1
    %p102 = por %p100, %p101
    %p104 = scmp.ne.s32.totalorder %s89, %s103
    %p105 = scmp.eq.s32.totalorder %s16, 0
    %p106 = por %p104, %p105
    %s107 = ssub.s32 %s10, %s17
    %p108 = scmp.eq.s32.totalorder %s107, 0
    %s110 = sadd.s32 %s109, 1
    %s111 = scalar_select %p108, %s109, %s110
    %p114 = pneg %p108
    %p115 = scmp.eq.s32.totalorder %s10, 1
    %p116 = por %p114, %p115
    %p117 = scmp.ne.s32.totalorder %s109, %s112
    %p118 = scmp.eq.s32.totalorder %s10, 0
    %p119 = por %p117, %p118
    %p120 = scmp.ne.s32.totalorder %s109, %s112
    %p121 = scmp.eq.s32.totalorder %s15, 1
    %p122 = por %p120, %p121
    %p123 = scmp.ne.s32.totalorder %s112, %s113
    %p124 = scmp.eq.s32.totalorder %s15, 0
    %p125 = por %p123, %p124
    %p126 = scmp.ne.s32.totalorder %s112, %s113
    %p127 = scmp.eq.s32.totalorder %s16, 1
    %p128 = por %p126, %p127
    %p130 = scmp.ne.s32.totalorder %s113, %s129
    %p131 = scmp.eq.s32.totalorder %s16, 0
    %p132 = por %p130, %p131
    %p133 = scmp.le.s32.totalorder 1, %s10
    %p134 = scmp.lt.s32.totalorder %s10, 3
    %p135 = pnand %p133, %p134
    %p136 = pneg %p135
    // Predicated region
    $region9: #{forward.46} parent=5 // pred_check
      _
    $region10: #{forward.46} parent=5 // pred_check_branch
      %138 = sbr.rel (%p135) target = $region12
    $region11: #{forward.46} parent=5 // pred_region
      %s139 = ssub.s32 %s10, 1
      // Predicated region
      $region13: #{forward.46} parent=11 // pred_check
        %p140 = pneg %p57
      $region14: #{forward.46} parent=11 // pred_check_branch
        %142 = sbr.rel (%p140) target = $region16
      $region15: #{forward.46} parent=11 // pred_region
        _
      $region16: #{forward.46} parent=11 // pred_fallthru
        _
      // Predicated region
      $region17: #{forward.46} parent=11 // pred_check
        %p143 = pneg %p78
      $region18: #{forward.46} parent=11 // pred_check_branch
        %145 = sbr.rel (%p143) target = $region20
      $region19: #{forward.46} parent=11 // pred_region
        _
      $region20: #{forward.46} parent=11 // pred_fallthru
        _
      // Predicated region
      $region21: #{forward.46} parent=11 // pred_check
        %p146 = pneg %p99
      $region22: #{forward.46} parent=11 // pred_check_branch
        %148 = sbr.rel (%p146) target = $region24
      $region23: #{forward.46} parent=11 // pred_region
        _
      $region24: #{forward.46} parent=11 // pred_fallthru
        _
    $region12: #{forward.46} parent=5 // pred_fallthru
      _
    %p149 = scmp.lt.s32.totalorder %s10, 2
    // Predicated region
    $region25: #{forward.46} parent=5 // pred_check
      %p150 = pneg %p149
    $region26: #{forward.46} parent=5 // pred_check_branch
      %152 = sbr.rel (%p150) target = $region28
    $region27: #{forward.46} parent=5 // pred_region
      // Predicated region
      $region29: #{forward.46} parent=27 // pred_check
        %p153 = pneg %p30
      $region30: #{forward.46} parent=27 // pred_check_branch
        %155 = sbr.rel (%p153) target = $region32
      $region31: #{forward.46} parent=27 // pred_region
        %p156 = scmp.lt.s32.totalorder %s10, 1
        %s157 = scalar_select %p156, %s10, 1
        %s158 = smul.addr %s157, 32
        %s159 = smul.addr %s158, 4
        %s160 = scalar_lea.vmem %s0, %s159
      $region32: #{forward.46} parent=27 // pred_fallthru
        _
    $region28: #{forward.46} parent=5 // pred_fallthru
      _
    %p161 = scmp.le.s32.totalorder 1, %s10
    %p162 = scmp.lt.s32.totalorder %s10, 3
    %p163 = pnand %p161, %p162
    %p164 = pneg %p163
    // Predicated region
    $region33: #{forward.46} parent=5 // pred_check
      _
    $region34: #{forward.46} parent=5 // pred_check_branch
      %166 = sbr.rel (%p163) target = $region36
    $region35: #{forward.46} parent=5 // pred_region
      %s167 = ssub.s32 %s10, 1
      %p168 = scmp.lt.s32.totalorder %s15, 1
      %s169 = scalar_select %p168, %s15, 1
      %s170 = smul.addr %s169, 32
      %s171 = smul.addr %s170, 4
      %s172 = scalar_lea.vmem %s0, %s171
      %p173 = pneg %p36
      %p174 = pneg %p33
      %p175 = pneg %p57
      %p176 = pneg %p54
      %p177 = pneg %p78
      %p178 = pneg %p75
      %p179 = pneg %p99
      %p180 = pneg %p96
      %p181 = pneg %p125
      %p182 = pneg %p122
      %p183 = scmp.lt.s32.totalorder %s15, 1
      %s184 = scalar_select %p183, %s15, 1
      %s185 = smul.addr %s184, 32
      %s186 = smul.addr %s185, 4
      %s187 = scalar_lea.vmem %s4, %s186
      %p188 = scmp.lt.s32.totalorder %s15, 1
      %s189 = scalar_select %p188, %s15, 1
      %s190 = smul.addr %s189, 32
      %s191 = smul.addr %s190, 4
      %s192 = scalar_lea.vmem %s0, %s191
      %p193 = scmp.lt.s32.totalorder %s15, 1
      %s194 = scalar_select %p193, %s15, 1
      %s195 = smul.addr %s194, 32
      %s196 = smul.addr %s195, 4
      %s197 = scalar_lea.vmem %s4, %s196
      %v198 = vld [vmem:[%s192] sm:$0xf]
      %v199 = vld [vmem:[%s192 + $0x4] sm:$0xf]
      %v200 = vld [vmem:[%s192 + $0x8] sm:$0xf]
      %v201 = vld [vmem:[%s192 + $0xc] sm:$0xf]
      %v202 = vld [vmem:[%s192 + $0x10] sm:$0xf]
      %v203 = vld [vmem:[%s192 + $0x14] sm:$0xf]
      %v204 = vld [vmem:[%s192 + $0x18] sm:$0xf]
      %v205 = vld [vmem:[%s192 + $0x1c] sm:$0xf]
      %v206 = vld [vmem:[%s192 + $0x20] sm:$0xf]
      %v207 = vld [vmem:[%s192 + $0x24] sm:$0xf]
      %v208 = vld [vmem:[%s192 + $0x28] sm:$0xf]
      %v209 = vld [vmem:[%s192 + $0x2c] sm:$0xf]
      %v210 = vld [vmem:[%s192 + $0x30] sm:$0xf]
      %v211 = vld [vmem:[%s192 + $0x34] sm:$0xf]
      %v212 = vld [vmem:[%s192 + $0x38] sm:$0xf]
      %v213 = vld [vmem:[%s192 + $0x3c] sm:$0xf]
      %v214 = vld [vmem:[%s192 + $0x40] sm:$0xf]
      %v215 = vld [vmem:[%s192 + $0x44] sm:$0xf]
      %v216 = vld [vmem:[%s192 + $0x48] sm:$0xf]
      %v217 = vld [vmem:[%s192 + $0x4c] sm:$0xf]
      %v218 = vld [vmem:[%s192 + $0x50] sm:$0xf]
      %v219 = vld [vmem:[%s192 + $0x54] sm:$0xf]
      %v220 = vld [vmem:[%s192 + $0x58] sm:$0xf]
      %v221 = vld [vmem:[%s192 + $0x5c] sm:$0xf]
      %v222 = vld [vmem:[%s192 + $0x60] sm:$0xf]
      %v223 = vld [vmem:[%s192 + $0x64] sm:$0xf]
      %v224 = vld [vmem:[%s192 + $0x68] sm:$0xf]
      %v225 = vld [vmem:[%s192 + $0x6c] sm:$0xf]
      %v226 = vld [vmem:[%s192 + $0x70] sm:$0xf]
      %v227 = vld [vmem:[%s192 + $0x74] sm:$0xf]
      %v228 = vld [vmem:[%s192 + $0x78] sm:$0xf]
      %v229 = vld [vmem:[%s192 + $0x7c] sm:$0xf]
      %v230 = vunpack.c.l.bf16 %v198
      %v231 = vunpack.c.l.bf16 %v199
      %v232 = vunpack.c.l.bf16 %v200
      %v233 = vunpack.c.l.bf16 %v201
      %v234 = vunpack.c.l.bf16 %v202
      %v235 = vunpack.c.l.bf16 %v203
      %v236 = vunpack.c.l.bf16 %v204
      %v237 = vunpack.c.l.bf16 %v205
      %v238 = vunpack.c.l.bf16 %v206
      %v239 = vunpack.c.l.bf16 %v207
      %v240 = vunpack.c.l.bf16 %v208
      %v241 = vunpack.c.l.bf16 %v209
      %v242 = vunpack.c.l.bf16 %v210
      %v243 = vunpack.c.l.bf16 %v211
      %v244 = vunpack.c.l.bf16 %v212
      %v245 = vunpack.c.l.bf16 %v213
      %v246 = vunpack.c.l.bf16 %v214
      %v247 = vunpack.c.l.bf16 %v215
      %v248 = vunpack.c.l.bf16 %v216
      %v249 = vunpack.c.l.bf16 %v217
      %v250 = vunpack.c.l.bf16 %v218
      %v251 = vunpack.c.l.bf16 %v219
      %v252 = vunpack.c.l.bf16 %v220
      %v253 = vunpack.c.l.bf16 %v221
      %v254 = vunpack.c.l.bf16 %v222
      %v255 = vunpack.c.l.bf16 %v223
      %v256 = vunpack.c.l.bf16 %v224
      %v257 = vunpack.c.l.bf16 %v225
      %v258 = vunpack.c.l.bf16 %v226
      %v259 = vunpack.c.l.bf16 %v227
      %v260 = vunpack.c.l.bf16 %v228
      %v261 = vunpack.c.l.bf16 %v229
      %vm262 = vcmask 130048
      %v263 = vsel %vm262, %v230, 0.0
      %v264 = vsel %vm262, %v231, 0.0
      %v265 = vadd.f32 %v263, %v264
      %v266 = vsel %vm262, %v232, 0.0
      %v267 = vadd.f32 %v265, %v266
      %v268 = vsel %vm262, %v233, 0.0
      %v269 = vadd.f32 %v267, %v268
      %v270 = vsel %vm262, %v234, 0.0
      %v271 = vadd.f32 %v269, %v270
      %v272 = vsel %vm262, %v235, 0.0
      %v273 = vadd.f32 %v271, %v272
      %v274 = vsel %vm262, %v236, 0.0
      %v275 = vadd.f32 %v273, %v274
      %v276 = vsel %vm262, %v237, 0.0
      %v277 = vadd.f32 %v275, %v276
      %v278 = vsel %vm262, %v238, 0.0
      %v279 = vadd.f32 %v277, %v278
      %v280 = vsel %vm262, %v239, 0.0
      %v281 = vadd.f32 %v279, %v280
      %v282 = vsel %vm262, %v240, 0.0
      %v283 = vadd.f32 %v281, %v282
      %v284 = vsel %vm262, %v241, 0.0
      %v285 = vadd.f32 %v283, %v284
      %v286 = vsel %vm262, %v242, 0.0
      %v287 = vadd.f32 %v285, %v286
      %v288 = vsel %vm262, %v243, 0.0
      %v289 = vadd.f32 %v287, %v288
      %v290 = vsel %vm262, %v244, 0.0
      %v291 = vadd.f32 %v289, %v290
      %v292 = vsel %vm262, %v245, 0.0
      %v293 = vadd.f32 %v291, %v292
      %v294 = vsel %vm262, %v246, 0.0
      %v295 = vadd.f32 %v293, %v294
      %v296 = vsel %vm262, %v247, 0.0
      %v297 = vadd.f32 %v295, %v296
      %v298 = vsel %vm262, %v248, 0.0
      %v299 = vadd.f32 %v297, %v298
      %v300 = vsel %vm262, %v249, 0.0
      %v301 = vadd.f32 %v299, %v300
      %v302 = vsel %vm262, %v250, 0.0
      %v303 = vadd.f32 %v301, %v302
      %v304 = vsel %vm262, %v251, 0.0
      %v305 = vadd.f32 %v303, %v304
      %v306 = vsel %vm262, %v252, 0.0
      %v307 = vadd.f32 %v305, %v306
      %v308 = vsel %vm262, %v253, 0.0
      %v309 = vadd.f32 %v307, %v308
      %v310 = vsel %vm262, %v254, 0.0
      %v311 = vadd.f32 %v309, %v310
      %v312 = vsel %vm262, %v255, 0.0
      %v313 = vadd.f32 %v311, %v312
      %v314 = vsel %vm262, %v256, 0.0
      %v315 = vadd.f32 %v313, %v314
      %v316 = vsel %vm262, %v257, 0.0
      %v317 = vadd.f32 %v315, %v316
      %v318 = vsel %vm262, %v258, 0.0
      %v319 = vadd.f32 %v317, %v318
      %v320 = vsel %vm262, %v259, 0.0
      %v321 = vadd.f32 %v319, %v320
      %v322 = vsel %vm262, %v260, 0.0
      %v323 = vadd.f32 %v321, %v322
      %v324 = vsel %vm262, %v261, 0.0
      %v325 = vadd.f32 %v323, %v324
      %v326 = vrot.slane %v325, 4
      %v327 = vadd.f32 %v325, %v326
      %v328 = vrot.slane %v327, 2
      %v329 = vadd.f32 %v327, %v328
      %v330 = vrot.slane %v329, 1
      %v331 = vadd.f32 %v329, %v330
      %v332 = vrcp.pop 256.0
      %v333 = vmul.f32 %v331, %v332
      %v334 = vmul.f32 %v230, %v230
      %v335 = vmul.f32 %v231, %v231
      %v336 = vmul.f32 %v232, %v232
      %v337 = vmul.f32 %v233, %v233
      %v338 = vmul.f32 %v234, %v234
      %v339 = vmul.f32 %v235, %v235
      %v340 = vmul.f32 %v236, %v236
      %v341 = vmul.f32 %v237, %v237
      %v342 = vmul.f32 %v238, %v238
      %v343 = vmul.f32 %v239, %v239
      %v344 = vmul.f32 %v240, %v240
      %v345 = vmul.f32 %v241, %v241
      %v346 = vmul.f32 %v242, %v242
      %v347 = vmul.f32 %v243, %v243
      %v348 = vmul.f32 %v244, %v244
      %v349 = vmul.f32 %v245, %v245
      %v350 = vmul.f32 %v246, %v246
      %v351 = vmul.f32 %v247, %v247
      %v352 = vmul.f32 %v248, %v248
      %v353 = vmul.f32 %v249, %v249
      %v354 = vmul.f32 %v250, %v250
      %v355 = vmul.f32 %v251, %v251
      %v356 = vmul.f32 %v252, %v252
      %v357 = vmul.f32 %v253, %v253
      %v358 = vmul.f32 %v254, %v254
      %v359 = vmul.f32 %v255, %v255
      %v360 = vmul.f32 %v256, %v256
      %v361 = vmul.f32 %v257, %v257
      %v362 = vmul.f32 %v258, %v258
      %v363 = vmul.f32 %v259, %v259
      %v364 = vmul.f32 %v260, %v260
      %v365 = vmul.f32 %v261, %v261
      %v366 = vsel %vm262, %v334, 0.0
      %v367 = vsel %vm262, %v335, 0.0
      %v368 = vadd.f32 %v366, %v367
      %v369 = vsel %vm262, %v336, 0.0
      %v370 = vadd.f32 %v368, %v369
      %v371 = vsel %vm262, %v337, 0.0
      %v372 = vadd.f32 %v370, %v371
      %v373 = vsel %vm262, %v338, 0.0
      %v374 = vadd.f32 %v372, %v373
      %v375 = vsel %vm262, %v339, 0.0
      %v376 = vadd.f32 %v374, %v375
      %v377 = vsel %vm262, %v340, 0.0
      %v378 = vadd.f32 %v376, %v377
      %v379 = vsel %vm262, %v341, 0.0
      %v380 = vadd.f32 %v378, %v379
      %v381 = vsel %vm262, %v342, 0.0
      %v382 = vadd.f32 %v380, %v381
      %v383 = vsel %vm262, %v343, 0.0
      %v384 = vadd.f32 %v382, %v383
      %v385 = vsel %vm262, %v344, 0.0
      %v386 = vadd.f32 %v384, %v385
      %v387 = vsel %vm262, %v345, 0.0
      %v388 = vadd.f32 %v386, %v387
      %v389 = vsel %vm262, %v346, 0.0
      %v390 = vadd.f32 %v388, %v389
      %v391 = vsel %vm262, %v347, 0.0
      %v392 = vadd.f32 %v390, %v391
      %v393 = vsel %vm262, %v348, 0.0
      %v394 = vadd.f32 %v392, %v393
      %v395 = vsel %vm262, %v349, 0.0
      %v396 = vadd.f32 %v394, %v395
      %v397 = vsel %vm262, %v350, 0.0
      %v398 = vadd.f32 %v396, %v397
      %v399 = vsel %vm262, %v351, 0.0
      %v400 = vadd.f32 %v398, %v399
      %v401 = vsel %vm262, %v352, 0.0
      %v402 = vadd.f32 %v400, %v401
      %v403 = vsel %vm262, %v353, 0.0
      %v404 = vadd.f32 %v402, %v403
      %v405 = vsel %vm262, %v354, 0.0
      %v406 = vadd.f32 %v404, %v405
      %v407 = vsel %vm262, %v355, 0.0
      %v408 = vadd.f32 %v406, %v407
      %v409 = vsel %vm262, %v356, 0.0
      %v410 = vadd.f32 %v408, %v409
      %v411 = vsel %vm262, %v357, 0.0
      %v412 = vadd.f32 %v410, %v411
      %v413 = vsel %vm262, %v358, 0.0
      %v414 = vadd.f32 %v412, %v413
      %v415 = vsel %vm262, %v359, 0.0
      %v416 = vadd.f32 %v414, %v415
      %v417 = vsel %vm262, %v360, 0.0
      %v418 = vadd.f32 %v416, %v417
      %v419 = vsel %vm262, %v361, 0.0
      %v420 = vadd.f32 %v418, %v419
      %v421 = vsel %vm262, %v362, 0.0
      %v422 = vadd.f32 %v420, %v421
      %v423 = vsel %vm262, %v363, 0.0
      %v424 = vadd.f32 %v422, %v423
      %v425 = vsel %vm262, %v364, 0.0
      %v426 = vadd.f32 %v424, %v425
      %v427 = vsel %vm262, %v365, 0.0
      %v428 = vadd.f32 %v426, %v427
      %v429 = vrot.slane %v428, 4
      %v430 = vadd.f32 %v428, %v429
      %v431 = vrot.slane %v430, 2
      %v432 = vadd.f32 %v430, %v431
      %v433 = vrot.slane %v432, 1
      %v434 = vadd.f32 %v432, %v433
      %v435 = vmul.f32 %v434, %v332
      %v436 = vld [vmem:[%s3] sm:$0xff]
      %v437 = vld [vmem:[%s3 + $0x8] sm:$0xff]
      %v439 = vsel %vm262, %v333, 0
      %441 = vmatprep.subr.mxu0 0.0
      %442 = vmatpush1.msra.mxu0 %v436
      %443 = vmatprep.subr.mxu0 0.0
      %444 = vmatpush1.msra.mxu0 %v437
      %445 = vmatprep.subr.mxu0 0.0
      %446 = vmatpush1.msra.mxu0 0.0
      %447 = vmatprep.subr.mxu0 0.0
      %448 = vmatpush1.msra.mxu0 0.0
      %449 = vmatprep.subr.mxu0 0.0
      %450 = vmatpush1.msra.mxu0 0.0
      %451 = vmatprep.subr.mxu0 0.0
      %452 = vmatpush1.msra.mxu0 0.0
      %453 = vmatprep.subr.mxu0 0.0
      %454 = vmatpush1.msra.mxu0 0.0
      %455 = vmatprep.subr.mxu0 0.0
      %456 = vmatpush1.msra.mxu0 0.0
      %457 = vmatprep.subr.mxu0 0.0
      %458 = vmatpush1.msra.mxu0 0.0
      %459 = vmatprep.subr.mxu0 0.0
      %460 = vmatpush1.msra.mxu0 0.0
      %461 = vmatprep.subr.mxu0 0.0
      %462 = vmatpush1.msra.mxu0 0.0
      %463 = vmatprep.subr.mxu0 0.0
      %464 = vmatpush1.msra.mxu0 0.0
      %465 = vmatprep.subr.mxu0 0.0
      %466 = vmatpush1.msra.mxu0 0.0
      %467 = vmatprep.subr.mxu0 0.0
      %468 = vmatpush1.msra.mxu0 0.0
      %469 = vmatprep.subr.mxu0 0.0
      %470 = vmatpush1.msra.mxu0 0.0
      %471 = vmatprep.subr.mxu0 0.0
      %472 = vmatpush1.msra.mxu0 0.0
      %473 = vmatprep.subr.mxu0 0.0
      %474 = vmatpush1.msra.mxu0 0.0
      %475 = vmatprep.subr.mxu0 0.0
      %476 = vmatpush1.msra.mxu0 0.0
      %477 = vmatprep.subr.mxu0 0.0
      %478 = vmatpush1.msra.mxu0 0.0
      %479 = vmatprep.subr.mxu0 0.0
      %480 = vmatpush1.msra.mxu0 0.0
      %481 = vmatprep.subr.mxu0 0.0
      %482 = vmatpush1.msra.mxu0 0.0
      %483 = vmatprep.subr.mxu0 0.0
      %484 = vmatpush1.msra.mxu0 0.0
      %485 = vmatprep.subr.mxu0 0.0
      %486 = vmatpush1.msra.mxu0 0.0
      %487 = vmatprep.subr.mxu0 0.0
      %488 = vmatpush1.msra.mxu0 0.0
      %489 = vmatprep.subr.mxu0 0.0
      %490 = vmatpush1.msra.mxu0 0.0
      %491 = vmatprep.subr.mxu0 0.0
      %492 = vmatpush1.msra.mxu0 0.0
      %493 = vmatprep.subr.mxu0 0.0
      %494 = vmatpush1.msra.mxu0 0.0
      %495 = vmatprep.subr.mxu0 0.0
      %496 = vmatpush1.msra.mxu0 0.0
      %497 = vmatprep.subr.mxu0 0.0
      %498 = vmatpush1.msra.mxu0 0.0
      %499 = vmatprep.subr.mxu0 0.0
      %500 = vmatpush1.msra.mxu0 0.0
      %501 = vmatprep.subr.mxu0 0.0
      %502 = vmatpush1.msra.mxu0 0.0
      %503 = vmatprep.subr.mxu0 0.0
      %504 = vmatpush1.msra.mxu0 0.0
      %505 = vmatprep.mubr.f32.mxu0 0.0
      %506 = vmatmul.mubr.f32.gmra.mrb[0].mxu0 %v439
      %v507 = vpop.f32.mrb[0].mxu0
      %v508 = vadd.f32 0.0, %v507
      %v509 = vpop.f32.mrb[0].mxu0
      %510 = vdwg.mxu0
      %v512 = vsel %vm262, %v435, 0
      %514 = vmatprep.subr.mxu0 0.0
      %515 = vmatpush1.msra.mxu0 %v436
      %516 = vmatprep.subr.mxu0 0.0
      %517 = vmatpush1.msra.mxu0 %v437
      %518 = vmatprep.subr.mxu0 0.0
      %519 = vmatpush1.msra.mxu0 0.0
      %520 = vmatprep.subr.mxu0 0.0
      %521 = vmatpush1.msra.mxu0 0.0
      %522 = vmatprep.subr.mxu0 0.0
      %523 = vmatpush1.msra.mxu0 0.0
      %524 = vmatprep.subr.mxu0 0.0
      %525 = vmatpush1.msra.mxu0 0.0
      %526 = vmatprep.subr.mxu0 0.0
      %527 = vmatpush1.msra.mxu0 0.0
      %528 = vmatprep.subr.mxu0 0.0
      %529 = vmatpush1.msra.mxu0 0.0
      %530 = vmatprep.subr.mxu0 0.0
      %531 = vmatpush1.msra.mxu0 0.0
      %532 = vmatprep.subr.mxu0 0.0
      %533 = vmatpush1.msra.mxu0 0.0
      %534 = vmatprep.subr.mxu0 0.0
      %535 = vmatpush1.msra.mxu0 0.0
      %536 = vmatprep.subr.mxu0 0.0
      %537 = vmatpush1.msra.mxu0 0.0
      %538 = vmatprep.subr.mxu0 0.0
      %539 = vmatpush1.msra.mxu0 0.0
      %540 = vmatprep.subr.mxu0 0.0
      %541 = vmatpush1.msra.mxu0 0.0
      %542 = vmatprep.subr.mxu0 0.0
      %543 = vmatpush1.msra.mxu0 0.0
      %544 = vmatprep.subr.mxu0 0.0
      %545 = vmatpush1.msra.mxu0 0.0
      %546 = vmatprep.subr.mxu0 0.0
      %547 = vmatpush1.msra.mxu0 0.0
      %548 = vmatprep.subr.mxu0 0.0
      %549 = vmatpush1.msra.mxu0 0.0
      %550 = vmatprep.subr.mxu0 0.0
      %551 = vmatpush1.msra.mxu0 0.0
      %552 = vmatprep.subr.mxu0 0.0
      %553 = vmatpush1.msra.mxu0 0.0
      %554 = vmatprep.subr.mxu0 0.0
      %555 = vmatpush1.msra.mxu0 0.0
      %556 = vmatprep.subr.mxu0 0.0
      %557 = vmatpush1.msra.mxu0 0.0
      %558 = vmatprep.subr.mxu0 0.0
      %559 = vmatpush1.msra.mxu0 0.0
      %560 = vmatprep.subr.mxu0 0.0
      %561 = vmatpush1.msra.mxu0 0.0
      %562 = vmatprep.subr.mxu0 0.0
      %563 = vmatpush1.msra.mxu0 0.0
      %564 = vmatprep.subr.mxu0 0.0
      %565 = vmatpush1.msra.mxu0 0.0
      %566 = vmatprep.subr.mxu0 0.0
      %567 = vmatpush1.msra.mxu0 0.0
      %568 = vmatprep.subr.mxu0 0.0
      %569 = vmatpush1.msra.mxu0 0.0
      %570 = vmatprep.subr.mxu0 0.0
      %571 = vmatpush1.msra.mxu0 0.0
      %572 = vmatprep.subr.mxu0 0.0
      %573 = vmatpush1.msra.mxu0 0.0
      %574 = vmatprep.subr.mxu0 0.0
      %575 = vmatpush1.msra.mxu0 0.0
      %576 = vmatprep.subr.mxu0 0.0
      %577 = vmatpush1.msra.mxu0 0.0
      %578 = vmatprep.mubr.f32.mxu0 0.0
      %579 = vmatmul.mubr.f32.gmra.mrb[0].mxu0 %v512
      %v580 = vpop.f32.mrb[0].mxu0
      %v581 = vadd.f32 0.0, %v580
      %v582 = vpop.f32.mrb[0].mxu0
      %583 = vdwg.mxu0
      %v584 = vmul.f32 %v508, %v508
      %v585 = vsub.f32 %v581, %v584
      %v586 = vadd.f32 %v585, 1e-05
      %v587 = vrsqrt.pop %v586
      %v588 = vlaneseq
      %v589 = vshrl.u32 %v588, 7
      %v590 = vsub.s32 0, %v589
      %v591 = vrot.slane %v508, %v590
      %v592 = vsub.f32 %v230, %v591
      %v593 = vsub.f32 %v231, %v591
      %v594 = vsub.f32 %v232, %v591
      %v595 = vsub.f32 %v233, %v591
      %v596 = vsub.f32 %v234, %v591
      %v597 = vsub.f32 %v235, %v591
      %v598 = vsub.f32 %v236, %v591
      %v599 = vsub.f32 %v237, %v591
      %v600 = vsub.f32 %v238, %v591
      %v601 = vsub.f32 %v239, %v591
      %v602 = vsub.f32 %v240, %v591
      %v603 = vsub.f32 %v241, %v591
      %v604 = vsub.f32 %v242, %v591
      %v605 = vsub.f32 %v243, %v591
      %v606 = vsub.f32 %v244, %v591
      %v607 = vsub.f32 %v245, %v591
      %v608 = vsub.f32 %v246, %v591
      %v609 = vsub.f32 %v247, %v591
      %v610 = vsub.f32 %v248, %v591
      %v611 = vsub.f32 %v249, %v591
      %v612 = vsub.f32 %v250, %v591
      %v613 = vsub.f32 %v251, %v591
      %v614 = vsub.f32 %v252, %v591
      %v615 = vsub.f32 %v253, %v591
      %v616 = vsub.f32 %v254, %v591
      %v617 = vsub.f32 %v255, %v591
      %v618 = vsub.f32 %v256, %v591
      %v619 = vsub.f32 %v257, %v591
      %v620 = vsub.f32 %v258, %v591
      %v621 = vsub.f32 %v259, %v591
      %v622 = vsub.f32 %v260, %v591
      %v623 = vsub.f32 %v261, %v591
      %v624 = vlaneseq
      %v625 = vshrl.u32 %v624, 7
      %v626 = vsub.s32 0, %v625
      %v627 = vrot.slane %v587, %v626
      %v628 = vmul.f32 %v592, %v627
      %v629 = vmul.f32 %v593, %v627
      %v630 = vmul.f32 %v594, %v627
      %v631 = vmul.f32 %v595, %v627
      %v632 = vmul.f32 %v596, %v627
      %v633 = vmul.f32 %v597, %v627
      %v634 = vmul.f32 %v598, %v627
      %v635 = vmul.f32 %v599, %v627
      %v636 = vmul.f32 %v600, %v627
      %v637 = vmul.f32 %v601, %v627
      %v638 = vmul.f32 %v602, %v627
      %v639 = vmul.f32 %v603, %v627
      %v640 = vmul.f32 %v604, %v627
      %v641 = vmul.f32 %v605, %v627
      %v642 = vmul.f32 %v606, %v627
      %v643 = vmul.f32 %v607, %v627
      %v644 = vmul.f32 %v608, %v627
      %v645 = vmul.f32 %v609, %v627
      %v646 = vmul.f32 %v610, %v627
      %v647 = vmul.f32 %v611, %v627
      %v648 = vmul.f32 %v612, %v627
      %v649 = vmul.f32 %v613, %v627
      %v650 = vmul.f32 %v614, %v627
      %v651 = vmul.f32 %v615, %v627
      %v652 = vmul.f32 %v616, %v627
      %v653 = vmul.f32 %v617, %v627
      %v654 = vmul.f32 %v618, %v627
      %v655 = vmul.f32 %v619, %v627
      %v656 = vmul.f32 %v620, %v627
      %v657 = vmul.f32 %v621, %v627
      %v658 = vmul.f32 %v622, %v627
      %v659 = vmul.f32 %v623, %v627
      %v660 = vld [vmem:[%s1] sm:$0x1]
      %v662 = vlaneseq
      %v663 = vshrl.u32 %v662, 7
      %v664 = vsub.s32 0, %v663
      %v665 = vrot.slane %v660, %v664
      %v667 = vmul.f32 %v628, %v665
      %v668 = vmul.f32 %v629, %v665
      %v669 = vmul.f32 %v630, %v665
      %v670 = vmul.f32 %v631, %v665
      %v671 = vmul.f32 %v632, %v665
      %v672 = vmul.f32 %v633, %v665
      %v673 = vmul.f32 %v634, %v665
      %v674 = vmul.f32 %v635, %v665
      %v675 = vmul.f32 %v636, %v665
      %v676 = vmul.f32 %v637, %v665
      %v677 = vmul.f32 %v638, %v665
      %v678 = vmul.f32 %v639, %v665
      %v679 = vmul.f32 %v640, %v665
      %v680 = vmul.f32 %v641, %v665
      %v681 = vmul.f32 %v642, %v665
      %v682 = vmul.f32 %v643, %v665
      %v683 = vmul.f32 %v644, %v665
      %v684 = vmul.f32 %v645, %v665
      %v685 = vmul.f32 %v646, %v665
      %v686 = vmul.f32 %v647, %v665
      %v687 = vmul.f32 %v648, %v665
      %v688 = vmul.f32 %v649, %v665
      %v689 = vmul.f32 %v650, %v665
      %v690 = vmul.f32 %v651, %v665
      %v691 = vmul.f32 %v652, %v665
      %v692 = vmul.f32 %v653, %v665
      %v693 = vmul.f32 %v654, %v665
      %v694 = vmul.f32 %v655, %v665
      %v695 = vmul.f32 %v656, %v665
      %v696 = vmul.f32 %v657, %v665
      %v697 = vmul.f32 %v658, %v665
      %v698 = vmul.f32 %v659, %v665
      %v699 = vld [vmem:[%s2] sm:$0x1]
      %v701 = vlaneseq
      %v702 = vshrl.u32 %v701, 7
      %v703 = vsub.s32 0, %v702
      %v704 = vrot.slane %v699, %v703
      %v706 = vadd.f32 %v667, %v704
      %v707 = vadd.f32 %v668, %v704
      %v708 = vadd.f32 %v669, %v704
      %v709 = vadd.f32 %v670, %v704
      %v710 = vadd.f32 %v671, %v704
      %v711 = vadd.f32 %v672, %v704
      %v712 = vadd.f32 %v673, %v704
      %v713 = vadd.f32 %v674, %v704
      %v714 = vadd.f32 %v675, %v704
      %v715 = vadd.f32 %v676, %v704
      %v716 = vadd.f32 %v677, %v704
      %v717 = vadd.f32 %v678, %v704
      %v718 = vadd.f32 %v679, %v704
      %v719 = vadd.f32 %v680, %v704
      %v720 = vadd.f32 %v681, %v704
      %v721 = vadd.f32 %v682, %v704
      %v722 = vadd.f32 %v683, %v704
      %v723 = vadd.f32 %v684, %v704
      %v724 = vadd.f32 %v685, %v704
      %v725 = vadd.f32 %v686, %v704
      %v726 = vadd.f32 %v687, %v704
      %v727 = vadd.f32 %v688, %v704
      %v728 = vadd.f32 %v689, %v704
      %v729 = vadd.f32 %v690, %v704
      %v730 = vadd.f32 %v691, %v704
      %v731 = vadd.f32 %v692, %v704
      %v732 = vadd.f32 %v693, %v704
      %v733 = vadd.f32 %v694, %v704
      %v734 = vadd.f32 %v695, %v704
      %v735 = vadd.f32 %v696, %v704
      %v736 = vadd.f32 %v697, %v704
      %v737 = vadd.f32 %v698, %v704
      %v738 = vmax.f32 %v706, 0.0
      %v739 = vmax.f32 %v707, 0.0
      %v740 = vmax.f32 %v708, 0.0
      %v741 = vmax.f32 %v709, 0.0
      %v742 = vmax.f32 %v710, 0.0
      %v743 = vmax.f32 %v711, 0.0
      %v744 = vmax.f32 %v712, 0.0
      %v745 = vmax.f32 %v713, 0.0
      %v746 = vmax.f32 %v714, 0.0
      %v747 = vmax.f32 %v715, 0.0
      %v748 = vmax.f32 %v716, 0.0
      %v749 = vmax.f32 %v717, 0.0
      %v750 = vmax.f32 %v718, 0.0
      %v751 = vmax.f32 %v719, 0.0
      %v752 = vmax.f32 %v720, 0.0
      %v753 = vmax.f32 %v721, 0.0
      %v754 = vmax.f32 %v722, 0.0
      %v755 = vmax.f32 %v723, 0.0
      %v756 = vmax.f32 %v724, 0.0
      %v757 = vmax.f32 %v725, 0.0
      %v758 = vmax.f32 %v726, 0.0
      %v759 = vmax.f32 %v727, 0.0
      %v760 = vmax.f32 %v728, 0.0
      %v761 = vmax.f32 %v729, 0.0
      %v762 = vmax.f32 %v730, 0.0
      %v763 = vmax.f32 %v731, 0.0
      %v764 = vmax.f32 %v732, 0.0
      %v765 = vmax.f32 %v733, 0.0
      %v766 = vmax.f32 %v734, 0.0
      %v767 = vmax.f32 %v735, 0.0
      %v768 = vmax.f32 %v736, 0.0
      %v769 = vmax.f32 %v737, 0.0
      %v770 = vpack.c.bf16 %v739, %v738
      %v771 = vpack.c.bf16 %v741, %v740
      %v772 = vpack.c.bf16 %v743, %v742
      %v773 = vpack.c.bf16 %v745, %v744
      %v774 = vpack.c.bf16 %v747, %v746
      %v775 = vpack.c.bf16 %v749, %v748
      %v776 = vpack.c.bf16 %v751, %v750
      %v777 = vpack.c.bf16 %v753, %v752
      %v778 = vpack.c.bf16 %v755, %v754
      %v779 = vpack.c.bf16 %v757, %v756
      %v780 = vpack.c.bf16 %v759, %v758
      %v781 = vpack.c.bf16 %v761, %v760
      %v782 = vpack.c.bf16 %v763, %v762
      %v783 = vpack.c.bf16 %v765, %v764
      %v784 = vpack.c.bf16 %v767, %v766
      %v785 = vpack.c.bf16 %v769, %v768
      %v802 = vunpack.c.l.b16 %v770
      %v803 = vunpack.c.h.b16 %v770
      %v804 = vunpack.c.l.b16 %v771
      %v805 = vunpack.c.h.b16 %v771
      %v806 = vunpack.c.l.b16 %v772
      %v807 = vunpack.c.h.b16 %v772
      %v808 = vunpack.c.l.b16 %v773
      %v809 = vunpack.c.h.b16 %v773
      %v810 = vunpack.c.l.b16 %v774
      %v811 = vunpack.c.h.b16 %v774
      %v812 = vunpack.c.l.b16 %v775
      %v813 = vunpack.c.h.b16 %v775
      %v814 = vunpack.c.l.b16 %v776
      %v815 = vunpack.c.h.b16 %v776
      %v816 = vunpack.c.l.b16 %v777
      %v817 = vunpack.c.h.b16 %v777
      %v818 = vunpack.c.l.b16 %v778
      %v819 = vunpack.c.h.b16 %v778
      %v820 = vunpack.c.l.b16 %v779
      %v821 = vunpack.c.h.b16 %v779
      %v822 = vunpack.c.l.b16 %v780
      %v823 = vunpack.c.h.b16 %v780
      %v824 = vunpack.c.l.b16 %v781
      %v825 = vunpack.c.h.b16 %v781
      %v826 = vunpack.c.l.b16 %v782
      %v827 = vunpack.c.h.b16 %v782
      %v828 = vunpack.c.l.b16 %v783
      %v829 = vunpack.c.h.b16 %v783
      %v830 = vunpack.c.l.b16 %v784
      %v831 = vunpack.c.h.b16 %v784
      %v832 = vunpack.c.l.b16 %v785
      %v833 = vunpack.c.h.b16 %v785
      %v834 = vpack.c.b16 %v802, %v802
      %v835 = vpack.c.b16 %v803, %v803
      %v836 = vpack.c.b16 %v804, %v804
      %v837 = vpack.c.b16 %v805, %v805
      %v838 = vpack.c.b16 %v806, %v806
      %v839 = vpack.c.b16 %v807, %v807
      %v840 = vpack.c.b16 %v808, %v808
      %v841 = vpack.c.b16 %v809, %v809
      %v842 = vpack.c.b16 %v810, %v810
      %v843 = vpack.c.b16 %v811, %v811
      %v844 = vpack.c.b16 %v812, %v812
      %v845 = vpack.c.b16 %v813, %v813
      %v846 = vpack.c.b16 %v814, %v814
      %v847 = vpack.c.b16 %v815, %v815
      %v848 = vpack.c.b16 %v816, %v816
      %v849 = vpack.c.b16 %v817, %v817
      %v850 = vpack.c.b16 %v818, %v818
      %v851 = vpack.c.b16 %v819, %v819
      %v852 = vpack.c.b16 %v820, %v820
      %v853 = vpack.c.b16 %v821, %v821
      %v854 = vpack.c.b16 %v822, %v822
      %v855 = vpack.c.b16 %v823, %v823
      %v856 = vpack.c.b16 %v824, %v824
      %v857 = vpack.c.b16 %v825, %v825
      %v858 = vpack.c.b16 %v826, %v826
      %v859 = vpack.c.b16 %v827, %v827
      %v860 = vpack.c.b16 %v828, %v828
      %v861 = vpack.c.b16 %v829, %v829
      %v862 = vpack.c.b16 %v830, %v830
      %v863 = vpack.c.b16 %v831, %v831
      %v864 = vpack.c.b16 %v832, %v832
      %v865 = vpack.c.b16 %v833, %v833
      %vm898 = vcmask 125952
      %899 = vst.msk [vmem:[%s197] sm:$0xf] %vm898, %v834
      %900 = vst.msk [vmem:[%s197 + $0x4] sm:$0xf] %vm898, %v835
      %901 = vst.msk [vmem:[%s197 + $0x8] sm:$0xf] %vm898, %v836
      %902 = vst.msk [vmem:[%s197 + $0xc] sm:$0xf] %vm898, %v837
      %903 = vst.msk [vmem:[%s197 + $0x10] sm:$0xf] %vm898, %v838
      %904 = vst.msk [vmem:[%s197 + $0x14] sm:$0xf] %vm898, %v839
      %905 = vst.msk [vmem:[%s197 + $0x18] sm:$0xf] %vm898, %v840
      %906 = vst.msk [vmem:[%s197 + $0x1c] sm:$0xf] %vm898, %v841
      %907 = vst.msk [vmem:[%s197 + $0x20] sm:$0xf] %vm898, %v842
      %908 = vst.msk [vmem:[%s197 + $0x24] sm:$0xf] %vm898, %v843
      %909 = vst.msk [vmem:[%s197 + $0x28] sm:$0xf] %vm898, %v844
      %910 = vst.msk [vmem:[%s197 + $0x2c] sm:$0xf] %vm898, %v845
      %911 = vst.msk [vmem:[%s197 + $0x30] sm:$0xf] %vm898, %v846
      %912 = vst.msk [vmem:[%s197 + $0x34] sm:$0xf] %vm898, %v847
      %913 = vst.msk [vmem:[%s197 + $0x38] sm:$0xf] %vm898, %v848
      %914 = vst.msk [vmem:[%s197 + $0x3c] sm:$0xf] %vm898, %v849
      %915 = vst.msk [vmem:[%s197 + $0x40] sm:$0xf] %vm898, %v850
      %916 = vst.msk [vmem:[%s197 + $0x44] sm:$0xf] %vm898, %v851
      %917 = vst.msk [vmem:[%s197 + $0x48] sm:$0xf] %vm898, %v852
      %918 = vst.msk [vmem:[%s197 + $0x4c] sm:$0xf] %vm898, %v853
      %919 = vst.msk [vmem:[%s197 + $0x50] sm:$0xf] %vm898, %v854
      %920 = vst.msk [vmem:[%s197 + $0x54] sm:$0xf] %vm898, %v855
      %921 = vst.msk [vmem:[%s197 + $0x58] sm:$0xf] %vm898, %v856
      %922 = vst.msk [vmem:[%s197 + $0x5c] sm:$0xf] %vm898, %v857
      %923 = vst.msk [vmem:[%s197 + $0x60] sm:$0xf] %vm898, %v858
      %924 = vst.msk [vmem:[%s197 + $0x64] sm:$0xf] %vm898, %v859
      %925 = vst.msk [vmem:[%s197 + $0x68] sm:$0xf] %vm898, %v860
      %926 = vst.msk [vmem:[%s197 + $0x6c] sm:$0xf] %vm898, %v861
      %927 = vst.msk [vmem:[%s197 + $0x70] sm:$0xf] %vm898, %v862
      %928 = vst.msk [vmem:[%s197 + $0x74] sm:$0xf] %vm898, %v863
      %929 = vst.msk [vmem:[%s197 + $0x78] sm:$0xf] %vm898, %v864
      %930 = vst.msk [vmem:[%s197 + $0x7c] sm:$0xf] %vm898, %v865
      %p931 = scmp.lt.s32.totalorder %s15, 1
      %s932 = scalar_select %p931, %s15, 1
      %s933 = smul.addr %s932, 32
      %s934 = smul.addr %s933, 4
      %s935 = scalar_lea.vmem %s4, %s934
      // Predicated region
      $region37: #{forward.46} parent=35 // pred_check
        %p936 = pneg %p122
      $region38: #{forward.46} parent=35 // pred_check_branch
        %938 = sbr.rel (%p936) target = $region40
      $region39: #{forward.46} parent=35 // pred_region
        _
      $region40: #{forward.46} parent=35 // pred_fallthru
        _
    $region36: #{forward.46} parent=5 // pred_fallthru
      _
    %p939 = scmp.le.s32.totalorder 2, %s10
    // Predicated region
    $region41: #{forward.46} parent=5 // pred_check
      %p940 = pneg %p939
    $region42: #{forward.46} parent=5 // pred_check_branch
      %942 = sbr.rel (%p940) target = $region44
    $region43: #{forward.46} parent=5 // pred_region
      %s943 = ssub.s32 %s10, 2
      // Predicated region
      $region45: #{forward.46} parent=43 // pred_check
        %p944 = pneg %p128
      $region46: #{forward.46} parent=43 // pred_check_branch
        %946 = sbr.rel (%p944) target = $region48
      $region47: #{forward.46} parent=43 // pred_region
        %p947 = scmp.lt.s32.totalorder %s16, 1
        %s948 = scalar_select %p947, %s16, 1
        %s949 = smul.addr %s948, 32
        %s950 = smul.addr %s949, 4
        %s951 = scalar_lea.vmem %s4, %s950
      $region48: #{forward.46} parent=43 // pred_fallthru
        _
    $region44: #{forward.46} parent=5 // pred_fallthru
      _
  $region6: #{forward.46} parent=0 // loop_footer
    %s14 = sadd.s32 1, %s10
  $region7: #{forward.46} parent=0 // loop_footer_branch
    %9 = sbr.rel target = $region3
  $region8: #{forward.46} parent=0 // loop_exit
    _

// kernel: forward.47
$region0: #{forward.47}
  #allocation0 [shape = 'u32[]', space=smem, size = 0x4, offset = 0x4, fixed_abs, tag = 'smem constant byte address 0x4 - core index']
  #allocation1 [shape = 'u32[144,128]{1,0:T(1,128)}', space=vmem, size = 0x12000, scoped, tag = 'internal scratch']
  %s0 = inlined_call_operand.vmem [shape: bf16[512,256], index: 0, kind: input, shape index: {}]
  %s1 = inlined_call_operand.vmem [shape: bf16[256,128], index: 1, kind: input, shape index: {}]
  %s2 = inlined_call_operand.vmem [shape: f32[1,128], index: 2, kind: input, shape index: {}]
  %s3 = inlined_call_operand.vmem [shape: f32[512,128], index: 3, kind: output, shape index: {}]
  %s4 = sld [smem:[#allocation0]]
  $region45: #{forward.47} parent=0
    _
  %s6 = ssub.s32 1, %s4
  %s7 = scalar_select 0, %s6, %s4
  loop: start=0, step=1, limit=4
  $region2: #{forward.47} parent=0 // loop_pre_header
    _
  $region3: #{forward.47} parent=0 // loop_header
    %s9 = sphi 0, %s13
    %p10 = scmp.ge.s32.totalorder %s9, 4
    %s19 = sphi 0, %s21
    %s22 = sphi 0, %s19
    %s23 = sphi 0, %s22
    %s39 = sphi 0, %s23
    %s43 = sphi 0, %s43
    %s45 = sphi 0, %s43
    %s46 = sphi 0, %s45
    %s60 = sphi 0, %s46
    %s64 = sphi 0, %s64
    %s66 = sphi 0, %s64
    %s67 = sphi 0, %s66
    %s81 = sphi 0, %s67
    %s87 = sphi 0, %s89
    %s90 = sphi 0, %s87
    %s91 = sphi 0, %s90
    %s107 = sphi 0, %s91
  $region4: #{forward.47} parent=0 // loop_header_branch
    %12 = sbr.rel (%p10) target = $region8
  $region5: #{forward.47} parent=0 // loop_body
    %s14 = ssub.s32 %s9, 1
    %s15 = ssub.s32 %s9, 2
    %s16 = sadd.s32 %s9, 1
    %s17 = ssub.s32 %s9, %s16
    %p18 = scmp.eq.s32.totalorder %s17, 0
    %s20 = sadd.s32 %s19, 1
    %s21 = scalar_select %p18, %s19, %s20
    %p24 = pneg %p18
    %p25 = scmp.eq.s32.totalorder %s9, 1
    %p26 = por %p24, %p25
    %p27 = scmp.ne.s32.totalorder %s19, %s22
    %p28 = scmp.eq.s32.totalorder %s9, 0
    %p29 = por %p27, %p28
    %p30 = scmp.ne.s32.totalorder %s19, %s22
    %p31 = scmp.eq.s32.totalorder %s14, 1
    %p32 = por %p30, %p31
    %p33 = scmp.ne.s32.totalorder %s22, %s23
    %p34 = scmp.eq.s32.totalorder %s14, 0
    %p35 = por %p33, %p34
    %p36 = scmp.ne.s32.totalorder %s22, %s23
    %p37 = scmp.eq.s32.totalorder %s15, 1
    %p38 = por %p36, %p37
    %p40 = scmp.ne.s32.totalorder %s23, %s39
    %p41 = scmp.eq.s32.totalorder %s15, 0
    %p42 = por %p40, %p41
    %s44 = sadd.s32 %s43, 1
    %p47 = scmp.eq.s32.totalorder %s9, 1
    %p48 = scmp.ne.s32.totalorder %s43, %s45
    %p49 = scmp.eq.s32.totalorder %s9, 0
    %p50 = por %p48, %p49
    %p51 = scmp.ne.s32.totalorder %s43, %s45
    %p52 = scmp.eq.s32.totalorder %s14, 1
    %p53 = por %p51, %p52
    %p54 = scmp.ne.s32.totalorder %s45, %s46
    %p55 = scmp.eq.s32.totalorder %s14, 0
    %p56 = por %p54, %p55
    %p57 = scmp.ne.s32.totalorder %s45, %s46
    %p58 = scmp.eq.s32.totalorder %s15, 1
    %p59 = por %p57, %p58
    %p61 = scmp.ne.s32.totalorder %s46, %s60
    %p62 = scmp.eq.s32.totalorder %s15, 0
    %p63 = por %p61, %p62
    %s65 = sadd.s32 %s64, 1
    %p68 = scmp.eq.s32.totalorder %s9, 1
    %p69 = scmp.ne.s32.totalorder %s64, %s66
    %p70 = scmp.eq.s32.totalorder %s9, 0
    %p71 = por %p69, %p70
    %p72 = scmp.ne.s32.totalorder %s64, %s66
    %p73 = scmp.eq.s32.totalorder %s14, 1
    %p74 = por %p72, %p73
    %p75 = scmp.ne.s32.totalorder %s66, %s67
    %p76 = scmp.eq.s32.totalorder %s14, 0
    %p77 = por %p75, %p76
    %p78 = scmp.ne.s32.totalorder %s66, %s67
    %p79 = scmp.eq.s32.totalorder %s15, 1
    %p80 = por %p78, %p79
    %p82 = scmp.ne.s32.totalorder %s67, %s81
    %p83 = scmp.eq.s32.totalorder %s15, 0
    %p84 = por %p82, %p83
    %s85 = ssub.s32 %s9, %s16
    %p86 = scmp.eq.s32.totalorder %s85, 0
    %s88 = sadd.s32 %s87, 1
    %s89 = scalar_select %p86, %s87, %s88
    %p92 = pneg %p86
    %p93 = scmp.eq.s32.totalorder %s9, 1
    %p94 = por %p92, %p93
    %p95 = scmp.ne.s32.totalorder %s87, %s90
    %p96 = scmp.eq.s32.totalorder %s9, 0
    %p97 = por %p95, %p96
    %p98 = scmp.ne.s32.totalorder %s87, %s90
    %p99 = scmp.eq.s32.totalorder %s14, 1
    %p100 = por %p98, %p99
    %p101 = scmp.ne.s32.totalorder %s90, %s91
    %p102 = scmp.eq.s32.totalorder %s14, 0
    %p103 = por %p101, %p102
    %p104 = scmp.ne.s32.totalorder %s90, %s91
    %p105 = scmp.eq.s32.totalorder %s15, 1
    %p106 = por %p104, %p105
    %p108 = scmp.ne.s32.totalorder %s91, %s107
    %p109 = scmp.eq.s32.totalorder %s15, 0
    %p110 = por %p108, %p109
    %p111 = scmp.le.s32.totalorder 1, %s9
    %p112 = scmp.lt.s32.totalorder %s9, 3
    %p113 = pnand %p111, %p112
    %p114 = pneg %p113
    // Predicated region
    $region9: #{forward.47} parent=5 // pred_check
      _
    $region10: #{forward.47} parent=5 // pred_check_branch
      %116 = sbr.rel (%p113) target = $region12
    $region11: #{forward.47} parent=5 // pred_region
      %s117 = ssub.s32 %s9, 1
      // Predicated region
      $region13: #{forward.47} parent=11 // pred_check
        %p118 = pneg %p56
      $region14: #{forward.47} parent=11 // pred_check_branch
        %120 = sbr.rel (%p118) target = $region16
      $region15: #{forward.47} parent=11 // pred_region
        _
      $region16: #{forward.47} parent=11 // pred_fallthru
        _
      // Predicated region
      $region17: #{forward.47} parent=11 // pred_check
        %p121 = pneg %p77
      $region18: #{forward.47} parent=11 // pred_check_branch
        %123 = sbr.rel (%p121) target = $region20
      $region19: #{forward.47} parent=11 // pred_region
        _
      $region20: #{forward.47} parent=11 // pred_fallthru
        _
    $region12: #{forward.47} parent=5 // pred_fallthru
      _
    %p124 = scmp.lt.s32.totalorder %s9, 2
    // Predicated region
    $region21: #{forward.47} parent=5 // pred_check
      %p125 = pneg %p124
    $region22: #{forward.47} parent=5 // pred_check_branch
      %127 = sbr.rel (%p125) target = $region24
    $region23: #{forward.47} parent=5 // pred_region
      // Predicated region
      $region25: #{forward.47} parent=23 // pred_check
        %p128 = pneg %p29
      $region26: #{forward.47} parent=23 // pred_check_branch
        %130 = sbr.rel (%p128) target = $region28
      $region27: #{forward.47} parent=23 // pred_region
        %s131 = smul.u32 32, %s9
        %p132 = scmp.lt.s32.totalorder %s131, 63
        %s133 = scalar_select %p132, %s131, 63
        %s134 = smul.addr %s133, 2
        %s135 = smul.addr %s134, 4
        %s136 = scalar_lea.vmem %s0, %s135
        %s137 = smul.u32 32, %s9
      $region28: #{forward.47} parent=23 // pred_fallthru
        _
    $region24: #{forward.47} parent=5 // pred_fallthru
      _
    %p138 = scmp.le.s32.totalorder 1, %s9
    %p139 = scmp.lt.s32.totalorder %s9, 3
    %p140 = pnand %p138, %p139
    %p141 = pneg %p140
    // Predicated region
    $region29: #{forward.47} parent=5 // pred_check
      _
    $region30: #{forward.47} parent=5 // pred_check_branch
      %143 = sbr.rel (%p140) target = $region32
    $region31: #{forward.47} parent=5 // pred_region
      %s144 = ssub.s32 %s9, 1
      %s145 = smul.u32 32, %s14
      %p146 = scmp.lt.s32.totalorder %s145, 63
      %s147 = scalar_select %p146, %s145, 63
      %s148 = smul.addr %s147, 2
      %s149 = smul.addr %s148, 4
      %s150 = scalar_lea.vmem %s0, %s149
      %p151 = pneg %p35
      %p152 = pneg %p32
      %p153 = pneg %p56
      %p154 = pneg %p53
      %p155 = pneg %p77
      %p156 = pneg %p74
      %p157 = pneg %p103
      %p158 = pneg %p100
      %s159 = smul.u32 32, %s14
      %p160 = scmp.lt.s32.totalorder %s159, 63
      %s161 = scalar_select %p160, %s159, 63
      %s162 = smul.addr %s161, 8
      %s163 = scalar_lea.vmem %s3, %s162
      %s164 = smul.u32 32, %s14
      %p165 = scmp.lt.s32.totalorder %s164, 63
      %s166 = scalar_select %p165, %s164, 63
      %s167 = smul.addr %s166, 2
      %s168 = smul.addr %s167, 4
      %s169 = scalar_lea.vmem %s0, %s168
      %s170 = smul.u32 32, %s14
      %s171 = smul.u32 32, %s14
      %p172 = scmp.lt.s32.totalorder %s171, 63
      %s173 = scalar_select %p172, %s171, 63
      %s174 = smul.addr %s173, 8
      %s175 = scalar_lea.vmem %s3, %s174
      %s176 = smul.u32 32, %s14
      %v178 = vld [vmem:[%s169] sm:$0xff]
      %v179 = vld [vmem:[%s169 + $0x8] sm:$0xff]
      %v180 = vld [vmem:[%s169 + $0x10] sm:$0xff]
      %v181 = vld [vmem:[%s169 + $0x18] sm:$0xff]
      %v182 = vld [vmem:[%s169 + $0x20] sm:$0xff]
      %v183 = vld [vmem:[%s169 + $0x28] sm:$0xff]
      %v184 = vld [vmem:[%s169 + $0x30] sm:$0xff]
      %v185 = vld [vmem:[%s169 + $0x38] sm:$0xff]
      %v186 = vld [vmem:[%s169 + $0x40] sm:$0xff]
      %v187 = vld [vmem:[%s169 + $0x48] sm:$0xff]
      %v188 = vld [vmem:[%s169 + $0x50] sm:$0xff]
      %v189 = vld [vmem:[%s169 + $0x58] sm:$0xff]
      %v190 = vld [vmem:[%s169 + $0x60] sm:$0xff]
      %v191 = vld [vmem:[%s169 + $0x68] sm:$0xff]
      %v192 = vld [vmem:[%s169 + $0x70] sm:$0xff]
      %v193 = vld [vmem:[%s169 + $0x78] sm:$0xff]
      %v194 = vld [vmem:[%s169 + $0x80] sm:$0xff]
      %v195 = vld [vmem:[%s169 + $0x88] sm:$0xff]
      %v196 = vld [vmem:[%s169 + $0x90] sm:$0xff]
      %v197 = vld [vmem:[%s169 + $0x98] sm:$0xff]
      %v198 = vld [vmem:[%s169 + $0xa0] sm:$0xff]
      %v199 = vld [vmem:[%s169 + $0xa8] sm:$0xff]
      %v200 = vld [vmem:[%s169 + $0xb0] sm:$0xff]
      %v201 = vld [vmem:[%s169 + $0xb8] sm:$0xff]
      %v202 = vld [vmem:[%s169 + $0xc0] sm:$0xff]
      %v203 = vld [vmem:[%s169 + $0xc8] sm:$0xff]
      %v204 = vld [vmem:[%s169 + $0xd0] sm:$0xff]
      %v205 = vld [vmem:[%s169 + $0xd8] sm:$0xff]
      %v206 = vld [vmem:[%s169 + $0xe0] sm:$0xff]
      %v207 = vld [vmem:[%s169 + $0xe8] sm:$0xff]
      %v208 = vld [vmem:[%s169 + $0xf0] sm:$0xff]
      %v209 = vld [vmem:[%s169 + $0xf8] sm:$0xff]
      %v210 = vld [vmem:[%s1] sm:$0xf]
      %v211 = vld [vmem:[%s1 + $0x4] sm:$0xf]
      %v212 = vld [vmem:[%s1 + $0x8] sm:$0xf]
      %v213 = vld [vmem:[%s1 + $0xc] sm:$0xf]
      %v214 = vld [vmem:[%s1 + $0x10] sm:$0xf]
      %v215 = vld [vmem:[%s1 + $0x14] sm:$0xf]
      %v216 = vld [vmem:[%s1 + $0x18] sm:$0xf]
      %v217 = vld [vmem:[%s1 + $0x1c] sm:$0xf]
      %v218 = vld [vmem:[%s1 + $0x20] sm:$0xf]
      %v219 = vld [vmem:[%s1 + $0x24] sm:$0xf]
      %v220 = vld [vmem:[%s1 + $0x28] sm:$0xf]
      %v221 = vld [vmem:[%s1 + $0x2c] sm:$0xf]
      %v222 = vld [vmem:[%s1 + $0x30] sm:$0xf]
      %v223 = vld [vmem:[%s1 + $0x34] sm:$0xf]
      %v224 = vld [vmem:[%s1 + $0x38] sm:$0xf]
      %v225 = vld [vmem:[%s1 + $0x3c] sm:$0xf]
      %v226 = vld [vmem:[%s1 + $0x40] sm:$0xf]
      %v227 = vld [vmem:[%s1 + $0x44] sm:$0xf]
      %v228 = vld [vmem:[%s1 + $0x48] sm:$0xf]
      %v229 = vld [vmem:[%s1 + $0x4c] sm:$0xf]
      %v230 = vld [vmem:[%s1 + $0x50] sm:$0xf]
      %v231 = vld [vmem:[%s1 + $0x54] sm:$0xf]
      %v232 = vld [vmem:[%s1 + $0x58] sm:$0xf]
      %v233 = vld [vmem:[%s1 + $0x5c] sm:$0xf]
      %v234 = vld [vmem:[%s1 + $0x60] sm:$0xf]
      %v235 = vld [vmem:[%s1 + $0x64] sm:$0xf]
      %v236 = vld [vmem:[%s1 + $0x68] sm:$0xf]
      %v237 = vld [vmem:[%s1 + $0x6c] sm:$0xf]
      %v238 = vld [vmem:[%s1 + $0x70] sm:$0xf]
      %v239 = vld [vmem:[%s1 + $0x74] sm:$0xf]
      %v240 = vld [vmem:[%s1 + $0x78] sm:$0xf]
      %v241 = vld [vmem:[%s1 + $0x7c] sm:$0xf]
      %v242 = vld [vmem:[%s2] sm:$0x1]
      %v244 = vlaneseq
      %v245 = vshrl.u32 %v244, 7
      %v246 = vsub.s32 0, %v245
      %v247 = vrot.slane %v242, %v246
      %v281 = vunpack.c.l.b16 %v178
      %v282 = vunpack.c.h.b16 %v178
      %v283 = vunpack.c.l.b16 %v179
      %v284 = vunpack.c.h.b16 %v179
      %v285 = vunpack.c.l.b16 %v180
      %v286 = vunpack.c.h.b16 %v180
      %v287 = vunpack.c.l.b16 %v181
      %v288 = vunpack.c.h.b16 %v181
      %v289 = vunpack.c.l.b16 %v182
      %v290 = vunpack.c.h.b16 %v182
      %v291 = vunpack.c.l.b16 %v183
      %v292 = vunpack.c.h.b16 %v183
      %v293 = vunpack.c.l.b16 %v184
      %v294 = vunpack.c.h.b16 %v184
      %v295 = vunpack.c.l.b16 %v185
      %v296 = vunpack.c.h.b16 %v185
      %v297 = vunpack.c.l.b16 %v186
      %v298 = vunpack.c.h.b16 %v186
      %v299 = vunpack.c.l.b16 %v187
      %v300 = vunpack.c.h.b16 %v187
      %v301 = vunpack.c.l.b16 %v188
      %v302 = vunpack.c.h.b16 %v188
      %v303 = vunpack.c.l.b16 %v189
      %v304 = vunpack.c.h.b16 %v189
      %v305 = vunpack.c.l.b16 %v190
      %v306 = vunpack.c.h.b16 %v190
      %v307 = vunpack.c.l.b16 %v191
      %v308 = vunpack.c.h.b16 %v191
      %v309 = vunpack.c.l.b16 %v192
      %v310 = vunpack.c.h.b16 %v192
      %v311 = vunpack.c.l.b16 %v193
      %v312 = vunpack.c.h.b16 %v193
      %v313 = vunpack.c.l.b16 %v194
      %v314 = vunpack.c.h.b16 %v194
      %v315 = vunpack.c.l.b16 %v195
      %v316 = vunpack.c.h.b16 %v195
      %v317 = vunpack.c.l.b16 %v196
      %v318 = vunpack.c.h.b16 %v196
      %v319 = vunpack.c.l.b16 %v197
      %v320 = vunpack.c.h.b16 %v197
      %v321 = vunpack.c.l.b16 %v198
      %v322 = vunpack.c.h.b16 %v198
      %v323 = vunpack.c.l.b16 %v199
      %v324 = vunpack.c.h.b16 %v199
      %v325 = vunpack.c.l.b16 %v200
      %v326 = vunpack.c.h.b16 %v200
      %v327 = vunpack.c.l.b16 %v201
      %v328 = vunpack.c.h.b16 %v201
      %v329 = vunpack.c.l.b16 %v202
      %v330 = vunpack.c.h.b16 %v202
      %v331 = vunpack.c.l.b16 %v203
      %v332 = vunpack.c.h.b16 %v203
      %v333 = vunpack.c.l.b16 %v204
      %v334 = vunpack.c.h.b16 %v204
      %v335 = vunpack.c.l.b16 %v205
      %v336 = vunpack.c.h.b16 %v205
      %v337 = vunpack.c.l.b16 %v206
      %v338 = vunpack.c.h.b16 %v206
      %v339 = vunpack.c.l.b16 %v207
      %v340 = vunpack.c.h.b16 %v207
      %v341 = vunpack.c.l.b16 %v208
      %v342 = vunpack.c.h.b16 %v208
      %v343 = vunpack.c.l.b16 %v209
      %v344 = vunpack.c.h.b16 %v209
      %v345 = vpack.c.b16 %v283, %v281
      %v346 = vpack.c.b16 %v284, %v282
      %v347 = vpack.c.b16 %v287, %v285
      %v348 = vpack.c.b16 %v288, %v286
      %v349 = vpack.c.b16 %v291, %v289
      %v350 = vpack.c.b16 %v292, %v290
      %v351 = vpack.c.b16 %v295, %v293
      %v352 = vpack.c.b16 %v296, %v294
      %v353 = vpack.c.b16 %v299, %v297
      %v354 = vpack.c.b16 %v300, %v298
      %v355 = vpack.c.b16 %v303, %v301
      %v356 = vpack.c.b16 %v304, %v302
      %v357 = vpack.c.b16 %v307, %v305
      %v358 = vpack.c.b16 %v308, %v306
      %v359 = vpack.c.b16 %v311, %v309
      %v360 = vpack.c.b16 %v312, %v310
      %v361 = vpack.c.b16 %v315, %v313
      %v362 = vpack.c.b16 %v316, %v314
      %v363 = vpack.c.b16 %v319, %v317
      %v364 = vpack.c.b16 %v320, %v318
      %v365 = vpack.c.b16 %v323, %v321
      %v366 = vpack.c.b16 %v324, %v322
      %v367 = vpack.c.b16 %v327, %v325
      %v368 = vpack.c.b16 %v328, %v326
      %v369 = vpack.c.b16 %v331, %v329
      %v370 = vpack.c.b16 %v332, %v330
      %v371 = vpack.c.b16 %v335, %v333
      %v372 = vpack.c.b16 %v336, %v334
      %v373 = vpack.c.b16 %v339, %v337
      %v374 = vpack.c.b16 %v340, %v338
      %v375 = vpack.c.b16 %v343, %v341
      %v376 = vpack.c.b16 %v344, %v342
      %v441 = vunpack.c.l.b16 %v210
      %v442 = vunpack.c.l.b16 %v211
      %v443 = vunpack.c.l.b16 %v212
      %v444 = vunpack.c.l.b16 %v213
      %v445 = vunpack.c.l.b16 %v214
      %v446 = vunpack.c.l.b16 %v215
      %v447 = vunpack.c.l.b16 %v216
      %v448 = vunpack.c.l.b16 %v217
      %v449 = vunpack.c.l.b16 %v218
      %v450 = vunpack.c.l.b16 %v219
      %v451 = vunpack.c.l.b16 %v220
      %v452 = vunpack.c.l.b16 %v221
      %v453 = vunpack.c.l.b16 %v222
      %v454 = vunpack.c.l.b16 %v223
      %v455 = vunpack.c.l.b16 %v224
      %v456 = vunpack.c.l.b16 %v225
      %v457 = vunpack.c.l.b16 %v226
      %v458 = vunpack.c.l.b16 %v227
      %v459 = vunpack.c.l.b16 %v228
      %v460 = vunpack.c.l.b16 %v229
      %v461 = vunpack.c.l.b16 %v230
      %v462 = vunpack.c.l.b16 %v231
      %v463 = vunpack.c.l.b16 %v232
      %v464 = vunpack.c.l.b16 %v233
      %v465 = vunpack.c.l.b16 %v234
      %v466 = vunpack.c.l.b16 %v235
      %v467 = vunpack.c.l.b16 %v236
      %v468 = vunpack.c.l.b16 %v237
      %v469 = vunpack.c.l.b16 %v238
      %v470 = vunpack.c.l.b16 %v239
      %v471 = vunpack.c.l.b16 %v240
      %v472 = vunpack.c.l.b16 %v241
      %v473 = vpack.c.b16 %v442, %v441
      %v474 = vpack.c.b16 %v444, %v443
      %v475 = vpack.c.b16 %v446, %v445
      %v476 = vpack.c.b16 %v448, %v447
      %v477 = vpack.c.b16 %v450, %v449
      %v478 = vpack.c.b16 %v452, %v451
      %v479 = vpack.c.b16 %v454, %v453
      %v480 = vpack.c.b16 %v456, %v455
      %v481 = vpack.c.b16 %v458, %v457
      %v482 = vpack.c.b16 %v460, %v459
      %v483 = vpack.c.b16 %v462, %v461
      %v484 = vpack.c.b16 %v464, %v463
      %v485 = vpack.c.b16 %v466, %v465
      %v486 = vpack.c.b16 %v468, %v467
      %v487 = vpack.c.b16 %v470, %v469
      %v488 = vpack.c.b16 %v472, %v471
      %505 = vmatprep.subr.bf16.mxu0 0
      %506 = vmatpush1.bf16.msra.mxu0 %v473
      %507 = vmatprep.subr.bf16.mxu0 0
      %508 = vmatpush1.bf16.msra.mxu0 %v474
      %509 = vmatprep.subr.bf16.mxu0 0
      %510 = vmatpush1.bf16.msra.mxu0 %v475
      %511 = vmatprep.subr.bf16.mxu0 0
      %512 = vmatpush1.bf16.msra.mxu0 %v476
      %513 = vmatprep.subr.bf16.mxu0 0
      %514 = vmatpush1.bf16.msra.mxu0 %v477
      %515 = vmatprep.subr.bf16.mxu0 0
      %516 = vmatpush1.bf16.msra.mxu0 %v478
      %517 = vmatprep.subr.bf16.mxu0 0
      %518 = vmatpush1.bf16.msra.mxu0 %v479
      %519 = vmatprep.subr.bf16.mxu0 0
      %520 = vmatpush1.bf16.msra.mxu0 %v480
      %521 = vmatprep.subr.bf16.mxu0 0
      %522 = vmatpush1.bf16.msra.mxu0 %v481
      %523 = vmatprep.subr.bf16.mxu0 0
      %524 = vmatpush1.bf16.msra.mxu0 %v482
      %525 = vmatprep.subr.bf16.mxu0 0
      %526 = vmatpush1.bf16.msra.mxu0 %v483
      %527 = vmatprep.subr.bf16.mxu0 0
      %528 = vmatpush1.bf16.msra.mxu0 %v484
      %529 = vmatprep.subr.bf16.mxu0 0
      %530 = vmatpush1.bf16.msra.mxu0 %v485
      %531 = vmatprep.subr.bf16.mxu0 0
      %532 = vmatpush1.bf16.msra.mxu0 %v486
      %533 = vmatprep.subr.bf16.mxu0 0
      %534 = vmatpush1.bf16.msra.mxu0 %v487
      %535 = vmatprep.subr.bf16.mxu0 0
      %536 = vmatpush1.bf16.msra.mxu0 %v488
      %537 = vmatprep.mubr.bf16.mxu0 %v346
      %538 = vmatmul.mubr.bf16.gmra.mrb[0].mxu0 %v345
      %v539 = vpop.f32.mrb[0].mxu0
      %v540 = vadd.f32 %v247, %v539
      %v541 = vpop.f32.mrb[0].mxu0
      %v542 = vpop.f32.mrb[0].mxu0
      %v543 = vadd.f32 %v247, %v542
      %v544 = vpop.f32.mrb[0].mxu0
      %545 = vmatprep.mubr.bf16.mxu0 %v348
      %546 = vmatmul.mubr.bf16.gmra.mrb[0].mxu0 %v347
      %v547 = vpop.f32.mrb[0].mxu0
      %v548 = vadd.f32 %v247, %v547
      %v549 = vpop.f32.mrb[0].mxu0
      %v550 = vpop.f32.mrb[0].mxu0
      %v551 = vadd.f32 %v247, %v550
      %v552 = vpop.f32.mrb[0].mxu0
      %553 = vmatprep.mubr.bf16.mxu0 %v350
      %554 = vmatmul.mubr.bf16.gmra.mrb[0].mxu0 %v349
      %v555 = vpop.f32.mrb[0].mxu0
      %v556 = vadd.f32 %v247, %v555
      %v557 = vpop.f32.mrb[0].mxu0
      %v558 = vpop.f32.mrb[0].mxu0
      %v559 = vadd.f32 %v247, %v558
      %v560 = vpop.f32.mrb[0].mxu0
      %561 = vmatprep.mubr.bf16.mxu0 %v352
      %562 = vmatmul.mubr.bf16.gmra.mrb[0].mxu0 %v351
      %v563 = vpop.f32.mrb[0].mxu0
      %v564 = vadd.f32 %v247, %v563
      %v565 = vpop.f32.mrb[0].mxu0
      %v566 = vpop.f32.mrb[0].mxu0
      %v567 = vadd.f32 %v247, %v566
      %v568 = vpop.f32.mrb[0].mxu0
      %569 = vmatprep.mubr.bf16.mxu0 %v354
      %570 = vmatmul.mubr.bf16.gmra.mrb[0].mxu0 %v353
      %v571 = vpop.f32.mrb[0].mxu0
      %v572 = vadd.f32 %v247, %v571
      %v573 = vpop.f32.mrb[0].mxu0
      %v574 = vpop.f32.mrb[0].mxu0
      %v575 = vadd.f32 %v247, %v574
      %v576 = vpop.f32.mrb[0].mxu0
      %577 = vmatprep.mubr.bf16.mxu0 %v356
      %578 = vmatmul.mubr.bf16.gmra.mrb[0].mxu0 %v355
      %v579 = vpop.f32.mrb[0].mxu0
      %v580 = vadd.f32 %v247, %v579
      %v581 = vpop.f32.mrb[0].mxu0
      %v582 = vpop.f32.mrb[0].mxu0
      %v583 = vadd.f32 %v247, %v582
      %v584 = vpop.f32.mrb[0].mxu0
      %585 = vmatprep.mubr.bf16.mxu0 %v358
      %586 = vmatmul.mubr.bf16.gmra.mrb[0].mxu0 %v357
      %v587 = vpop.f32.mrb[0].mxu0
      %v588 = vadd.f32 %v247, %v587
      %v589 = vpop.f32.mrb[0].mxu0
      %v590 = vpop.f32.mrb[0].mxu0
      %v591 = vadd.f32 %v247, %v590
      %v592 = vpop.f32.mrb[0].mxu0
      %593 = vmatprep.mubr.bf16.mxu0 %v360
      %594 = vmatmul.mubr.bf16.gmra.mrb[0].mxu0 %v359
      %v595 = vpop.f32.mrb[0].mxu0
      %v596 = vadd.f32 %v247, %v595
      %v597 = vpop.f32.mrb[0].mxu0
      %v598 = vpop.f32.mrb[0].mxu0
      %v599 = vadd.f32 %v247, %v598
      %v600 = vpop.f32.mrb[0].mxu0
      %601 = vmatprep.mubr.bf16.mxu0 %v362
      %602 = vmatmul.mubr.bf16.gmra.mrb[0].mxu0 %v361
      %v603 = vpop.f32.mrb[0].mxu0
      %v604 = vadd.f32 %v247, %v603
      %v605 = vpop.f32.mrb[0].mxu0
      %v606 = vpop.f32.mrb[0].mxu0
      %v607 = vadd.f32 %v247, %v606
      %v608 = vpop.f32.mrb[0].mxu0
      %609 = vmatprep.mubr.bf16.mxu0 %v364
      %610 = vmatmul.mubr.bf16.gmra.mrb[0].mxu0 %v363
      %v611 = vpop.f32.mrb[0].mxu0
      %v612 = vadd.f32 %v247, %v611
      %v613 = vpop.f32.mrb[0].mxu0
      %v614 = vpop.f32.mrb[0].mxu0
      %v615 = vadd.f32 %v247, %v614
      %v616 = vpop.f32.mrb[0].mxu0
      %617 = vmatprep.mubr.bf16.mxu0 %v366
      %618 = vmatmul.mubr.bf16.gmra.mrb[0].mxu0 %v365
      %v619 = vpop.f32.mrb[0].mxu0
      %v620 = vadd.f32 %v247, %v619
      %v621 = vpop.f32.mrb[0].mxu0
      %v622 = vpop.f32.mrb[0].mxu0
      %v623 = vadd.f32 %v247, %v622
      %v624 = vpop.f32.mrb[0].mxu0
      %625 = vmatprep.mubr.bf16.mxu0 %v368
      %626 = vmatmul.mubr.bf16.gmra.mrb[0].mxu0 %v367
      %v627 = vpop.f32.mrb[0].mxu0
      %v628 = vadd.f32 %v247, %v627
      %v629 = vpop.f32.mrb[0].mxu0
      %v630 = vpop.f32.mrb[0].mxu0
      %v631 = vadd.f32 %v247, %v630
      %v632 = vpop.f32.mrb[0].mxu0
      %633 = vmatprep.mubr.bf16.mxu0 %v370
      %634 = vmatmul.mubr.bf16.gmra.mrb[0].mxu0 %v369
      %v635 = vpop.f32.mrb[0].mxu0
      %v636 = vadd.f32 %v247, %v635
      %v637 = vpop.f32.mrb[0].mxu0
      %v638 = vpop.f32.mrb[0].mxu0
      %v639 = vadd.f32 %v247, %v638
      %v640 = vpop.f32.mrb[0].mxu0
      %641 = vmatprep.mubr.bf16.mxu0 %v372
      %642 = vmatmul.mubr.bf16.gmra.mrb[0].mxu0 %v371
      %v643 = vpop.f32.mrb[0].mxu0
      %v644 = vadd.f32 %v247, %v643
      %v645 = vpop.f32.mrb[0].mxu0
      %v646 = vpop.f32.mrb[0].mxu0
      %v647 = vadd.f32 %v247, %v646
      %v648 = vpop.f32.mrb[0].mxu0
      %649 = vmatprep.mubr.bf16.mxu0 %v374
      %650 = vmatmul.mubr.bf16.gmra.mrb[0].mxu0 %v373
      %v651 = vpop.f32.mrb[0].mxu0
      %v652 = vadd.f32 %v247, %v651
      %v653 = vpop.f32.mrb[0].mxu0
      %v654 = vpop.f32.mrb[0].mxu0
      %v655 = vadd.f32 %v247, %v654
      %v656 = vpop.f32.mrb[0].mxu0
      %657 = vmatprep.mubr.bf16.mxu0 %v376
      %658 = vmatmul.mubr.bf16.gmra.mrb[0].mxu0 %v375
      %v659 = vpop.f32.mrb[0].mxu0
      %v660 = vadd.f32 %v247, %v659
      %v661 = vpop.f32.mrb[0].mxu0
      %v662 = vpop.f32.mrb[0].mxu0
      %v663 = vadd.f32 %v247, %v662
      %v664 = vpop.f32.mrb[0].mxu0
      %665 = vdwg.mxu0
      %666 = vst [vmem:[%s175] sm:$0xff] %v540
      %667 = vst [vmem:[%s175 + $0x8] sm:$0xff] %v543
      %668 = vst [vmem:[%s175 + $0x10] sm:$0xff] %v548
      %669 = vst [vmem:[%s175 + $0x18] sm:$0xff] %v551
      %670 = vst [vmem:[%s175 + $0x20] sm:$0xff] %v556
      %671 = vst [vmem:[%s175 + $0x28] sm:$0xff] %v559
      %672 = vst [vmem:[%s175 + $0x30] sm:$0xff] %v564
      %673 = vst [vmem:[%s175 + $0x38] sm:$0xff] %v567
      %674 = vst [vmem:[%s175 + $0x40] sm:$0xff] %v572
      %675 = vst [vmem:[%s175 + $0x48] sm:$0xff] %v575
      %676 = vst [vmem:[%s175 + $0x50] sm:$0xff] %v580
      %677 = vst [vmem:[%s175 + $0x58] sm:$0xff] %v583
      %678 = vst [vmem:[%s175 + $0x60] sm:$0xff] %v588
      %679 = vst [vmem:[%s175 + $0x68] sm:$0xff] %v591
      %680 = vst [vmem:[%s175 + $0x70] sm:$0xff] %v596
      %681 = vst [vmem:[%s175 + $0x78] sm:$0xff] %v599
      %682 = vst [vmem:[%s175 + $0x80] sm:$0xff] %v604
      %683 = vst [vmem:[%s175 + $0x88] sm:$0xff] %v607
      %684 = vst [vmem:[%s175 + $0x90] sm:$0xff] %v612
      %685 = vst [vmem:[%s175 + $0x98] sm:$0xff] %v615
      %686 = vst [vmem:[%s175 + $0xa0] sm:$0xff] %v620
      %687 = vst [vmem:[%s175 + $0xa8] sm:$0xff] %v623
      %688 = vst [vmem:[%s175 + $0xb0] sm:$0xff] %v628
      %689 = vst [vmem:[%s175 + $0xb8] sm:$0xff] %v631
      %690 = vst [vmem:[%s175 + $0xc0] sm:$0xff] %v636
      %691 = vst [vmem:[%s175 + $0xc8] sm:$0xff] %v639
      %692 = vst [vmem:[%s175 + $0xd0] sm:$0xff] %v644
      %693 = vst [vmem:[%s175 + $0xd8] sm:$0xff] %v647
      %694 = vst [vmem:[%s175 + $0xe0] sm:$0xff] %v652
      %695 = vst [vmem:[%s175 + $0xe8] sm:$0xff] %v655
      %696 = vst [vmem:[%s175 + $0xf0] sm:$0xff] %v660
      %697 = vst [vmem:[%s175 + $0xf8] sm:$0xff] %v663
      %s698 = smul.u32 32, %s14
      %p699 = scmp.lt.s32.totalorder %s698, 63
      %s700 = scalar_select %p699, %s698, 63
      %s701 = smul.addr %s700, 8
      %s702 = scalar_lea.vmem %s3, %s701
      // Predicated region
      $region33: #{forward.47} parent=31 // pred_check
        %p703 = pneg %p100
      $region34: #{forward.47} parent=31 // pred_check_branch
        %705 = sbr.rel (%p703) target = $region36
      $region35: #{forward.47} parent=31 // pred_region
        %s706 = smul.u32 32, %s14
      $region36: #{forward.47} parent=31 // pred_fallthru
        _
    $region32: #{forward.47} parent=5 // pred_fallthru
      _
    %p707 = scmp.le.s32.totalorder 2, %s9
    // Predicated region
    $region37: #{forward.47} parent=5 // pred_check
      %p708 = pneg %p707
    $region38: #{forward.47} parent=5 // pred_check_branch
      %710 = sbr.rel (%p708) target = $region40
    $region39: #{forward.47} parent=5 // pred_region
      %s711 = ssub.s32 %s9, 2
      // Predicated region
      $region41: #{forward.47} parent=39 // pred_check
        %p712 = pneg %p106
      $region42: #{forward.47} parent=39 // pred_check_branch
        %714 = sbr.rel (%p712) target = $region44
      $region43: #{forward.47} parent=39 // pred_region
        %s715 = smul.u32 32, %s15
        %p716 = scmp.lt.s32.totalorder %s715, 63
        %s717 = scalar_select %p716, %s715, 63
        %s718 = smul.addr %s717, 8
        %s719 = scalar_lea.vmem %s3, %s718
      $region44: #{forward.47} parent=39 // pred_fallthru
        _
    $region40: #{forward.47} parent=5 // pred_fallthru
      _
  $region6: #{forward.47} parent=0 // loop_footer
    %s13 = sadd.s32 1, %s9
  $region7: #{forward.47} parent=0 // loop_footer_branch
    %8 = sbr.rel target = $region3
  $region8: #{forward.47} parent=0 // loop_exit
    _

</llo_original>
